<compile_context>
chip_gen: v7x
topology: tpu7x:2x2x1
jax: 0.10.0
libtpu: 0.0.40
codegen_flags: <defaults>
</compile_context>

<pallas_src>
import functools

import jax
import jax.numpy as jnp
import numpy as np
from jax.experimental import pallas as pl
from jax.experimental.pallas import tpu as pltpu

_CAND_CHUNK = 128      # candidates processed per grid step (multiple of 128 lanes)
_MAX_LANE_TILE = 8192  # max vocab-lane tile


def _ban_apply_kernel(ban_ref, lp_ref, out_ref, *, fold, sub_width):
    """Grid = (vocab_tiles, candidate_chunks).

    ban_ref : (rows_k, _CAND_CHUNK) int32  token ids to ban (-1 = no ban)
    lp_ref  : (rows_k, lane_tile)   float  lprobs tile (read once, at c == 0)
    out_ref : (rows_k, lane_tile)   float  resident across the candidate axis
    """
    v = pl.program_id(0)
    c = pl.program_id(1)

    @pl.when(c == 0)
    def _init():
        out_ref[...] = lp_ref[...]

    rows_k, lane_tile = out_ref.shape
    base = v * lane_tile
    tok = jax.lax.broadcasted_iota(jnp.int32, (rows_k, lane_tile), 1) + base
    if fold > 1:
        # rows were folded onto sublanes: token = (sublane % fold)*sub_width + lane
        sub = jax.lax.broadcasted_iota(jnp.int32, (rows_k, lane_tile), 0) % fold
        tok = tok + sub * sub_width

    ban = ban_ref[...]                              # (rows_k, _CAND_CHUNK)
    banned = jnp.zeros(tok.shape, dtype=jnp.bool_)
    for k in range(ban.shape[1]):                   # static, bounded code size
        banned = banned | (tok == ban[:, k:k + 1])  # eq + or per candidate
    out_ref[...] = jnp.where(banned, -jnp.inf, out_ref[...])


def _compute_ban_ids(hypothesis, context, cur_len, n, if_context_blocking):
    """Vectorized match: (rows, num_candidates) int32 ban ids, -1 = no ban."""
    hyp = hypothesis.astype(jnp.int32)
    rows = hyp.shape[0]
    last = hyp[:, cur_len - (n - 1):cur_len]              # (rows, n-1)
    if if_context_blocking:
        src = context.astype(jnp.int32).reshape(1, -1)    # (1, C), shared by rows
    else:
        src = hyp[:, :cur_len]                            # (rows, cur_len)
    nc = src.shape[1] - n + 1
    match = jnp.ones((rows, nc), dtype=jnp.bool_)
    for k in range(n - 1):
        match = match & (src[:, k:k + nc] == last[:, k:k + 1])
    ban_tok = src[:, n - 1:n - 1 + nc]
    return jnp.where(match, ban_tok, jnp.int32(-1)).astype(jnp.int32)


def ngram_repeat_block(hypothesis, context, lprobs, bsz, step, beam_size,
                       no_repeat_ngram_size, if_context_blocking=False):
    """JAX/Pallas equivalent of NGramRepeatBlock.forward."""
    rows, seq_len = hypothesis.shape
    vocab = lprobs.shape[1]
    assert rows == bsz * beam_size
    assert lprobs.shape[0] == rows
    n = int(no_repeat_ngram_size)
    cur_len = min(seq_len, int(step) + 1)   # bound the scan by the current step

    token_length = int(context.shape[-1]) if if_context_blocking else cur_len
    # Nothing to scan / cannot form the trailing (n-1)-gram -> lprobs untouched.
    if n < 1 or cur_len < n - 1 or token_length - n + 1 <= 0:
        return lprobs

    ban_ids = _compute_ban_ids(hypothesis, context, cur_len, n,
                               bool(if_context_blocking))
    nc = ban_ids.shape[1]
    nc_pad = ((nc + _CAND_CHUNK - 1) // _CAND_CHUNK) * _CAND_CHUNK
    if nc_pad != nc:
        ban_ids = jnp.pad(ban_ids, ((0, 0), (0, nc_pad - nc)), constant_values=-1)

    # Fold rows onto sublanes when rows < 8 so (8,128) vregs are fully used.
    fold = 8 if (rows < 8 and vocab % (8 * 128) == 0) else 1
    rows_k = rows * fold
    width = vocab // fold
    lp_view = lprobs.reshape(rows_k, width)
    ban_k = jnp.repeat(ban_ids, fold, axis=0) if fold > 1 else ban_ids

    # Lane tile: biggest tile that comfortably fits scoped VMEM (v7x: 64 MiB phys).
    if width <= _MAX_LANE_TILE:
        lane_tile = width                    # full-dim block is always legal
    else:
        lane_tile = _MAX_LANE_TILE           # multiple of 128
        while lane_tile > 512 and 5 * rows_k * lane_tile * 4 > 16 * 1024 * 1024:
            lane_tile //= 2

    grid = (pl.cdiv(width, lane_tile), nc_pad // _CAND_CHUNK)
    kernel = functools.partial(_ban_apply_kernel, fold=fold, sub_width=width)

    out = pl.pallas_call(
        kernel,
        out_shape=jax.ShapeDtypeStruct((rows_k, width), lprobs.dtype),
        grid=grid,
        in_specs=[
            pl.BlockSpec((rows_k, _CAND_CHUNK), lambda v, c: (0, c)),
            pl.BlockSpec((rows_k, lane_tile), lambda v, c: (0, v)),
        ],
        out_specs=pl.BlockSpec((rows_k, lane_tile), lambda v, c: (0, v)),
        input_output_aliases={1: 0},         # lprobs updated "in place"
        compiler_params=pltpu.CompilerParams(
            dimension_semantics=("parallel", "arbitrary")),
    )(ban_k, lp_view)
    return out.reshape(rows, vocab)


def _reference(hypothesis, context, lprobs, n, step, if_context_blocking):
    """Pure-numpy reference reproducing the CUDA kernel semantics."""
    hyp = np.asarray(hypothesis)
    ctx = np.asarray(context).reshape(-1)
    lp = np.array(lprobs, copy=True)
    rows, seq_len = hyp.shape
    cur = min(seq_len, step + 1)
    if n < 1 or cur < n - 1:
        return lp
    for r in range(rows):
        last = hyp[r, cur - (n - 1):cur]
        src = ctx if if_context_blocking else hyp[r, :cur]
        for j in range(len(src) - n + 1):
            if np.array_equal(src[j:j + n - 1], last):
                lp[r, src[j + n - 1]] = -np.inf
    return lp


if __name__ == "__main__":
    key = jax.random.PRNGKey(0)
    ok = True

    # (bsz, beam, seq_len(=step+1), ngram, vocab, ctx_len)
    configs = [
        (2, 2, 12, 3, 2048, 9),   # rows=4 < 8  -> sublane-folded path
        (4, 2, 10, 3, 640, 7),    # rows=8      -> unfolded, vocab multiple of 128
        (2, 2, 12, 2, 200, 6),    # vocab not a multiple of 128 -> full-width tile
    ]

    for idx, (bsz, beam, seq_len, n, vocab, ctx_len) in enumerate(configs):
        key, k_tok, k_lp, k_ctx = jax.random.split(key, 4)
        rows = bsz * beam
        step = seq_len - 1

        # Hypotheses with guaranteed repeated ngrams (pattern repeated twice).
        base = jax.random.randint(k_tok, (rows, seq_len // 2), 0, 10, dtype=jnp.int32)
        hypothesis = jnp.concatenate([base, base], axis=1)          # (rows, seq_len)

        # Context shares row-0's trailing (n-1)-gram so context-blocking bans too.
        extra = jax.random.randint(k_ctx, (ctx_len - (n - 1),), 0, 10, dtype=jnp.int32)
        context = jnp.concatenate([hypothesis[0, seq_len - (n - 1):], extra])

        lprobs = jax.random.normal(k_lp, (rows, vocab), dtype=jnp.float32)

        for if_ctx in (False, True):
            out = ngram_repeat_block(hypothesis, context, lprobs, bsz, step, beam,
                                     n, if_context_blocking=if_ctx)
            out = jax.block_until_ready(out)
            ref = _reference(hypothesis, context, lprobs, n, step, if_ctx)
            if not np.allclose(np.asarray(out), ref, equal_nan=True):
                ok = False
                print(f"MISMATCH config={idx} if_context_blocking={if_ctx}")

    if ok:
        print("KERNEL_OK")
</pallas_src>

<mosaic_0001>
module attributes {stable_mosaic.version = 11 : i64} {
  func.func @_ban_apply_kernel(%arg0: i32, %arg1: i32, %arg2: memref<32x128xi32, #tpu.memory_space<vmem>>, %arg3: memref<32x256xf32, #tpu.memory_space<vmem>>, %arg4: memref<32x256xf32, #tpu.memory_space<vmem>>) attributes {dimension_semantics = [#tpu.dimension_semantics<parallel>, #tpu.dimension_semantics<arbitrary>], iteration_bounds = array<i64: 1, 1>, scalar_prefetch = 0 : i64, scratch_operands = 0 : i64, tpu.core_type = #tpu.core_type<tc>, window_params = [{transform_indices = @transform_0, window_bounds = array<i64: 32, 128>}, {transform_indices = @transform_1, window_bounds = array<i64: 32, 256>}, {transform_indices = @transform_2, window_bounds = array<i64: 32, 256>}]} {
    %c0_i32 = arith.constant 0 : i32
    %0 = arith.cmpi eq, %arg1, %c0_i32 : i32
    %1 = arith.extui %0 : i1 to i32
    %c0_i32_0 = arith.constant 0 : i32
    %2 = arith.cmpi ne, %1, %c0_i32_0 : i32
    scf.if %2 {
      %c0_11 = arith.constant 0 : index
      %c0_12 = arith.constant 0 : index
      %545 = vector.load %arg3[%c0_11, %c0_12] : memref<32x256xf32, #tpu.memory_space<vmem>>, vector<32x256xf32>
      %c0_13 = arith.constant 0 : index
      %c0_14 = arith.constant 0 : index
      %546 = vector.load %arg4[%c0_13, %c0_14] : memref<32x256xf32, #tpu.memory_space<vmem>>, vector<32x256xf32>
      tpu.vector_store %arg4[%c0_13, %c0_14], %545 {strides = array<i32>} : memref<32x256xf32, #tpu.memory_space<vmem>>, vector<32x256xf32>,
    } else {
    }
    %c256_i32 = arith.constant 256 : i32
    %3 = arith.muli %arg0, %c256_i32 : i32
    %4 = tpu.iota {dimensions = array<i32: 1>} : vector<32x256xi32>
    %5 = vector.broadcast %3 : i32 to vector<32x256xi32>
    %6 = arith.addi %4, %5 : vector<32x256xi32>
    %7 = tpu.iota {dimensions = array<i32: 0>} : vector<32x256xi32>
    %c8_i32 = arith.constant 8 : i32
    %c0_i32_1 = arith.constant 0 : i32
    %8 = arith.cmpi eq, %c8_i32, %c0_i32_1 : i32
    %c1_i32 = arith.constant 1 : i32
    %9 = arith.select %8, %c1_i32, %c8_i32 : i32
    %10 = vector.broadcast %9 : i32 to vector<32x256xi32>
    %11 = arith.remsi %7, %10 : vector<32x256xi32>
    %c0_i32_2 = arith.constant 0 : i32
    %12 = vector.broadcast %c0_i32_2 : i32 to vector<32x256xi32>
    %13 = arith.cmpi ne, %11, %12 : vector<32x256xi32>
    %c0_i32_3 = arith.constant 0 : i32
    %14 = vector.broadcast %c0_i32_3 : i32 to vector<32x256xi32>
    %15 = arith.cmpi slt, %11, %14 : vector<32x256xi32>
    %c0_i32_4 = arith.constant 0 : i32
    %16 = arith.cmpi slt, %9, %c0_i32_4 : i32
    %17 = vector.broadcast %16 : i1 to vector<32x256xi1>
    %18 = vector.broadcast %17 : vector<32x256xi1> to vector<32x256xi1>
    %19 = arith.xori %15, %18 : vector<32x256xi1>
    %20 = arith.andi %19, %13 : vector<32x256xi1>
    %21 = vector.broadcast %9 : i32 to vector<32x256xi32>
    %22 = arith.addi %11, %21 : vector<32x256xi32>
    %23 = arith.select %20, %22, %11 : vector<32x256xi1>, vector<32x256xi32>
    %c256_i32_5 = arith.constant 256 : i32
    %24 = vector.broadcast %c256_i32_5 : i32 to vector<32x256xi32>
    %25 = arith.muli %23, %24 : vector<32x256xi32>
    %26 = arith.addi %6, %25 : vector<32x256xi32>
    %c0 = arith.constant 0 : index
    %c0_6 = arith.constant 0 : index
    %27 = vector.load %arg2[%c0, %c0_6] : memref<32x128xi32, #tpu.memory_space<vmem>>, vector<32x128xi32>
    %false = arith.constant false
    %28 = vector.broadcast %false : i1 to vector<32x256xi1>
    %29 = vector.extract_strided_slice %27 {offsets = [0, 0], sizes = [32, 1], strides = [1, 1]} : vector<32x128xi32> to vector<32x1xi32>
    %30 = vector.broadcast %29 : vector<32x1xi32> to vector<32x256xi32>
    %31 = arith.cmpi eq, %26, %30 : vector<32x256xi32>
    %32 = arith.ori %28, %31 : vector<32x256xi1>
    %33 = vector.extract_strided_slice %27 {offsets = [0, 1], sizes = [32, 1], strides = [1, 1]} : vector<32x128xi32> to vector<32x1xi32>
    %34 = vector.broadcast %33 : vector<32x1xi32> to vector<32x256xi32>
    %35 = arith.cmpi eq, %26, %34 : vector<32x256xi32>
    %36 = arith.ori %32, %35 : vector<32x256xi1>
    %37 = vector.extract_strided_slice %27 {offsets = [0, 2], sizes = [32, 1], strides = [1, 1]} : vector<32x128xi32> to vector<32x1xi32>
    %38 = vector.broadcast %37 : vector<32x1xi32> to vector<32x256xi32>
    %39 = arith.cmpi eq, %26, %38 : vector<32x256xi32>
    %40 = arith.ori %36, %39 : vector<32x256xi1>
    %41 = vector.extract_strided_slice %27 {offsets = [0, 3], sizes = [32, 1], strides = [1, 1]} : vector<32x128xi32> to vector<32x1xi32>
    %42 = vector.broadcast %41 : vector<32x1xi32> to vector<32x256xi32>
    %43 = arith.cmpi eq, %26, %42 : vector<32x256xi32>
    %44 = arith.ori %40, %43 : vector<32x256xi1>
    %45 = vector.extract_strided_slice %27 {offsets = [0, 4], sizes = [32, 1], strides = [1, 1]} : vector<32x128xi32> to vector<32x1xi32>
    %46 = vector.broadcast %45 : vector<32x1xi32> to vector<32x256xi32>
    %47 = arith.cmpi eq, %26, %46 : vector<32x256xi32>
    %48 = arith.ori %44, %47 : vector<32x256xi1>
    %49 = vector.extract_strided_slice %27 {offsets = [0, 5], sizes = [32, 1], strides = [1, 1]} : vector<32x128xi32> to vector<32x1xi32>
    %50 = vector.broadcast %49 : vector<32x1xi32> to vector<32x256xi32>
    %51 = arith.cmpi eq, %26, %50 : vector<32x256xi32>
    %52 = arith.ori %48, %51 : vector<32x256xi1>
    %53 = vector.extract_strided_slice %27 {offsets = [0, 6], sizes = [32, 1], strides = [1, 1]} : vector<32x128xi32> to vector<32x1xi32>
    %54 = vector.broadcast %53 : vector<32x1xi32> to vector<32x256xi32>
    %55 = arith.cmpi eq, %26, %54 : vector<32x256xi32>
    %56 = arith.ori %52, %55 : vector<32x256xi1>
    %57 = vector.extract_strided_slice %27 {offsets = [0, 7], sizes = [32, 1], strides = [1, 1]} : vector<32x128xi32> to vector<32x1xi32>
    %58 = vector.broadcast %57 : vector<32x1xi32> to vector<32x256xi32>
    %59 = arith.cmpi eq, %26, %58 : vector<32x256xi32>
    %60 = arith.ori %56, %59 : vector<32x256xi1>
    %61 = vector.extract_strided_slice %27 {offsets = [0, 8], sizes = [32, 1], strides = [1, 1]} : vector<32x128xi32> to vector<32x1xi32>
    %62 = vector.broadcast %61 : vector<32x1xi32> to vector<32x256xi32>
    %63 = arith.cmpi eq, %26, %62 : vector<32x256xi32>
    %64 = arith.ori %60, %63 : vector<32x256xi1>
    %65 = vector.extract_strided_slice %27 {offsets = [0, 9], sizes = [32, 1], strides = [1, 1]} : vector<32x128xi32> to vector<32x1xi32>
    %66 = vector.broadcast %65 : vector<32x1xi32> to vector<32x256xi32>
    %67 = arith.cmpi eq, %26, %66 : vector<32x256xi32>
    %68 = arith.ori %64, %67 : vector<32x256xi1>
    %69 = vector.extract_strided_slice %27 {offsets = [0, 10], sizes = [32, 1], strides = [1, 1]} : vector<32x128xi32> to vector<32x1xi32>
    %70 = vector.broadcast %69 : vector<32x1xi32> to vector<32x256xi32>
    %71 = arith.cmpi eq, %26, %70 : vector<32x256xi32>
    %72 = arith.ori %68, %71 : vector<32x256xi1>
    %73 = vector.extract_strided_slice %27 {offsets = [0, 11], sizes = [32, 1], strides = [1, 1]} : vector<32x128xi32> to vector<32x1xi32>
    %74 = vector.broadcast %73 : vector<32x1xi32> to vector<32x256xi32>
    %75 = arith.cmpi eq, %26, %74 : vector<32x256xi32>
    %76 = arith.ori %72, %75 : vector<32x256xi1>
    %77 = vector.extract_strided_slice %27 {offsets = [0, 12], sizes = [32, 1], strides = [1, 1]} : vector<32x128xi32> to vector<32x1xi32>
    %78 = vector.broadcast %77 : vector<32x1xi32> to vector<32x256xi32>
    %79 = arith.cmpi eq, %26, %78 : vector<32x256xi32>
    %80 = arith.ori %76, %79 : vector<32x256xi1>
    %81 = vector.extract_strided_slice %27 {offsets = [0, 13], sizes = [32, 1], strides = [1, 1]} : vector<32x128xi32> to vector<32x1xi32>
    %82 = vector.broadcast %81 : vector<32x1xi32> to vector<32x256xi32>
    %83 = arith.cmpi eq, %26, %82 : vector<32x256xi32>
    %84 = arith.ori %80, %83 : vector<32x256xi1>
    %85 = vector.extract_strided_slice %27 {offsets = [0, 14], sizes = [32, 1], strides = [1, 1]} : vector<32x128xi32> to vector<32x1xi32>
    %86 = vector.broadcast %85 : vector<32x1xi32> to vector<32x256xi32>
    %87 = arith.cmpi eq, %26, %86 : vector<32x256xi32>
    %88 = arith.ori %84, %87 : vector<32x256xi1>
    %89 = vector.extract_strided_slice %27 {offsets = [0, 15], sizes = [32, 1], strides = [1, 1]} : vector<32x128xi32> to vector<32x1xi32>
    %90 = vector.broadcast %89 : vector<32x1xi32> to vector<32x256xi32>
    %91 = arith.cmpi eq, %26, %90 : vector<32x256xi32>
    %92 = arith.ori %88, %91 : vector<32x256xi1>
    %93 = vector.extract_strided_slice %27 {offsets = [0, 16], sizes = [32, 1], strides = [1, 1]} : vector<32x128xi32> to vector<32x1xi32>
    %94 = vector.broadcast %93 : vector<32x1xi32> to vector<32x256xi32>
    %95 = arith.cmpi eq, %26, %94 : vector<32x256xi32>
    %96 = arith.ori %92, %95 : vector<32x256xi1>
    %97 = vector.extract_strided_slice %27 {offsets = [0, 17], sizes = [32, 1], strides = [1, 1]} : vector<32x128xi32> to vector<32x1xi32>
    %98 = vector.broadcast %97 : vector<32x1xi32> to vector<32x256xi32>
    %99 = arith.cmpi eq, %26, %98 : vector<32x256xi32>
    %100 = arith.ori %96, %99 : vector<32x256xi1>
    %101 = vector.extract_strided_slice %27 {offsets = [0, 18], sizes = [32, 1], strides = [1, 1]} : vector<32x128xi32> to vector<32x1xi32>
    %102 = vector.broadcast %101 : vector<32x1xi32> to vector<32x256xi32>
    %103 = arith.cmpi eq, %26, %102 : vector<32x256xi32>
    %104 = arith.ori %100, %103 : vector<32x256xi1>
    %105 = vector.extract_strided_slice %27 {offsets = [0, 19], sizes = [32, 1], strides = [1, 1]} : vector<32x128xi32> to vector<32x1xi32>
    %106 = vector.broadcast %105 : vector<32x1xi32> to vector<32x256xi32>
    %107 = arith.cmpi eq, %26, %106 : vector<32x256xi32>
    %108 = arith.ori %104, %107 : vector<32x256xi1>
    %109 = vector.extract_strided_slice %27 {offsets = [0, 20], sizes = [32, 1], strides = [1, 1]} : vector<32x128xi32> to vector<32x1xi32>
    %110 = vector.broadcast %109 : vector<32x1xi32> to vector<32x256xi32>
    %111 = arith.cmpi eq, %26, %110 : vector<32x256xi32>
    %112 = arith.ori %108, %111 : vector<32x256xi1>
    %113 = vector.extract_strided_slice %27 {offsets = [0, 21], sizes = [32, 1], strides = [1, 1]} : vector<32x128xi32> to vector<32x1xi32>
    %114 = vector.broadcast %113 : vector<32x1xi32> to vector<32x256xi32>
    %115 = arith.cmpi eq, %26, %114 : vector<32x256xi32>
    %116 = arith.ori %112, %115 : vector<32x256xi1>
    %117 = vector.extract_strided_slice %27 {offsets = [0, 22], sizes = [32, 1], strides = [1, 1]} : vector<32x128xi32> to vector<32x1xi32>
    %118 = vector.broadcast %117 : vector<32x1xi32> to vector<32x256xi32>
    %119 = arith.cmpi eq, %26, %118 : vector<32x256xi32>
    %120 = arith.ori %116, %119 : vector<32x256xi1>
    %121 = vector.extract_strided_slice %27 {offsets = [0, 23], sizes = [32, 1], strides = [1, 1]} : vector<32x128xi32> to vector<32x1xi32>
    %122 = vector.broadcast %121 : vector<32x1xi32> to vector<32x256xi32>
    %123 = arith.cmpi eq, %26, %122 : vector<32x256xi32>
    %124 = arith.ori %120, %123 : vector<32x256xi1>
    %125 = vector.extract_strided_slice %27 {offsets = [0, 24], sizes = [32, 1], strides = [1, 1]} : vector<32x128xi32> to vector<32x1xi32>
    %126 = vector.broadcast %125 : vector<32x1xi32> to vector<32x256xi32>
    %127 = arith.cmpi eq, %26, %126 : vector<32x256xi32>
    %128 = arith.ori %124, %127 : vector<32x256xi1>
    %129 = vector.extract_strided_slice %27 {offsets = [0, 25], sizes = [32, 1], strides = [1, 1]} : vector<32x128xi32> to vector<32x1xi32>
    %130 = vector.broadcast %129 : vector<32x1xi32> to vector<32x256xi32>
    %131 = arith.cmpi eq, %26, %130 : vector<32x256xi32>
    %132 = arith.ori %128, %131 : vector<32x256xi1>
    %133 = vector.extract_strided_slice %27 {offsets = [0, 26], sizes = [32, 1], strides = [1, 1]} : vector<32x128xi32> to vector<32x1xi32>
    %134 = vector.broadcast %133 : vector<32x1xi32> to vector<32x256xi32>
    %135 = arith.cmpi eq, %26, %134 : vector<32x256xi32>
    %136 = arith.ori %132, %135 : vector<32x256xi1>
    %137 = vector.extract_strided_slice %27 {offsets = [0, 27], sizes = [32, 1], strides = [1, 1]} : vector<32x128xi32> to vector<32x1xi32>
    %138 = vector.broadcast %137 : vector<32x1xi32> to vector<32x256xi32>
    %139 = arith.cmpi eq, %26, %138 : vector<32x256xi32>
    %140 = arith.ori %136, %139 : vector<32x256xi1>
    %141 = vector.extract_strided_slice %27 {offsets = [0, 28], sizes = [32, 1], strides = [1, 1]} : vector<32x128xi32> to vector<32x1xi32>
    %142 = vector.broadcast %141 : vector<32x1xi32> to vector<32x256xi32>
    %143 = arith.cmpi eq, %26, %142 : vector<32x256xi32>
    %144 = arith.ori %140, %143 : vector<32x256xi1>
    %145 = vector.extract_strided_slice %27 {offsets = [0, 29], sizes = [32, 1], strides = [1, 1]} : vector<32x128xi32> to vector<32x1xi32>
    %146 = vector.broadcast %145 : vector<32x1xi32> to vector<32x256xi32>
    %147 = arith.cmpi eq, %26, %146 : vector<32x256xi32>
    %148 = arith.ori %144, %147 : vector<32x256xi1>
    %149 = vector.extract_strided_slice %27 {offsets = [0, 30], sizes = [32, 1], strides = [1, 1]} : vector<32x128xi32> to vector<32x1xi32>
    %150 = vector.broadcast %149 : vector<32x1xi32> to vector<32x256xi32>
    %151 = arith.cmpi eq, %26, %150 : vector<32x256xi32>
    %152 = arith.ori %148, %151 : vector<32x256xi1>
    %153 = vector.extract_strided_slice %27 {offsets = [0, 31], sizes = [32, 1], strides = [1, 1]} : vector<32x128xi32> to vector<32x1xi32>
    %154 = vector.broadcast %153 : vector<32x1xi32> to vector<32x256xi32>
    %155 = arith.cmpi eq, %26, %154 : vector<32x256xi32>
    %156 = arith.ori %152, %155 : vector<32x256xi1>
    %157 = vector.extract_strided_slice %27 {offsets = [0, 32], sizes = [32, 1], strides = [1, 1]} : vector<32x128xi32> to vector<32x1xi32>
    %158 = vector.broadcast %157 : vector<32x1xi32> to vector<32x256xi32>
    %159 = arith.cmpi eq, %26, %158 : vector<32x256xi32>
    %160 = arith.ori %156, %159 : vector<32x256xi1>
    %161 = vector.extract_strided_slice %27 {offsets = [0, 33], sizes = [32, 1], strides = [1, 1]} : vector<32x128xi32> to vector<32x1xi32>
    %162 = vector.broadcast %161 : vector<32x1xi32> to vector<32x256xi32>
    %163 = arith.cmpi eq, %26, %162 : vector<32x256xi32>
    %164 = arith.ori %160, %163 : vector<32x256xi1>
    %165 = vector.extract_strided_slice %27 {offsets = [0, 34], sizes = [32, 1], strides = [1, 1]} : vector<32x128xi32> to vector<32x1xi32>
    %166 = vector.broadcast %165 : vector<32x1xi32> to vector<32x256xi32>
    %167 = arith.cmpi eq, %26, %166 : vector<32x256xi32>
    %168 = arith.ori %164, %167 : vector<32x256xi1>
    %169 = vector.extract_strided_slice %27 {offsets = [0, 35], sizes = [32, 1], strides = [1, 1]} : vector<32x128xi32> to vector<32x1xi32>
    %170 = vector.broadcast %169 : vector<32x1xi32> to vector<32x256xi32>
    %171 = arith.cmpi eq, %26, %170 : vector<32x256xi32>
    %172 = arith.ori %168, %171 : vector<32x256xi1>
    %173 = vector.extract_strided_slice %27 {offsets = [0, 36], sizes = [32, 1], strides = [1, 1]} : vector<32x128xi32> to vector<32x1xi32>
    %174 = vector.broadcast %173 : vector<32x1xi32> to vector<32x256xi32>
    %175 = arith.cmpi eq, %26, %174 : vector<32x256xi32>
    %176 = arith.ori %172, %175 : vector<32x256xi1>
    %177 = vector.extract_strided_slice %27 {offsets = [0, 37], sizes = [32, 1], strides = [1, 1]} : vector<32x128xi32> to vector<32x1xi32>
    %178 = vector.broadcast %177 : vector<32x1xi32> to vector<32x256xi32>
    %179 = arith.cmpi eq, %26, %178 : vector<32x256xi32>
    %180 = arith.ori %176, %179 : vector<32x256xi1>
    %181 = vector.extract_strided_slice %27 {offsets = [0, 38], sizes = [32, 1], strides = [1, 1]} : vector<32x128xi32> to vector<32x1xi32>
    %182 = vector.broadcast %181 : vector<32x1xi32> to vector<32x256xi32>
    %183 = arith.cmpi eq, %26, %182 : vector<32x256xi32>
    %184 = arith.ori %180, %183 : vector<32x256xi1>
    %185 = vector.extract_strided_slice %27 {offsets = [0, 39], sizes = [32, 1], strides = [1, 1]} : vector<32x128xi32> to vector<32x1xi32>
    %186 = vector.broadcast %185 : vector<32x1xi32> to vector<32x256xi32>
    %187 = arith.cmpi eq, %26, %186 : vector<32x256xi32>
    %188 = arith.ori %184, %187 : vector<32x256xi1>
    %189 = vector.extract_strided_slice %27 {offsets = [0, 40], sizes = [32, 1], strides = [1, 1]} : vector<32x128xi32> to vector<32x1xi32>
    %190 = vector.broadcast %189 : vector<32x1xi32> to vector<32x256xi32>
    %191 = arith.cmpi eq, %26, %190 : vector<32x256xi32>
    %192 = arith.ori %188, %191 : vector<32x256xi1>
    %193 = vector.extract_strided_slice %27 {offsets = [0, 41], sizes = [32, 1], strides = [1, 1]} : vector<32x128xi32> to vector<32x1xi32>
    %194 = vector.broadcast %193 : vector<32x1xi32> to vector<32x256xi32>
    %195 = arith.cmpi eq, %26, %194 : vector<32x256xi32>
    %196 = arith.ori %192, %195 : vector<32x256xi1>
    %197 = vector.extract_strided_slice %27 {offsets = [0, 42], sizes = [32, 1], strides = [1, 1]} : vector<32x128xi32> to vector<32x1xi32>
    %198 = vector.broadcast %197 : vector<32x1xi32> to vector<32x256xi32>
    %199 = arith.cmpi eq, %26, %198 : vector<32x256xi32>
    %200 = arith.ori %196, %199 : vector<32x256xi1>
    %201 = vector.extract_strided_slice %27 {offsets = [0, 43], sizes = [32, 1], strides = [1, 1]} : vector<32x128xi32> to vector<32x1xi32>
    %202 = vector.broadcast %201 : vector<32x1xi32> to vector<32x256xi32>
    %203 = arith.cmpi eq, %26, %202 : vector<32x256xi32>
    %204 = arith.ori %200, %203 : vector<32x256xi1>
    %205 = vector.extract_strided_slice %27 {offsets = [0, 44], sizes = [32, 1], strides = [1, 1]} : vector<32x128xi32> to vector<32x1xi32>
    %206 = vector.broadcast %205 : vector<32x1xi32> to vector<32x256xi32>
    %207 = arith.cmpi eq, %26, %206 : vector<32x256xi32>
    %208 = arith.ori %204, %207 : vector<32x256xi1>
    %209 = vector.extract_strided_slice %27 {offsets = [0, 45], sizes = [32, 1], strides = [1, 1]} : vector<32x128xi32> to vector<32x1xi32>
    %210 = vector.broadcast %209 : vector<32x1xi32> to vector<32x256xi32>
    %211 = arith.cmpi eq, %26, %210 : vector<32x256xi32>
    %212 = arith.ori %208, %211 : vector<32x256xi1>
    %213 = vector.extract_strided_slice %27 {offsets = [0, 46], sizes = [32, 1], strides = [1, 1]} : vector<32x128xi32> to vector<32x1xi32>
    %214 = vector.broadcast %213 : vector<32x1xi32> to vector<32x256xi32>
    %215 = arith.cmpi eq, %26, %214 : vector<32x256xi32>
    %216 = arith.ori %212, %215 : vector<32x256xi1>
    %217 = vector.extract_strided_slice %27 {offsets = [0, 47], sizes = [32, 1], strides = [1, 1]} : vector<32x128xi32> to vector<32x1xi32>
    %218 = vector.broadcast %217 : vector<32x1xi32> to vector<32x256xi32>
    %219 = arith.cmpi eq, %26, %218 : vector<32x256xi32>
    %220 = arith.ori %216, %219 : vector<32x256xi1>
    %221 = vector.extract_strided_slice %27 {offsets = [0, 48], sizes = [32, 1], strides = [1, 1]} : vector<32x128xi32> to vector<32x1xi32>
    %222 = vector.broadcast %221 : vector<32x1xi32> to vector<32x256xi32>
    %223 = arith.cmpi eq, %26, %222 : vector<32x256xi32>
    %224 = arith.ori %220, %223 : vector<32x256xi1>
    %225 = vector.extract_strided_slice %27 {offsets = [0, 49], sizes = [32, 1], strides = [1, 1]} : vector<32x128xi32> to vector<32x1xi32>
    %226 = vector.broadcast %225 : vector<32x1xi32> to vector<32x256xi32>
    %227 = arith.cmpi eq, %26, %226 : vector<32x256xi32>
    %228 = arith.ori %224, %227 : vector<32x256xi1>
    %229 = vector.extract_strided_slice %27 {offsets = [0, 50], sizes = [32, 1], strides = [1, 1]} : vector<32x128xi32> to vector<32x1xi32>
    %230 = vector.broadcast %229 : vector<32x1xi32> to vector<32x256xi32>
    %231 = arith.cmpi eq, %26, %230 : vector<32x256xi32>
    %232 = arith.ori %228, %231 : vector<32x256xi1>
    %233 = vector.extract_strided_slice %27 {offsets = [0, 51], sizes = [32, 1], strides = [1, 1]} : vector<32x128xi32> to vector<32x1xi32>
    %234 = vector.broadcast %233 : vector<32x1xi32> to vector<32x256xi32>
    %235 = arith.cmpi eq, %26, %234 : vector<32x256xi32>
    %236 = arith.ori %232, %235 : vector<32x256xi1>
    %237 = vector.extract_strided_slice %27 {offsets = [0, 52], sizes = [32, 1], strides = [1, 1]} : vector<32x128xi32> to vector<32x1xi32>
    %238 = vector.broadcast %237 : vector<32x1xi32> to vector<32x256xi32>
    %239 = arith.cmpi eq, %26, %238 : vector<32x256xi32>
    %240 = arith.ori %236, %239 : vector<32x256xi1>
    %241 = vector.extract_strided_slice %27 {offsets = [0, 53], sizes = [32, 1], strides = [1, 1]} : vector<32x128xi32> to vector<32x1xi32>
    %242 = vector.broadcast %241 : vector<32x1xi32> to vector<32x256xi32>
    %243 = arith.cmpi eq, %26, %242 : vector<32x256xi32>
    %244 = arith.ori %240, %243 : vector<32x256xi1>
    %245 = vector.extract_strided_slice %27 {offsets = [0, 54], sizes = [32, 1], strides = [1, 1]} : vector<32x128xi32> to vector<32x1xi32>
    %246 = vector.broadcast %245 : vector<32x1xi32> to vector<32x256xi32>
    %247 = arith.cmpi eq, %26, %246 : vector<32x256xi32>
    %248 = arith.ori %244, %247 : vector<32x256xi1>
    %249 = vector.extract_strided_slice %27 {offsets = [0, 55], sizes = [32, 1], strides = [1, 1]} : vector<32x128xi32> to vector<32x1xi32>
    %250 = vector.broadcast %249 : vector<32x1xi32> to vector<32x256xi32>
    %251 = arith.cmpi eq, %26, %250 : vector<32x256xi32>
    %252 = arith.ori %248, %251 : vector<32x256xi1>
    %253 = vector.extract_strided_slice %27 {offsets = [0, 56], sizes = [32, 1], strides = [1, 1]} : vector<32x128xi32> to vector<32x1xi32>
    %254 = vector.broadcast %253 : vector<32x1xi32> to vector<32x256xi32>
    %255 = arith.cmpi eq, %26, %254 : vector<32x256xi32>
    %256 = arith.ori %252, %255 : vector<32x256xi1>
    %257 = vector.extract_strided_slice %27 {offsets = [0, 57], sizes = [32, 1], strides = [1, 1]} : vector<32x128xi32> to vector<32x1xi32>
    %258 = vector.broadcast %257 : vector<32x1xi32> to vector<32x256xi32>
    %259 = arith.cmpi eq, %26, %258 : vector<32x256xi32>
    %260 = arith.ori %256, %259 : vector<32x256xi1>
    %261 = vector.extract_strided_slice %27 {offsets = [0, 58], sizes = [32, 1], strides = [1, 1]} : vector<32x128xi32> to vector<32x1xi32>
    %262 = vector.broadcast %261 : vector<32x1xi32> to vector<32x256xi32>
    %263 = arith.cmpi eq, %26, %262 : vector<32x256xi32>
    %264 = arith.ori %260, %263 : vector<32x256xi1>
    %265 = vector.extract_strided_slice %27 {offsets = [0, 59], sizes = [32, 1], strides = [1, 1]} : vector<32x128xi32> to vector<32x1xi32>
    %266 = vector.broadcast %265 : vector<32x1xi32> to vector<32x256xi32>
    %267 = arith.cmpi eq, %26, %266 : vector<32x256xi32>
    %268 = arith.ori %264, %267 : vector<32x256xi1>
    %269 = vector.extract_strided_slice %27 {offsets = [0, 60], sizes = [32, 1], strides = [1, 1]} : vector<32x128xi32> to vector<32x1xi32>
    %270 = vector.broadcast %269 : vector<32x1xi32> to vector<32x256xi32>
    %271 = arith.cmpi eq, %26, %270 : vector<32x256xi32>
    %272 = arith.ori %268, %271 : vector<32x256xi1>
    %273 = vector.extract_strided_slice %27 {offsets = [0, 61], sizes = [32, 1], strides = [1, 1]} : vector<32x128xi32> to vector<32x1xi32>
    %274 = vector.broadcast %273 : vector<32x1xi32> to vector<32x256xi32>
    %275 = arith.cmpi eq, %26, %274 : vector<32x256xi32>
    %276 = arith.ori %272, %275 : vector<32x256xi1>
    %277 = vector.extract_strided_slice %27 {offsets = [0, 62], sizes = [32, 1], strides = [1, 1]} : vector<32x128xi32> to vector<32x1xi32>
    %278 = vector.broadcast %277 : vector<32x1xi32> to vector<32x256xi32>
    %279 = arith.cmpi eq, %26, %278 : vector<32x256xi32>
    %280 = arith.ori %276, %279 : vector<32x256xi1>
    %281 = vector.extract_strided_slice %27 {offsets = [0, 63], sizes = [32, 1], strides = [1, 1]} : vector<32x128xi32> to vector<32x1xi32>
    %282 = vector.broadcast %281 : vector<32x1xi32> to vector<32x256xi32>
    %283 = arith.cmpi eq, %26, %282 : vector<32x256xi32>
    %284 = arith.ori %280, %283 : vector<32x256xi1>
    %285 = vector.extract_strided_slice %27 {offsets = [0, 64], sizes = [32, 1], strides = [1, 1]} : vector<32x128xi32> to vector<32x1xi32>
    %286 = vector.broadcast %285 : vector<32x1xi32> to vector<32x256xi32>
    %287 = arith.cmpi eq, %26, %286 : vector<32x256xi32>
    %288 = arith.ori %284, %287 : vector<32x256xi1>
    %289 = vector.extract_strided_slice %27 {offsets = [0, 65], sizes = [32, 1], strides = [1, 1]} : vector<32x128xi32> to vector<32x1xi32>
    %290 = vector.broadcast %289 : vector<32x1xi32> to vector<32x256xi32>
    %291 = arith.cmpi eq, %26, %290 : vector<32x256xi32>
    %292 = arith.ori %288, %291 : vector<32x256xi1>
    %293 = vector.extract_strided_slice %27 {offsets = [0, 66], sizes = [32, 1], strides = [1, 1]} : vector<32x128xi32> to vector<32x1xi32>
    %294 = vector.broadcast %293 : vector<32x1xi32> to vector<32x256xi32>
    %295 = arith.cmpi eq, %26, %294 : vector<32x256xi32>
    %296 = arith.ori %292, %295 : vector<32x256xi1>
    %297 = vector.extract_strided_slice %27 {offsets = [0, 67], sizes = [32, 1], strides = [1, 1]} : vector<32x128xi32> to vector<32x1xi32>
    %298 = vector.broadcast %297 : vector<32x1xi32> to vector<32x256xi32>
    %299 = arith.cmpi eq, %26, %298 : vector<32x256xi32>
    %300 = arith.ori %296, %299 : vector<32x256xi1>
    %301 = vector.extract_strided_slice %27 {offsets = [0, 68], sizes = [32, 1], strides = [1, 1]} : vector<32x128xi32> to vector<32x1xi32>
    %302 = vector.broadcast %301 : vector<32x1xi32> to vector<32x256xi32>
    %303 = arith.cmpi eq, %26, %302 : vector<32x256xi32>
    %304 = arith.ori %300, %303 : vector<32x256xi1>
    %305 = vector.extract_strided_slice %27 {offsets = [0, 69], sizes = [32, 1], strides = [1, 1]} : vector<32x128xi32> to vector<32x1xi32>
    %306 = vector.broadcast %305 : vector<32x1xi32> to vector<32x256xi32>
    %307 = arith.cmpi eq, %26, %306 : vector<32x256xi32>
    %308 = arith.ori %304, %307 : vector<32x256xi1>
    %309 = vector.extract_strided_slice %27 {offsets = [0, 70], sizes = [32, 1], strides = [1, 1]} : vector<32x128xi32> to vector<32x1xi32>
    %310 = vector.broadcast %309 : vector<32x1xi32> to vector<32x256xi32>
    %311 = arith.cmpi eq, %26, %310 : vector<32x256xi32>
    %312 = arith.ori %308, %311 : vector<32x256xi1>
    %313 = vector.extract_strided_slice %27 {offsets = [0, 71], sizes = [32, 1], strides = [1, 1]} : vector<32x128xi32> to vector<32x1xi32>
    %314 = vector.broadcast %313 : vector<32x1xi32> to vector<32x256xi32>
    %315 = arith.cmpi eq, %26, %314 : vector<32x256xi32>
    %316 = arith.ori %312, %315 : vector<32x256xi1>
    %317 = vector.extract_strided_slice %27 {offsets = [0, 72], sizes = [32, 1], strides = [1, 1]} : vector<32x128xi32> to vector<32x1xi32>
    %318 = vector.broadcast %317 : vector<32x1xi32> to vector<32x256xi32>
    %319 = arith.cmpi eq, %26, %318 : vector<32x256xi32>
    %320 = arith.ori %316, %319 : vector<32x256xi1>
    %321 = vector.extract_strided_slice %27 {offsets = [0, 73], sizes = [32, 1], strides = [1, 1]} : vector<32x128xi32> to vector<32x1xi32>
    %322 = vector.broadcast %321 : vector<32x1xi32> to vector<32x256xi32>
    %323 = arith.cmpi eq, %26, %322 : vector<32x256xi32>
    %324 = arith.ori %320, %323 : vector<32x256xi1>
    %325 = vector.extract_strided_slice %27 {offsets = [0, 74], sizes = [32, 1], strides = [1, 1]} : vector<32x128xi32> to vector<32x1xi32>
    %326 = vector.broadcast %325 : vector<32x1xi32> to vector<32x256xi32>
    %327 = arith.cmpi eq, %26, %326 : vector<32x256xi32>
    %328 = arith.ori %324, %327 : vector<32x256xi1>
    %329 = vector.extract_strided_slice %27 {offsets = [0, 75], sizes = [32, 1], strides = [1, 1]} : vector<32x128xi32> to vector<32x1xi32>
    %330 = vector.broadcast %329 : vector<32x1xi32> to vector<32x256xi32>
    %331 = arith.cmpi eq, %26, %330 : vector<32x256xi32>
    %332 = arith.ori %328, %331 : vector<32x256xi1>
    %333 = vector.extract_strided_slice %27 {offsets = [0, 76], sizes = [32, 1], strides = [1, 1]} : vector<32x128xi32> to vector<32x1xi32>
    %334 = vector.broadcast %333 : vector<32x1xi32> to vector<32x256xi32>
    %335 = arith.cmpi eq, %26, %334 : vector<32x256xi32>
    %336 = arith.ori %332, %335 : vector<32x256xi1>
    %337 = vector.extract_strided_slice %27 {offsets = [0, 77], sizes = [32, 1], strides = [1, 1]} : vector<32x128xi32> to vector<32x1xi32>
    %338 = vector.broadcast %337 : vector<32x1xi32> to vector<32x256xi32>
    %339 = arith.cmpi eq, %26, %338 : vector<32x256xi32>
    %340 = arith.ori %336, %339 : vector<32x256xi1>
    %341 = vector.extract_strided_slice %27 {offsets = [0, 78], sizes = [32, 1], strides = [1, 1]} : vector<32x128xi32> to vector<32x1xi32>
    %342 = vector.broadcast %341 : vector<32x1xi32> to vector<32x256xi32>
    %343 = arith.cmpi eq, %26, %342 : vector<32x256xi32>
    %344 = arith.ori %340, %343 : vector<32x256xi1>
    %345 = vector.extract_strided_slice %27 {offsets = [0, 79], sizes = [32, 1], strides = [1, 1]} : vector<32x128xi32> to vector<32x1xi32>
    %346 = vector.broadcast %345 : vector<32x1xi32> to vector<32x256xi32>
    %347 = arith.cmpi eq, %26, %346 : vector<32x256xi32>
    %348 = arith.ori %344, %347 : vector<32x256xi1>
    %349 = vector.extract_strided_slice %27 {offsets = [0, 80], sizes = [32, 1], strides = [1, 1]} : vector<32x128xi32> to vector<32x1xi32>
    %350 = vector.broadcast %349 : vector<32x1xi32> to vector<32x256xi32>
    %351 = arith.cmpi eq, %26, %350 : vector<32x256xi32>
    %352 = arith.ori %348, %351 : vector<32x256xi1>
    %353 = vector.extract_strided_slice %27 {offsets = [0, 81], sizes = [32, 1], strides = [1, 1]} : vector<32x128xi32> to vector<32x1xi32>
    %354 = vector.broadcast %353 : vector<32x1xi32> to vector<32x256xi32>
    %355 = arith.cmpi eq, %26, %354 : vector<32x256xi32>
    %356 = arith.ori %352, %355 : vector<32x256xi1>
    %357 = vector.extract_strided_slice %27 {offsets = [0, 82], sizes = [32, 1], strides = [1, 1]} : vector<32x128xi32> to vector<32x1xi32>
    %358 = vector.broadcast %357 : vector<32x1xi32> to vector<32x256xi32>
    %359 = arith.cmpi eq, %26, %358 : vector<32x256xi32>
    %360 = arith.ori %356, %359 : vector<32x256xi1>
    %361 = vector.extract_strided_slice %27 {offsets = [0, 83], sizes = [32, 1], strides = [1, 1]} : vector<32x128xi32> to vector<32x1xi32>
    %362 = vector.broadcast %361 : vector<32x1xi32> to vector<32x256xi32>
    %363 = arith.cmpi eq, %26, %362 : vector<32x256xi32>
    %364 = arith.ori %360, %363 : vector<32x256xi1>
    %365 = vector.extract_strided_slice %27 {offsets = [0, 84], sizes = [32, 1], strides = [1, 1]} : vector<32x128xi32> to vector<32x1xi32>
    %366 = vector.broadcast %365 : vector<32x1xi32> to vector<32x256xi32>
    %367 = arith.cmpi eq, %26, %366 : vector<32x256xi32>
    %368 = arith.ori %364, %367 : vector<32x256xi1>
    %369 = vector.extract_strided_slice %27 {offsets = [0, 85], sizes = [32, 1], strides = [1, 1]} : vector<32x128xi32> to vector<32x1xi32>
    %370 = vector.broadcast %369 : vector<32x1xi32> to vector<32x256xi32>
    %371 = arith.cmpi eq, %26, %370 : vector<32x256xi32>
    %372 = arith.ori %368, %371 : vector<32x256xi1>
    %373 = vector.extract_strided_slice %27 {offsets = [0, 86], sizes = [32, 1], strides = [1, 1]} : vector<32x128xi32> to vector<32x1xi32>
    %374 = vector.broadcast %373 : vector<32x1xi32> to vector<32x256xi32>
    %375 = arith.cmpi eq, %26, %374 : vector<32x256xi32>
    %376 = arith.ori %372, %375 : vector<32x256xi1>
    %377 = vector.extract_strided_slice %27 {offsets = [0, 87], sizes = [32, 1], strides = [1, 1]} : vector<32x128xi32> to vector<32x1xi32>
    %378 = vector.broadcast %377 : vector<32x1xi32> to vector<32x256xi32>
    %379 = arith.cmpi eq, %26, %378 : vector<32x256xi32>
    %380 = arith.ori %376, %379 : vector<32x256xi1>
    %381 = vector.extract_strided_slice %27 {offsets = [0, 88], sizes = [32, 1], strides = [1, 1]} : vector<32x128xi32> to vector<32x1xi32>
    %382 = vector.broadcast %381 : vector<32x1xi32> to vector<32x256xi32>
    %383 = arith.cmpi eq, %26, %382 : vector<32x256xi32>
    %384 = arith.ori %380, %383 : vector<32x256xi1>
    %385 = vector.extract_strided_slice %27 {offsets = [0, 89], sizes = [32, 1], strides = [1, 1]} : vector<32x128xi32> to vector<32x1xi32>
    %386 = vector.broadcast %385 : vector<32x1xi32> to vector<32x256xi32>
    %387 = arith.cmpi eq, %26, %386 : vector<32x256xi32>
    %388 = arith.ori %384, %387 : vector<32x256xi1>
    %389 = vector.extract_strided_slice %27 {offsets = [0, 90], sizes = [32, 1], strides = [1, 1]} : vector<32x128xi32> to vector<32x1xi32>
    %390 = vector.broadcast %389 : vector<32x1xi32> to vector<32x256xi32>
    %391 = arith.cmpi eq, %26, %390 : vector<32x256xi32>
    %392 = arith.ori %388, %391 : vector<32x256xi1>
    %393 = vector.extract_strided_slice %27 {offsets = [0, 91], sizes = [32, 1], strides = [1, 1]} : vector<32x128xi32> to vector<32x1xi32>
    %394 = vector.broadcast %393 : vector<32x1xi32> to vector<32x256xi32>
    %395 = arith.cmpi eq, %26, %394 : vector<32x256xi32>
    %396 = arith.ori %392, %395 : vector<32x256xi1>
    %397 = vector.extract_strided_slice %27 {offsets = [0, 92], sizes = [32, 1], strides = [1, 1]} : vector<32x128xi32> to vector<32x1xi32>
    %398 = vector.broadcast %397 : vector<32x1xi32> to vector<32x256xi32>
    %399 = arith.cmpi eq, %26, %398 : vector<32x256xi32>
    %400 = arith.ori %396, %399 : vector<32x256xi1>
    %401 = vector.extract_strided_slice %27 {offsets = [0, 93], sizes = [32, 1], strides = [1, 1]} : vector<32x128xi32> to vector<32x1xi32>
    %402 = vector.broadcast %401 : vector<32x1xi32> to vector<32x256xi32>
    %403 = arith.cmpi eq, %26, %402 : vector<32x256xi32>
    %404 = arith.ori %400, %403 : vector<32x256xi1>
    %405 = vector.extract_strided_slice %27 {offsets = [0, 94], sizes = [32, 1], strides = [1, 1]} : vector<32x128xi32> to vector<32x1xi32>
    %406 = vector.broadcast %405 : vector<32x1xi32> to vector<32x256xi32>
    %407 = arith.cmpi eq, %26, %406 : vector<32x256xi32>
    %408 = arith.ori %404, %407 : vector<32x256xi1>
    %409 = vector.extract_strided_slice %27 {offsets = [0, 95], sizes = [32, 1], strides = [1, 1]} : vector<32x128xi32> to vector<32x1xi32>
    %410 = vector.broadcast %409 : vector<32x1xi32> to vector<32x256xi32>
    %411 = arith.cmpi eq, %26, %410 : vector<32x256xi32>
    %412 = arith.ori %408, %411 : vector<32x256xi1>
    %413 = vector.extract_strided_slice %27 {offsets = [0, 96], sizes = [32, 1], strides = [1, 1]} : vector<32x128xi32> to vector<32x1xi32>
    %414 = vector.broadcast %413 : vector<32x1xi32> to vector<32x256xi32>
    %415 = arith.cmpi eq, %26, %414 : vector<32x256xi32>
    %416 = arith.ori %412, %415 : vector<32x256xi1>
    %417 = vector.extract_strided_slice %27 {offsets = [0, 97], sizes = [32, 1], strides = [1, 1]} : vector<32x128xi32> to vector<32x1xi32>
    %418 = vector.broadcast %417 : vector<32x1xi32> to vector<32x256xi32>
    %419 = arith.cmpi eq, %26, %418 : vector<32x256xi32>
    %420 = arith.ori %416, %419 : vector<32x256xi1>
    %421 = vector.extract_strided_slice %27 {offsets = [0, 98], sizes = [32, 1], strides = [1, 1]} : vector<32x128xi32> to vector<32x1xi32>
    %422 = vector.broadcast %421 : vector<32x1xi32> to vector<32x256xi32>
    %423 = arith.cmpi eq, %26, %422 : vector<32x256xi32>
    %424 = arith.ori %420, %423 : vector<32x256xi1>
    %425 = vector.extract_strided_slice %27 {offsets = [0, 99], sizes = [32, 1], strides = [1, 1]} : vector<32x128xi32> to vector<32x1xi32>
    %426 = vector.broadcast %425 : vector<32x1xi32> to vector<32x256xi32>
    %427 = arith.cmpi eq, %26, %426 : vector<32x256xi32>
    %428 = arith.ori %424, %427 : vector<32x256xi1>
    %429 = vector.extract_strided_slice %27 {offsets = [0, 100], sizes = [32, 1], strides = [1, 1]} : vector<32x128xi32> to vector<32x1xi32>
    %430 = vector.broadcast %429 : vector<32x1xi32> to vector<32x256xi32>
    %431 = arith.cmpi eq, %26, %430 : vector<32x256xi32>
    %432 = arith.ori %428, %431 : vector<32x256xi1>
    %433 = vector.extract_strided_slice %27 {offsets = [0, 101], sizes = [32, 1], strides = [1, 1]} : vector<32x128xi32> to vector<32x1xi32>
    %434 = vector.broadcast %433 : vector<32x1xi32> to vector<32x256xi32>
    %435 = arith.cmpi eq, %26, %434 : vector<32x256xi32>
    %436 = arith.ori %432, %435 : vector<32x256xi1>
    %437 = vector.extract_strided_slice %27 {offsets = [0, 102], sizes = [32, 1], strides = [1, 1]} : vector<32x128xi32> to vector<32x1xi32>
    %438 = vector.broadcast %437 : vector<32x1xi32> to vector<32x256xi32>
    %439 = arith.cmpi eq, %26, %438 : vector<32x256xi32>
    %440 = arith.ori %436, %439 : vector<32x256xi1>
    %441 = vector.extract_strided_slice %27 {offsets = [0, 103], sizes = [32, 1], strides = [1, 1]} : vector<32x128xi32> to vector<32x1xi32>
    %442 = vector.broadcast %441 : vector<32x1xi32> to vector<32x256xi32>
    %443 = arith.cmpi eq, %26, %442 : vector<32x256xi32>
    %444 = arith.ori %440, %443 : vector<32x256xi1>
    %445 = vector.extract_strided_slice %27 {offsets = [0, 104], sizes = [32, 1], strides = [1, 1]} : vector<32x128xi32> to vector<32x1xi32>
    %446 = vector.broadcast %445 : vector<32x1xi32> to vector<32x256xi32>
    %447 = arith.cmpi eq, %26, %446 : vector<32x256xi32>
    %448 = arith.ori %444, %447 : vector<32x256xi1>
    %449 = vector.extract_strided_slice %27 {offsets = [0, 105], sizes = [32, 1], strides = [1, 1]} : vector<32x128xi32> to vector<32x1xi32>
    %450 = vector.broadcast %449 : vector<32x1xi32> to vector<32x256xi32>
    %451 = arith.cmpi eq, %26, %450 : vector<32x256xi32>
    %452 = arith.ori %448, %451 : vector<32x256xi1>
    %453 = vector.extract_strided_slice %27 {offsets = [0, 106], sizes = [32, 1], strides = [1, 1]} : vector<32x128xi32> to vector<32x1xi32>
    %454 = vector.broadcast %453 : vector<32x1xi32> to vector<32x256xi32>
    %455 = arith.cmpi eq, %26, %454 : vector<32x256xi32>
    %456 = arith.ori %452, %455 : vector<32x256xi1>
    %457 = vector.extract_strided_slice %27 {offsets = [0, 107], sizes = [32, 1], strides = [1, 1]} : vector<32x128xi32> to vector<32x1xi32>
    %458 = vector.broadcast %457 : vector<32x1xi32> to vector<32x256xi32>
    %459 = arith.cmpi eq, %26, %458 : vector<32x256xi32>
    %460 = arith.ori %456, %459 : vector<32x256xi1>
    %461 = vector.extract_strided_slice %27 {offsets = [0, 108], sizes = [32, 1], strides = [1, 1]} : vector<32x128xi32> to vector<32x1xi32>
    %462 = vector.broadcast %461 : vector<32x1xi32> to vector<32x256xi32>
    %463 = arith.cmpi eq, %26, %462 : vector<32x256xi32>
    %464 = arith.ori %460, %463 : vector<32x256xi1>
    %465 = vector.extract_strided_slice %27 {offsets = [0, 109], sizes = [32, 1], strides = [1, 1]} : vector<32x128xi32> to vector<32x1xi32>
    %466 = vector.broadcast %465 : vector<32x1xi32> to vector<32x256xi32>
    %467 = arith.cmpi eq, %26, %466 : vector<32x256xi32>
    %468 = arith.ori %464, %467 : vector<32x256xi1>
    %469 = vector.extract_strided_slice %27 {offsets = [0, 110], sizes = [32, 1], strides = [1, 1]} : vector<32x128xi32> to vector<32x1xi32>
    %470 = vector.broadcast %469 : vector<32x1xi32> to vector<32x256xi32>
    %471 = arith.cmpi eq, %26, %470 : vector<32x256xi32>
    %472 = arith.ori %468, %471 : vector<32x256xi1>
    %473 = vector.extract_strided_slice %27 {offsets = [0, 111], sizes = [32, 1], strides = [1, 1]} : vector<32x128xi32> to vector<32x1xi32>
    %474 = vector.broadcast %473 : vector<32x1xi32> to vector<32x256xi32>
    %475 = arith.cmpi eq, %26, %474 : vector<32x256xi32>
    %476 = arith.ori %472, %475 : vector<32x256xi1>
    %477 = vector.extract_strided_slice %27 {offsets = [0, 112], sizes = [32, 1], strides = [1, 1]} : vector<32x128xi32> to vector<32x1xi32>
    %478 = vector.broadcast %477 : vector<32x1xi32> to vector<32x256xi32>
    %479 = arith.cmpi eq, %26, %478 : vector<32x256xi32>
    %480 = arith.ori %476, %479 : vector<32x256xi1>
    %481 = vector.extract_strided_slice %27 {offsets = [0, 113], sizes = [32, 1], strides = [1, 1]} : vector<32x128xi32> to vector<32x1xi32>
    %482 = vector.broadcast %481 : vector<32x1xi32> to vector<32x256xi32>
    %483 = arith.cmpi eq, %26, %482 : vector<32x256xi32>
    %484 = arith.ori %480, %483 : vector<32x256xi1>
    %485 = vector.extract_strided_slice %27 {offsets = [0, 114], sizes = [32, 1], strides = [1, 1]} : vector<32x128xi32> to vector<32x1xi32>
    %486 = vector.broadcast %485 : vector<32x1xi32> to vector<32x256xi32>
    %487 = arith.cmpi eq, %26, %486 : vector<32x256xi32>
    %488 = arith.ori %484, %487 : vector<32x256xi1>
    %489 = vector.extract_strided_slice %27 {offsets = [0, 115], sizes = [32, 1], strides = [1, 1]} : vector<32x128xi32> to vector<32x1xi32>
    %490 = vector.broadcast %489 : vector<32x1xi32> to vector<32x256xi32>
    %491 = arith.cmpi eq, %26, %490 : vector<32x256xi32>
    %492 = arith.ori %488, %491 : vector<32x256xi1>
    %493 = vector.extract_strided_slice %27 {offsets = [0, 116], sizes = [32, 1], strides = [1, 1]} : vector<32x128xi32> to vector<32x1xi32>
    %494 = vector.broadcast %493 : vector<32x1xi32> to vector<32x256xi32>
    %495 = arith.cmpi eq, %26, %494 : vector<32x256xi32>
    %496 = arith.ori %492, %495 : vector<32x256xi1>
    %497 = vector.extract_strided_slice %27 {offsets = [0, 117], sizes = [32, 1], strides = [1, 1]} : vector<32x128xi32> to vector<32x1xi32>
    %498 = vector.broadcast %497 : vector<32x1xi32> to vector<32x256xi32>
    %499 = arith.cmpi eq, %26, %498 : vector<32x256xi32>
    %500 = arith.ori %496, %499 : vector<32x256xi1>
    %501 = vector.extract_strided_slice %27 {offsets = [0, 118], sizes = [32, 1], strides = [1, 1]} : vector<32x128xi32> to vector<32x1xi32>
    %502 = vector.broadcast %501 : vector<32x1xi32> to vector<32x256xi32>
    %503 = arith.cmpi eq, %26, %502 : vector<32x256xi32>
    %504 = arith.ori %500, %503 : vector<32x256xi1>
    %505 = vector.extract_strided_slice %27 {offsets = [0, 119], sizes = [32, 1], strides = [1, 1]} : vector<32x128xi32> to vector<32x1xi32>
    %506 = vector.broadcast %505 : vector<32x1xi32> to vector<32x256xi32>
    %507 = arith.cmpi eq, %26, %506 : vector<32x256xi32>
    %508 = arith.ori %504, %507 : vector<32x256xi1>
    %509 = vector.extract_strided_slice %27 {offsets = [0, 120], sizes = [32, 1], strides = [1, 1]} : vector<32x128xi32> to vector<32x1xi32>
    %510 = vector.broadcast %509 : vector<32x1xi32> to vector<32x256xi32>
    %511 = arith.cmpi eq, %26, %510 : vector<32x256xi32>
    %512 = arith.ori %508, %511 : vector<32x256xi1>
    %513 = vector.extract_strided_slice %27 {offsets = [0, 121], sizes = [32, 1], strides = [1, 1]} : vector<32x128xi32> to vector<32x1xi32>
    %514 = vector.broadcast %513 : vector<32x1xi32> to vector<32x256xi32>
    %515 = arith.cmpi eq, %26, %514 : vector<32x256xi32>
    %516 = arith.ori %512, %515 : vector<32x256xi1>
    %517 = vector.extract_strided_slice %27 {offsets = [0, 122], sizes = [32, 1], strides = [1, 1]} : vector<32x128xi32> to vector<32x1xi32>
    %518 = vector.broadcast %517 : vector<32x1xi32> to vector<32x256xi32>
    %519 = arith.cmpi eq, %26, %518 : vector<32x256xi32>
    %520 = arith.ori %516, %519 : vector<32x256xi1>
    %521 = vector.extract_strided_slice %27 {offsets = [0, 123], sizes = [32, 1], strides = [1, 1]} : vector<32x128xi32> to vector<32x1xi32>
    %522 = vector.broadcast %521 : vector<32x1xi32> to vector<32x256xi32>
    %523 = arith.cmpi eq, %26, %522 : vector<32x256xi32>
    %524 = arith.ori %520, %523 : vector<32x256xi1>
    %525 = vector.extract_strided_slice %27 {offsets = [0, 124], sizes = [32, 1], strides = [1, 1]} : vector<32x128xi32> to vector<32x1xi32>
    %526 = vector.broadcast %525 : vector<32x1xi32> to vector<32x256xi32>
    %527 = arith.cmpi eq, %26, %526 : vector<32x256xi32>
    %528 = arith.ori %524, %527 : vector<32x256xi1>
    %529 = vector.extract_strided_slice %27 {offsets = [0, 125], sizes = [32, 1], strides = [1, 1]} : vector<32x128xi32> to vector<32x1xi32>
    %530 = vector.broadcast %529 : vector<32x1xi32> to vector<32x256xi32>
    %531 = arith.cmpi eq, %26, %530 : vector<32x256xi32>
    %532 = arith.ori %528, %531 : vector<32x256xi1>
    %533 = vector.extract_strided_slice %27 {offsets = [0, 126], sizes = [32, 1], strides = [1, 1]} : vector<32x128xi32> to vector<32x1xi32>
    %534 = vector.broadcast %533 : vector<32x1xi32> to vector<32x256xi32>
    %535 = arith.cmpi eq, %26, %534 : vector<32x256xi32>
    %536 = arith.ori %532, %535 : vector<32x256xi1>
    %537 = vector.extract_strided_slice %27 {offsets = [0, 127], sizes = [32, 1], strides = [1, 1]} : vector<32x128xi32> to vector<32x1xi32>
    %538 = vector.broadcast %537 : vector<32x1xi32> to vector<32x256xi32>
    %539 = arith.cmpi eq, %26, %538 : vector<32x256xi32>
    %540 = arith.ori %536, %539 : vector<32x256xi1>
    %c0_7 = arith.constant 0 : index
    %c0_8 = arith.constant 0 : index
    %541 = vector.load %arg4[%c0_7, %c0_8] : memref<32x256xf32, #tpu.memory_space<vmem>>, vector<32x256xf32>
    %cst = arith.constant 0xFF800000 : f32
    %542 = vector.broadcast %cst : f32 to vector<32x256xf32>
    %543 = arith.select %540, %542, %541 : vector<32x256xi1>, vector<32x256xf32>
    %c0_9 = arith.constant 0 : index
    %c0_10 = arith.constant 0 : index
    %544 = vector.load %arg4[%c0_9, %c0_10] : memref<32x256xf32, #tpu.memory_space<vmem>>, vector<32x256xf32>
    tpu.vector_store %arg4[%c0_9, %c0_10], %543 {strides = array<i32>} : memref<32x256xf32, #tpu.memory_space<vmem>>, vector<32x256xf32>,
    return
  }
  func.func @transform_0(%arg0: i32, %arg1: i32) -> (i32, i32) {
    %c0_i32 = arith.constant 0 : i32
    %c0_i32_0 = arith.constant 0 : i32
    return %c0_i32, %arg1 : i32, i32
  }
  func.func @transform_1(%arg0: i32, %arg1: i32) -> (i32, i32) {
    %c0_i32 = arith.constant 0 : i32
    %c0_i32_0 = arith.constant 0 : i32
    return %c0_i32, %arg0 : i32, i32
  }
  func.func @transform_2(%arg0: i32, %arg1: i32) -> (i32, i32) {
    %c0_i32 = arith.constant 0 : i32
    %c0_i32_0 = arith.constant 0 : i32
    return %c0_i32, %arg0 : i32, i32
  }
}

</mosaic_0001>

<llo_original>
// kernel: tpu_custom_call.1
$region0: #{tpu_custom_call.1}
  #allocation0 [shape = 'u32[]', space=smem, size = 0x4, offset = 0x4, fixed_abs, tag = 'smem constant byte address 0x4 - core index']
  #allocation1 [shape = 'u32[144,128]{1,0:T(1,128)}', space=vmem, size = 0x12000, scoped, tag = 'internal scratch']
  %s0 = inlined_call_operand.vmem [shape: s32[32,128], index: 0, kind: input, shape index: {}]
  %s1 = inlined_call_operand.hbm [shape: f32[32,256], index: 1, kind: input, shape index: {}, may-alias: {1,2}]
  %s2 = inlined_call_operand.hbm [shape: f32[32,256], index: 2, kind: output, shape index: {}, may-alias: {1,2}]
  %s3 = sld [smem:[#allocation0]]
  $region26: #{tpu_custom_call.1} parent=0
    _
  %s5 = ssub.s32 1, %s3
  %s6 = scalar_select 0, %s5, %s3
  $region1: #{tpu_custom_call.1} parent=0
    #allocation2 [shape = 'u8[32768]{0}', space=vmem, size = 0x8000, scoped, tag = 'input window, operand 1, single buffered']
    #allocation3 [shape = 's32[1]{0}', space=sflag, size = 0x4, scoped, tag = 'scoped memory for tpu_custom_call.1']
    #allocation4 [shape = 's32[1]{0}', space=sflag, size = 0x4, scoped, tag = 'scoped memory for tpu_custom_call.1']
    #allocation5 [shape = 'u8[32768]{0}', space=vmem, size = 0x8000, scoped, tag = 'output window, operand 0, single buffered']
    %7 = vsyncpa [#allocation3], 0
    %8 = vsyncpa [#allocation4], 0
    // Predicated region
    $region2: #{tpu_custom_call.1} parent=1 // pred_check
      _
    $region3: #{tpu_custom_call.1} parent=1 // pred_check_branch
      %10 = sbr.rel (0) target = $region5
    $region4: #{tpu_custom_call.1} parent=1 // pred_region
      _
    $region5: #{tpu_custom_call.1} parent=1 // pred_fallthru
      _
    // Predicated region
    $region6: #{tpu_custom_call.1} parent=1 // pred_check
      _
    $region7: #{tpu_custom_call.1} parent=1 // pred_check_branch
      %12 = sbr.rel (0) target = $region9
    $region8: #{tpu_custom_call.1} parent=1 // pred_region
      %s14 = ssub.s32 1024, 1024
      %15 = vsyncadd [#allocation3], %s14
      %s16 = sshll.u32 [#allocation2], 4
      %s17 = int_to_ptr.vmem [resolvable:$true] %s16
      %22 = dma.hbm_to_vmem [thread:$0]  %s1, 1024, %s17, [#allocation3], 256, 256, 16
    $region9: #{tpu_custom_call.1} parent=1 // pred_fallthru
      _
    // Predicated region
    $region10: #{tpu_custom_call.1} parent=1 // pred_check
      _
    $region11: #{tpu_custom_call.1} parent=1 // pred_check_branch
      %24 = sbr.rel (0) target = $region13
    $region12: #{tpu_custom_call.1} parent=1 // pred_region
      %25 = dma.done [#allocation3], 1024
    $region13: #{tpu_custom_call.1} parent=1 // pred_fallthru
      _
    %p26 = scmp.eq.s32.totalorder 0, 0
    // Predicated region
    $region14: #{tpu_custom_call.1} parent=1 // pred_check
      %p27 = pneg %p26
    $region15: #{tpu_custom_call.1} parent=1 // pred_check_branch
      %29 = sbr.rel (%p27) target = $region17
    $region16: #{tpu_custom_call.1} parent=1 // pred_region
      %v30 = vld [vmem:[#allocation2] sm:$0xff]
      %v31 = vld [vmem:[#allocation2 + $0x8] sm:$0xff]
      %v32 = vld [vmem:[#allocation2 + $0x10] sm:$0xff]
      %v33 = vld [vmem:[#allocation2 + $0x18] sm:$0xff]
      %v34 = vld [vmem:[#allocation2 + $0x20] sm:$0xff]
      %v35 = vld [vmem:[#allocation2 + $0x28] sm:$0xff]
      %v36 = vld [vmem:[#allocation2 + $0x30] sm:$0xff]
      %v37 = vld [vmem:[#allocation2 + $0x38] sm:$0xff]
      %38 = vst [vmem:[#allocation5] sm:$0xff] %v30
      %39 = vst [vmem:[#allocation5 + $0x8] sm:$0xff] %v31
      %40 = vst [vmem:[#allocation5 + $0x10] sm:$0xff] %v32
      %41 = vst [vmem:[#allocation5 + $0x18] sm:$0xff] %v33
      %42 = vst [vmem:[#allocation5 + $0x20] sm:$0xff] %v34
      %43 = vst [vmem:[#allocation5 + $0x28] sm:$0xff] %v35
      %44 = vst [vmem:[#allocation5 + $0x30] sm:$0xff] %v36
      %45 = vst [vmem:[#allocation5 + $0x38] sm:$0xff] %v37
    $region17: #{tpu_custom_call.1} parent=1 // pred_fallthru
      _
    %s46 = smul.u32 0, 256
    %v47 = vlaneseq
    %v48 = vand.u32 %v47, 127
    %v49 = vadd.s32 %v48, 128
    %v50 = vstv %s46
    %v51 = vadd.s32 %v48, %v50
    %v52 = vadd.s32 %v49, %v50
    %v53 = vlaneseq
    %v54 = vshrl.u32 %v53, 7
    %v55 = vadd.s32 %v54, 8
    %v56 = vadd.s32 %v54, 16
    %v57 = vadd.s32 %v54, 24
    %vm58 = vcmp.lt.s32.totalorder %v54, 0
    %v59 = vsub.s32 0, %v54
    %v60 = vsel %vm58, %v59, %v54
    %v61 = vshrl.u32 %v60, 3
    %v62 = vand.u32 %v60, 7
    %v63 = vsub.s32 0, %v62
    %v64 = vsel %vm58, %v63, %v62
    %vm65 = vcmp.lt.s32.totalorder %v55, 0
    %v66 = vsub.s32 0, %v55
    %v67 = vsel %vm65, %v66, %v55
    %v68 = vshrl.u32 %v67, 3
    %v69 = vand.u32 %v67, 7
    %v70 = vsub.s32 0, %v69
    %v71 = vsel %vm65, %v70, %v69
    %vm72 = vcmp.lt.s32.totalorder %v56, 0
    %v73 = vsub.s32 0, %v56
    %v74 = vsel %vm72, %v73, %v56
    %v75 = vshrl.u32 %v74, 3
    %v76 = vand.u32 %v74, 7
    %v77 = vsub.s32 0, %v76
    %v78 = vsel %vm72, %v77, %v76
    %vm79 = vcmp.lt.s32.totalorder %v57, 0
    %v80 = vsub.s32 0, %v57
    %v81 = vsel %vm79, %v80, %v57
    %v82 = vshrl.u32 %v81, 3
    %v83 = vand.u32 %v81, 7
    %v84 = vsub.s32 0, %v83
    %v85 = vsel %vm79, %v84, %v83
    %vm86 = vcmp.ne.s32.totalorder %v64, 0
    %vm87 = vcmp.ne.s32.totalorder %v71, 0
    %vm88 = vcmp.ne.s32.totalorder %v78, 0
    %vm89 = vcmp.ne.s32.totalorder %v85, 0
    %vm90 = vcmp.lt.s32.totalorder %v64, 0
    %vm91 = vcmp.lt.s32.totalorder %v71, 0
    %vm92 = vcmp.lt.s32.totalorder %v78, 0
    %vm93 = vcmp.lt.s32.totalorder %v85, 0
    %vm94 = vmand %vm90, %vm86
    %vm95 = vmand %vm91, %vm87
    %vm96 = vmand %vm92, %vm88
    %vm97 = vmand %vm93, %vm89
    %v98 = vadd.s32 %v64, 8
    %v99 = vadd.s32 %v71, 8
    %v100 = vadd.s32 %v78, 8
    %v101 = vadd.s32 %v85, 8
    %v102 = vsel %vm94, %v98, %v64
    %v103 = vsel %vm95, %v99, %v71
    %v104 = vsel %vm96, %v100, %v78
    %v105 = vsel %vm97, %v101, %v85
    %v106 = vmul.u32 %v102, 256
    %v107 = vmul.u32 %v103, 256
    %v108 = vmul.u32 %v104, 256
    %v109 = vmul.u32 %v105, 256
    %v110 = vadd.s32 %v51, %v106
    %v111 = vadd.s32 %v52, %v106
    %v112 = vadd.s32 %v51, %v107
    %v113 = vadd.s32 %v52, %v107
    %v114 = vadd.s32 %v51, %v108
    %v115 = vadd.s32 %v52, %v108
    %v116 = vadd.s32 %v51, %v109
    %v117 = vadd.s32 %v52, %v109
    %v118 = vld [vmem:[%s0] sm:$0xff]
    %v119 = vld [vmem:[%s0 + $0x8] sm:$0xff]
    %v120 = vld [vmem:[%s0 + $0x10] sm:$0xff]
    %v121 = vld [vmem:[%s0 + $0x18] sm:$0xff]
    %122 = vset.pattern.permute.xlu0 0
    %123 = vperm.xlu0 %122, %v118
    %v124 = vpop.permute.xlu0 %123
    %125 = vset.pattern.permute.xlu0 0
    %126 = vperm.xlu0 %125, %v119
    %v127 = vpop.permute.xlu0 %126
    %128 = vset.pattern.permute.xlu0 0
    %129 = vperm.xlu0 %128, %v120
    %v130 = vpop.permute.xlu0 %129
    %131 = vset.pattern.permute.xlu0 0
    %132 = vperm.xlu0 %131, %v121
    %v133 = vpop.permute.xlu0 %132
    %vm134 = vcmp.eq.s32.totalorder %v110, %v124
    %vm135 = vcmp.eq.s32.totalorder %v111, %v124
    %vm136 = vcmp.eq.s32.totalorder %v112, %v127
    %vm137 = vcmp.eq.s32.totalorder %v113, %v127
    %vm138 = vcmp.eq.s32.totalorder %v114, %v130
    %vm139 = vcmp.eq.s32.totalorder %v115, %v130
    %vm140 = vcmp.eq.s32.totalorder %v116, %v133
    %vm141 = vcmp.eq.s32.totalorder %v117, %v133
    %142 = vset.pattern.permute.xlu0 1
    %143 = vperm.xlu0 %142, %v118
    %v144 = vpop.permute.xlu0 %143
    %145 = vset.pattern.permute.xlu0 1
    %146 = vperm.xlu0 %145, %v119
    %v147 = vpop.permute.xlu0 %146
    %148 = vset.pattern.permute.xlu0 1
    %149 = vperm.xlu0 %148, %v120
    %v150 = vpop.permute.xlu0 %149
    %151 = vset.pattern.permute.xlu0 1
    %152 = vperm.xlu0 %151, %v121
    %v153 = vpop.permute.xlu0 %152
    %vm154 = vcmp.eq.s32.totalorder %v110, %v144
    %vm155 = vcmp.eq.s32.totalorder %v111, %v144
    %vm156 = vcmp.eq.s32.totalorder %v112, %v147
    %vm157 = vcmp.eq.s32.totalorder %v113, %v147
    %vm158 = vcmp.eq.s32.totalorder %v114, %v150
    %vm159 = vcmp.eq.s32.totalorder %v115, %v150
    %vm160 = vcmp.eq.s32.totalorder %v116, %v153
    %vm161 = vcmp.eq.s32.totalorder %v117, %v153
    %vm162 = vmor %vm134, %vm154
    %vm163 = vmor %vm135, %vm155
    %vm164 = vmor %vm136, %vm156
    %vm165 = vmor %vm137, %vm157
    %vm166 = vmor %vm138, %vm158
    %vm167 = vmor %vm139, %vm159
    %vm168 = vmor %vm140, %vm160
    %vm169 = vmor %vm141, %vm161
    %170 = vset.pattern.permute.xlu0 2
    %171 = vperm.xlu0 %170, %v118
    %v172 = vpop.permute.xlu0 %171
    %173 = vset.pattern.permute.xlu0 2
    %174 = vperm.xlu0 %173, %v119
    %v175 = vpop.permute.xlu0 %174
    %176 = vset.pattern.permute.xlu0 2
    %177 = vperm.xlu0 %176, %v120
    %v178 = vpop.permute.xlu0 %177
    %179 = vset.pattern.permute.xlu0 2
    %180 = vperm.xlu0 %179, %v121
    %v181 = vpop.permute.xlu0 %180
    %vm182 = vcmp.eq.s32.totalorder %v110, %v172
    %vm183 = vcmp.eq.s32.totalorder %v111, %v172
    %vm184 = vcmp.eq.s32.totalorder %v112, %v175
    %vm185 = vcmp.eq.s32.totalorder %v113, %v175
    %vm186 = vcmp.eq.s32.totalorder %v114, %v178
    %vm187 = vcmp.eq.s32.totalorder %v115, %v178
    %vm188 = vcmp.eq.s32.totalorder %v116, %v181
    %vm189 = vcmp.eq.s32.totalorder %v117, %v181
    %vm190 = vmor %vm162, %vm182
    %vm191 = vmor %vm163, %vm183
    %vm192 = vmor %vm164, %vm184
    %vm193 = vmor %vm165, %vm185
    %vm194 = vmor %vm166, %vm186
    %vm195 = vmor %vm167, %vm187
    %vm196 = vmor %vm168, %vm188
    %vm197 = vmor %vm169, %vm189
    %198 = vset.pattern.permute.xlu0 3
    %199 = vperm.xlu0 %198, %v118
    %v200 = vpop.permute.xlu0 %199
    %201 = vset.pattern.permute.xlu0 3
    %202 = vperm.xlu0 %201, %v119
    %v203 = vpop.permute.xlu0 %202
    %204 = vset.pattern.permute.xlu0 3
    %205 = vperm.xlu0 %204, %v120
    %v206 = vpop.permute.xlu0 %205
    %207 = vset.pattern.permute.xlu0 3
    %208 = vperm.xlu0 %207, %v121
    %v209 = vpop.permute.xlu0 %208
    %vm210 = vcmp.eq.s32.totalorder %v110, %v200
    %vm211 = vcmp.eq.s32.totalorder %v111, %v200
    %vm212 = vcmp.eq.s32.totalorder %v112, %v203
    %vm213 = vcmp.eq.s32.totalorder %v113, %v203
    %vm214 = vcmp.eq.s32.totalorder %v114, %v206
    %vm215 = vcmp.eq.s32.totalorder %v115, %v206
    %vm216 = vcmp.eq.s32.totalorder %v116, %v209
    %vm217 = vcmp.eq.s32.totalorder %v117, %v209
    %vm218 = vmor %vm190, %vm210
    %vm219 = vmor %vm191, %vm211
    %vm220 = vmor %vm192, %vm212
    %vm221 = vmor %vm193, %vm213
    %vm222 = vmor %vm194, %vm214
    %vm223 = vmor %vm195, %vm215
    %vm224 = vmor %vm196, %vm216
    %vm225 = vmor %vm197, %vm217
    %226 = vset.pattern.permute.xlu0 4
    %227 = vperm.xlu0 %226, %v118
    %v228 = vpop.permute.xlu0 %227
    %229 = vset.pattern.permute.xlu0 4
    %230 = vperm.xlu0 %229, %v119
    %v231 = vpop.permute.xlu0 %230
    %232 = vset.pattern.permute.xlu0 4
    %233 = vperm.xlu0 %232, %v120
    %v234 = vpop.permute.xlu0 %233
    %235 = vset.pattern.permute.xlu0 4
    %236 = vperm.xlu0 %235, %v121
    %v237 = vpop.permute.xlu0 %236
    %vm238 = vcmp.eq.s32.totalorder %v110, %v228
    %vm239 = vcmp.eq.s32.totalorder %v111, %v228
    %vm240 = vcmp.eq.s32.totalorder %v112, %v231
    %vm241 = vcmp.eq.s32.totalorder %v113, %v231
    %vm242 = vcmp.eq.s32.totalorder %v114, %v234
    %vm243 = vcmp.eq.s32.totalorder %v115, %v234
    %vm244 = vcmp.eq.s32.totalorder %v116, %v237
    %vm245 = vcmp.eq.s32.totalorder %v117, %v237
    %vm246 = vmor %vm218, %vm238
    %vm247 = vmor %vm219, %vm239
    %vm248 = vmor %vm220, %vm240
    %vm249 = vmor %vm221, %vm241
    %vm250 = vmor %vm222, %vm242
    %vm251 = vmor %vm223, %vm243
    %vm252 = vmor %vm224, %vm244
    %vm253 = vmor %vm225, %vm245
    %254 = vset.pattern.permute.xlu0 5
    %255 = vperm.xlu0 %254, %v118
    %v256 = vpop.permute.xlu0 %255
    %257 = vset.pattern.permute.xlu0 5
    %258 = vperm.xlu0 %257, %v119
    %v259 = vpop.permute.xlu0 %258
    %260 = vset.pattern.permute.xlu0 5
    %261 = vperm.xlu0 %260, %v120
    %v262 = vpop.permute.xlu0 %261
    %263 = vset.pattern.permute.xlu0 5
    %264 = vperm.xlu0 %263, %v121
    %v265 = vpop.permute.xlu0 %264
    %vm266 = vcmp.eq.s32.totalorder %v110, %v256
    %vm267 = vcmp.eq.s32.totalorder %v111, %v256
    %vm268 = vcmp.eq.s32.totalorder %v112, %v259
    %vm269 = vcmp.eq.s32.totalorder %v113, %v259
    %vm270 = vcmp.eq.s32.totalorder %v114, %v262
    %vm271 = vcmp.eq.s32.totalorder %v115, %v262
    %vm272 = vcmp.eq.s32.totalorder %v116, %v265
    %vm273 = vcmp.eq.s32.totalorder %v117, %v265
    %vm274 = vmor %vm246, %vm266
    %vm275 = vmor %vm247, %vm267
    %vm276 = vmor %vm248, %vm268
    %vm277 = vmor %vm249, %vm269
    %vm278 = vmor %vm250, %vm270
    %vm279 = vmor %vm251, %vm271
    %vm280 = vmor %vm252, %vm272
    %vm281 = vmor %vm253, %vm273
    %282 = vset.pattern.permute.xlu0 6
    %283 = vperm.xlu0 %282, %v118
    %v284 = vpop.permute.xlu0 %283
    %285 = vset.pattern.permute.xlu0 6
    %286 = vperm.xlu0 %285, %v119
    %v287 = vpop.permute.xlu0 %286
    %288 = vset.pattern.permute.xlu0 6
    %289 = vperm.xlu0 %288, %v120
    %v290 = vpop.permute.xlu0 %289
    %291 = vset.pattern.permute.xlu0 6
    %292 = vperm.xlu0 %291, %v121
    %v293 = vpop.permute.xlu0 %292
    %vm294 = vcmp.eq.s32.totalorder %v110, %v284
    %vm295 = vcmp.eq.s32.totalorder %v111, %v284
    %vm296 = vcmp.eq.s32.totalorder %v112, %v287
    %vm297 = vcmp.eq.s32.totalorder %v113, %v287
    %vm298 = vcmp.eq.s32.totalorder %v114, %v290
    %vm299 = vcmp.eq.s32.totalorder %v115, %v290
    %vm300 = vcmp.eq.s32.totalorder %v116, %v293
    %vm301 = vcmp.eq.s32.totalorder %v117, %v293
    %vm302 = vmor %vm274, %vm294
    %vm303 = vmor %vm275, %vm295
    %vm304 = vmor %vm276, %vm296
    %vm305 = vmor %vm277, %vm297
    %vm306 = vmor %vm278, %vm298
    %vm307 = vmor %vm279, %vm299
    %vm308 = vmor %vm280, %vm300
    %vm309 = vmor %vm281, %vm301
    %310 = vset.pattern.permute.xlu0 7
    %311 = vperm.xlu0 %310, %v118
    %v312 = vpop.permute.xlu0 %311
    %313 = vset.pattern.permute.xlu0 7
    %314 = vperm.xlu0 %313, %v119
    %v315 = vpop.permute.xlu0 %314
    %316 = vset.pattern.permute.xlu0 7
    %317 = vperm.xlu0 %316, %v120
    %v318 = vpop.permute.xlu0 %317
    %319 = vset.pattern.permute.xlu0 7
    %320 = vperm.xlu0 %319, %v121
    %v321 = vpop.permute.xlu0 %320
    %vm322 = vcmp.eq.s32.totalorder %v110, %v312
    %vm323 = vcmp.eq.s32.totalorder %v111, %v312
    %vm324 = vcmp.eq.s32.totalorder %v112, %v315
    %vm325 = vcmp.eq.s32.totalorder %v113, %v315
    %vm326 = vcmp.eq.s32.totalorder %v114, %v318
    %vm327 = vcmp.eq.s32.totalorder %v115, %v318
    %vm328 = vcmp.eq.s32.totalorder %v116, %v321
    %vm329 = vcmp.eq.s32.totalorder %v117, %v321
    %vm330 = vmor %vm302, %vm322
    %vm331 = vmor %vm303, %vm323
    %vm332 = vmor %vm304, %vm324
    %vm333 = vmor %vm305, %vm325
    %vm334 = vmor %vm306, %vm326
    %vm335 = vmor %vm307, %vm327
    %vm336 = vmor %vm308, %vm328
    %vm337 = vmor %vm309, %vm329
    %338 = vset.pattern.permute.xlu0 8
    %339 = vperm.xlu0 %338, %v118
    %v340 = vpop.permute.xlu0 %339
    %341 = vset.pattern.permute.xlu0 8
    %342 = vperm.xlu0 %341, %v119
    %v343 = vpop.permute.xlu0 %342
    %344 = vset.pattern.permute.xlu0 8
    %345 = vperm.xlu0 %344, %v120
    %v346 = vpop.permute.xlu0 %345
    %347 = vset.pattern.permute.xlu0 8
    %348 = vperm.xlu0 %347, %v121
    %v349 = vpop.permute.xlu0 %348
    %vm350 = vcmp.eq.s32.totalorder %v110, %v340
    %vm351 = vcmp.eq.s32.totalorder %v111, %v340
    %vm352 = vcmp.eq.s32.totalorder %v112, %v343
    %vm353 = vcmp.eq.s32.totalorder %v113, %v343
    %vm354 = vcmp.eq.s32.totalorder %v114, %v346
    %vm355 = vcmp.eq.s32.totalorder %v115, %v346
    %vm356 = vcmp.eq.s32.totalorder %v116, %v349
    %vm357 = vcmp.eq.s32.totalorder %v117, %v349
    %vm358 = vmor %vm330, %vm350
    %vm359 = vmor %vm331, %vm351
    %vm360 = vmor %vm332, %vm352
    %vm361 = vmor %vm333, %vm353
    %vm362 = vmor %vm334, %vm354
    %vm363 = vmor %vm335, %vm355
    %vm364 = vmor %vm336, %vm356
    %vm365 = vmor %vm337, %vm357
    %366 = vset.pattern.permute.xlu0 9
    %367 = vperm.xlu0 %366, %v118
    %v368 = vpop.permute.xlu0 %367
    %369 = vset.pattern.permute.xlu0 9
    %370 = vperm.xlu0 %369, %v119
    %v371 = vpop.permute.xlu0 %370
    %372 = vset.pattern.permute.xlu0 9
    %373 = vperm.xlu0 %372, %v120
    %v374 = vpop.permute.xlu0 %373
    %375 = vset.pattern.permute.xlu0 9
    %376 = vperm.xlu0 %375, %v121
    %v377 = vpop.permute.xlu0 %376
    %vm378 = vcmp.eq.s32.totalorder %v110, %v368
    %vm379 = vcmp.eq.s32.totalorder %v111, %v368
    %vm380 = vcmp.eq.s32.totalorder %v112, %v371
    %vm381 = vcmp.eq.s32.totalorder %v113, %v371
    %vm382 = vcmp.eq.s32.totalorder %v114, %v374
    %vm383 = vcmp.eq.s32.totalorder %v115, %v374
    %vm384 = vcmp.eq.s32.totalorder %v116, %v377
    %vm385 = vcmp.eq.s32.totalorder %v117, %v377
    %vm386 = vmor %vm358, %vm378
    %vm387 = vmor %vm359, %vm379
    %vm388 = vmor %vm360, %vm380
    %vm389 = vmor %vm361, %vm381
    %vm390 = vmor %vm362, %vm382
    %vm391 = vmor %vm363, %vm383
    %vm392 = vmor %vm364, %vm384
    %vm393 = vmor %vm365, %vm385
    %394 = vset.pattern.permute.xlu0 10
    %395 = vperm.xlu0 %394, %v118
    %v396 = vpop.permute.xlu0 %395
    %397 = vset.pattern.permute.xlu0 10
    %398 = vperm.xlu0 %397, %v119
    %v399 = vpop.permute.xlu0 %398
    %400 = vset.pattern.permute.xlu0 10
    %401 = vperm.xlu0 %400, %v120
    %v402 = vpop.permute.xlu0 %401
    %403 = vset.pattern.permute.xlu0 10
    %404 = vperm.xlu0 %403, %v121
    %v405 = vpop.permute.xlu0 %404
    %vm406 = vcmp.eq.s32.totalorder %v110, %v396
    %vm407 = vcmp.eq.s32.totalorder %v111, %v396
    %vm408 = vcmp.eq.s32.totalorder %v112, %v399
    %vm409 = vcmp.eq.s32.totalorder %v113, %v399
    %vm410 = vcmp.eq.s32.totalorder %v114, %v402
    %vm411 = vcmp.eq.s32.totalorder %v115, %v402
    %vm412 = vcmp.eq.s32.totalorder %v116, %v405
    %vm413 = vcmp.eq.s32.totalorder %v117, %v405
    %vm414 = vmor %vm386, %vm406
    %vm415 = vmor %vm387, %vm407
    %vm416 = vmor %vm388, %vm408
    %vm417 = vmor %vm389, %vm409
    %vm418 = vmor %vm390, %vm410
    %vm419 = vmor %vm391, %vm411
    %vm420 = vmor %vm392, %vm412
    %vm421 = vmor %vm393, %vm413
    %422 = vset.pattern.permute.xlu0 11
    %423 = vperm.xlu0 %422, %v118
    %v424 = vpop.permute.xlu0 %423
    %425 = vset.pattern.permute.xlu0 11
    %426 = vperm.xlu0 %425, %v119
    %v427 = vpop.permute.xlu0 %426
    %428 = vset.pattern.permute.xlu0 11
    %429 = vperm.xlu0 %428, %v120
    %v430 = vpop.permute.xlu0 %429
    %431 = vset.pattern.permute.xlu0 11
    %432 = vperm.xlu0 %431, %v121
    %v433 = vpop.permute.xlu0 %432
    %vm434 = vcmp.eq.s32.totalorder %v110, %v424
    %vm435 = vcmp.eq.s32.totalorder %v111, %v424
    %vm436 = vcmp.eq.s32.totalorder %v112, %v427
    %vm437 = vcmp.eq.s32.totalorder %v113, %v427
    %vm438 = vcmp.eq.s32.totalorder %v114, %v430
    %vm439 = vcmp.eq.s32.totalorder %v115, %v430
    %vm440 = vcmp.eq.s32.totalorder %v116, %v433
    %vm441 = vcmp.eq.s32.totalorder %v117, %v433
    %vm442 = vmor %vm414, %vm434
    %vm443 = vmor %vm415, %vm435
    %vm444 = vmor %vm416, %vm436
    %vm445 = vmor %vm417, %vm437
    %vm446 = vmor %vm418, %vm438
    %vm447 = vmor %vm419, %vm439
    %vm448 = vmor %vm420, %vm440
    %vm449 = vmor %vm421, %vm441
    %450 = vset.pattern.permute.xlu0 12
    %451 = vperm.xlu0 %450, %v118
    %v452 = vpop.permute.xlu0 %451
    %453 = vset.pattern.permute.xlu0 12
    %454 = vperm.xlu0 %453, %v119
    %v455 = vpop.permute.xlu0 %454
    %456 = vset.pattern.permute.xlu0 12
    %457 = vperm.xlu0 %456, %v120
    %v458 = vpop.permute.xlu0 %457
    %459 = vset.pattern.permute.xlu0 12
    %460 = vperm.xlu0 %459, %v121
    %v461 = vpop.permute.xlu0 %460
    %vm462 = vcmp.eq.s32.totalorder %v110, %v452
    %vm463 = vcmp.eq.s32.totalorder %v111, %v452
    %vm464 = vcmp.eq.s32.totalorder %v112, %v455
    %vm465 = vcmp.eq.s32.totalorder %v113, %v455
    %vm466 = vcmp.eq.s32.totalorder %v114, %v458
    %vm467 = vcmp.eq.s32.totalorder %v115, %v458
    %vm468 = vcmp.eq.s32.totalorder %v116, %v461
    %vm469 = vcmp.eq.s32.totalorder %v117, %v461
    %vm470 = vmor %vm442, %vm462
    %vm471 = vmor %vm443, %vm463
    %vm472 = vmor %vm444, %vm464
    %vm473 = vmor %vm445, %vm465
    %vm474 = vmor %vm446, %vm466
    %vm475 = vmor %vm447, %vm467
    %vm476 = vmor %vm448, %vm468
    %vm477 = vmor %vm449, %vm469
    %478 = vset.pattern.permute.xlu0 13
    %479 = vperm.xlu0 %478, %v118
    %v480 = vpop.permute.xlu0 %479
    %481 = vset.pattern.permute.xlu0 13
    %482 = vperm.xlu0 %481, %v119
    %v483 = vpop.permute.xlu0 %482
    %484 = vset.pattern.permute.xlu0 13
    %485 = vperm.xlu0 %484, %v120
    %v486 = vpop.permute.xlu0 %485
    %487 = vset.pattern.permute.xlu0 13
    %488 = vperm.xlu0 %487, %v121
    %v489 = vpop.permute.xlu0 %488
    %vm490 = vcmp.eq.s32.totalorder %v110, %v480
    %vm491 = vcmp.eq.s32.totalorder %v111, %v480
    %vm492 = vcmp.eq.s32.totalorder %v112, %v483
    %vm493 = vcmp.eq.s32.totalorder %v113, %v483
    %vm494 = vcmp.eq.s32.totalorder %v114, %v486
    %vm495 = vcmp.eq.s32.totalorder %v115, %v486
    %vm496 = vcmp.eq.s32.totalorder %v116, %v489
    %vm497 = vcmp.eq.s32.totalorder %v117, %v489
    %vm498 = vmor %vm470, %vm490
    %vm499 = vmor %vm471, %vm491
    %vm500 = vmor %vm472, %vm492
    %vm501 = vmor %vm473, %vm493
    %vm502 = vmor %vm474, %vm494
    %vm503 = vmor %vm475, %vm495
    %vm504 = vmor %vm476, %vm496
    %vm505 = vmor %vm477, %vm497
    %506 = vset.pattern.permute.xlu0 14
    %507 = vperm.xlu0 %506, %v118
    %v508 = vpop.permute.xlu0 %507
    %509 = vset.pattern.permute.xlu0 14
    %510 = vperm.xlu0 %509, %v119
    %v511 = vpop.permute.xlu0 %510
    %512 = vset.pattern.permute.xlu0 14
    %513 = vperm.xlu0 %512, %v120
    %v514 = vpop.permute.xlu0 %513
    %515 = vset.pattern.permute.xlu0 14
    %516 = vperm.xlu0 %515, %v121
    %v517 = vpop.permute.xlu0 %516
    %vm518 = vcmp.eq.s32.totalorder %v110, %v508
    %vm519 = vcmp.eq.s32.totalorder %v111, %v508
    %vm520 = vcmp.eq.s32.totalorder %v112, %v511
    %vm521 = vcmp.eq.s32.totalorder %v113, %v511
    %vm522 = vcmp.eq.s32.totalorder %v114, %v514
    %vm523 = vcmp.eq.s32.totalorder %v115, %v514
    %vm524 = vcmp.eq.s32.totalorder %v116, %v517
    %vm525 = vcmp.eq.s32.totalorder %v117, %v517
    %vm526 = vmor %vm498, %vm518
    %vm527 = vmor %vm499, %vm519
    %vm528 = vmor %vm500, %vm520
    %vm529 = vmor %vm501, %vm521
    %vm530 = vmor %vm502, %vm522
    %vm531 = vmor %vm503, %vm523
    %vm532 = vmor %vm504, %vm524
    %vm533 = vmor %vm505, %vm525
    %534 = vset.pattern.permute.xlu0 15
    %535 = vperm.xlu0 %534, %v118
    %v536 = vpop.permute.xlu0 %535
    %537 = vset.pattern.permute.xlu0 15
    %538 = vperm.xlu0 %537, %v119
    %v539 = vpop.permute.xlu0 %538
    %540 = vset.pattern.permute.xlu0 15
    %541 = vperm.xlu0 %540, %v120
    %v542 = vpop.permute.xlu0 %541
    %543 = vset.pattern.permute.xlu0 15
    %544 = vperm.xlu0 %543, %v121
    %v545 = vpop.permute.xlu0 %544
    %vm546 = vcmp.eq.s32.totalorder %v110, %v536
    %vm547 = vcmp.eq.s32.totalorder %v111, %v536
    %vm548 = vcmp.eq.s32.totalorder %v112, %v539
    %vm549 = vcmp.eq.s32.totalorder %v113, %v539
    %vm550 = vcmp.eq.s32.totalorder %v114, %v542
    %vm551 = vcmp.eq.s32.totalorder %v115, %v542
    %vm552 = vcmp.eq.s32.totalorder %v116, %v545
    %vm553 = vcmp.eq.s32.totalorder %v117, %v545
    %vm554 = vmor %vm526, %vm546
    %vm555 = vmor %vm527, %vm547
    %vm556 = vmor %vm528, %vm548
    %vm557 = vmor %vm529, %vm549
    %vm558 = vmor %vm530, %vm550
    %vm559 = vmor %vm531, %vm551
    %vm560 = vmor %vm532, %vm552
    %vm561 = vmor %vm533, %vm553
    %562 = vset.pattern.permute.xlu0 16
    %563 = vperm.xlu0 %562, %v118
    %v564 = vpop.permute.xlu0 %563
    %565 = vset.pattern.permute.xlu0 16
    %566 = vperm.xlu0 %565, %v119
    %v567 = vpop.permute.xlu0 %566
    %568 = vset.pattern.permute.xlu0 16
    %569 = vperm.xlu0 %568, %v120
    %v570 = vpop.permute.xlu0 %569
    %571 = vset.pattern.permute.xlu0 16
    %572 = vperm.xlu0 %571, %v121
    %v573 = vpop.permute.xlu0 %572
    %vm574 = vcmp.eq.s32.totalorder %v110, %v564
    %vm575 = vcmp.eq.s32.totalorder %v111, %v564
    %vm576 = vcmp.eq.s32.totalorder %v112, %v567
    %vm577 = vcmp.eq.s32.totalorder %v113, %v567
    %vm578 = vcmp.eq.s32.totalorder %v114, %v570
    %vm579 = vcmp.eq.s32.totalorder %v115, %v570
    %vm580 = vcmp.eq.s32.totalorder %v116, %v573
    %vm581 = vcmp.eq.s32.totalorder %v117, %v573
    %vm582 = vmor %vm554, %vm574
    %vm583 = vmor %vm555, %vm575
    %vm584 = vmor %vm556, %vm576
    %vm585 = vmor %vm557, %vm577
    %vm586 = vmor %vm558, %vm578
    %vm587 = vmor %vm559, %vm579
    %vm588 = vmor %vm560, %vm580
    %vm589 = vmor %vm561, %vm581
    %590 = vset.pattern.permute.xlu0 17
    %591 = vperm.xlu0 %590, %v118
    %v592 = vpop.permute.xlu0 %591
    %593 = vset.pattern.permute.xlu0 17
    %594 = vperm.xlu0 %593, %v119
    %v595 = vpop.permute.xlu0 %594
    %596 = vset.pattern.permute.xlu0 17
    %597 = vperm.xlu0 %596, %v120
    %v598 = vpop.permute.xlu0 %597
    %599 = vset.pattern.permute.xlu0 17
    %600 = vperm.xlu0 %599, %v121
    %v601 = vpop.permute.xlu0 %600
    %vm602 = vcmp.eq.s32.totalorder %v110, %v592
    %vm603 = vcmp.eq.s32.totalorder %v111, %v592
    %vm604 = vcmp.eq.s32.totalorder %v112, %v595
    %vm605 = vcmp.eq.s32.totalorder %v113, %v595
    %vm606 = vcmp.eq.s32.totalorder %v114, %v598
    %vm607 = vcmp.eq.s32.totalorder %v115, %v598
    %vm608 = vcmp.eq.s32.totalorder %v116, %v601
    %vm609 = vcmp.eq.s32.totalorder %v117, %v601
    %vm610 = vmor %vm582, %vm602
    %vm611 = vmor %vm583, %vm603
    %vm612 = vmor %vm584, %vm604
    %vm613 = vmor %vm585, %vm605
    %vm614 = vmor %vm586, %vm606
    %vm615 = vmor %vm587, %vm607
    %vm616 = vmor %vm588, %vm608
    %vm617 = vmor %vm589, %vm609
    %618 = vset.pattern.permute.xlu0 18
    %619 = vperm.xlu0 %618, %v118
    %v620 = vpop.permute.xlu0 %619
    %621 = vset.pattern.permute.xlu0 18
    %622 = vperm.xlu0 %621, %v119
    %v623 = vpop.permute.xlu0 %622
    %624 = vset.pattern.permute.xlu0 18
    %625 = vperm.xlu0 %624, %v120
    %v626 = vpop.permute.xlu0 %625
    %627 = vset.pattern.permute.xlu0 18
    %628 = vperm.xlu0 %627, %v121
    %v629 = vpop.permute.xlu0 %628
    %vm630 = vcmp.eq.s32.totalorder %v110, %v620
    %vm631 = vcmp.eq.s32.totalorder %v111, %v620
    %vm632 = vcmp.eq.s32.totalorder %v112, %v623
    %vm633 = vcmp.eq.s32.totalorder %v113, %v623
    %vm634 = vcmp.eq.s32.totalorder %v114, %v626
    %vm635 = vcmp.eq.s32.totalorder %v115, %v626
    %vm636 = vcmp.eq.s32.totalorder %v116, %v629
    %vm637 = vcmp.eq.s32.totalorder %v117, %v629
    %vm638 = vmor %vm610, %vm630
    %vm639 = vmor %vm611, %vm631
    %vm640 = vmor %vm612, %vm632
    %vm641 = vmor %vm613, %vm633
    %vm642 = vmor %vm614, %vm634
    %vm643 = vmor %vm615, %vm635
    %vm644 = vmor %vm616, %vm636
    %vm645 = vmor %vm617, %vm637
    %646 = vset.pattern.permute.xlu0 19
    %647 = vperm.xlu0 %646, %v118
    %v648 = vpop.permute.xlu0 %647
    %649 = vset.pattern.permute.xlu0 19
    %650 = vperm.xlu0 %649, %v119
    %v651 = vpop.permute.xlu0 %650
    %652 = vset.pattern.permute.xlu0 19
    %653 = vperm.xlu0 %652, %v120
    %v654 = vpop.permute.xlu0 %653
    %655 = vset.pattern.permute.xlu0 19
    %656 = vperm.xlu0 %655, %v121
    %v657 = vpop.permute.xlu0 %656
    %vm658 = vcmp.eq.s32.totalorder %v110, %v648
    %vm659 = vcmp.eq.s32.totalorder %v111, %v648
    %vm660 = vcmp.eq.s32.totalorder %v112, %v651
    %vm661 = vcmp.eq.s32.totalorder %v113, %v651
    %vm662 = vcmp.eq.s32.totalorder %v114, %v654
    %vm663 = vcmp.eq.s32.totalorder %v115, %v654
    %vm664 = vcmp.eq.s32.totalorder %v116, %v657
    %vm665 = vcmp.eq.s32.totalorder %v117, %v657
    %vm666 = vmor %vm638, %vm658
    %vm667 = vmor %vm639, %vm659
    %vm668 = vmor %vm640, %vm660
    %vm669 = vmor %vm641, %vm661
    %vm670 = vmor %vm642, %vm662
    %vm671 = vmor %vm643, %vm663
    %vm672 = vmor %vm644, %vm664
    %vm673 = vmor %vm645, %vm665
    %674 = vset.pattern.permute.xlu0 20
    %675 = vperm.xlu0 %674, %v118
    %v676 = vpop.permute.xlu0 %675
    %677 = vset.pattern.permute.xlu0 20
    %678 = vperm.xlu0 %677, %v119
    %v679 = vpop.permute.xlu0 %678
    %680 = vset.pattern.permute.xlu0 20
    %681 = vperm.xlu0 %680, %v120
    %v682 = vpop.permute.xlu0 %681
    %683 = vset.pattern.permute.xlu0 20
    %684 = vperm.xlu0 %683, %v121
    %v685 = vpop.permute.xlu0 %684
    %vm686 = vcmp.eq.s32.totalorder %v110, %v676
    %vm687 = vcmp.eq.s32.totalorder %v111, %v676
    %vm688 = vcmp.eq.s32.totalorder %v112, %v679
    %vm689 = vcmp.eq.s32.totalorder %v113, %v679
    %vm690 = vcmp.eq.s32.totalorder %v114, %v682
    %vm691 = vcmp.eq.s32.totalorder %v115, %v682
    %vm692 = vcmp.eq.s32.totalorder %v116, %v685
    %vm693 = vcmp.eq.s32.totalorder %v117, %v685
    %vm694 = vmor %vm666, %vm686
    %vm695 = vmor %vm667, %vm687
    %vm696 = vmor %vm668, %vm688
    %vm697 = vmor %vm669, %vm689
    %vm698 = vmor %vm670, %vm690
    %vm699 = vmor %vm671, %vm691
    %vm700 = vmor %vm672, %vm692
    %vm701 = vmor %vm673, %vm693
    %702 = vset.pattern.permute.xlu0 21
    %703 = vperm.xlu0 %702, %v118
    %v704 = vpop.permute.xlu0 %703
    %705 = vset.pattern.permute.xlu0 21
    %706 = vperm.xlu0 %705, %v119
    %v707 = vpop.permute.xlu0 %706
    %708 = vset.pattern.permute.xlu0 21
    %709 = vperm.xlu0 %708, %v120
    %v710 = vpop.permute.xlu0 %709
    %711 = vset.pattern.permute.xlu0 21
    %712 = vperm.xlu0 %711, %v121
    %v713 = vpop.permute.xlu0 %712
    %vm714 = vcmp.eq.s32.totalorder %v110, %v704
    %vm715 = vcmp.eq.s32.totalorder %v111, %v704
    %vm716 = vcmp.eq.s32.totalorder %v112, %v707
    %vm717 = vcmp.eq.s32.totalorder %v113, %v707
    %vm718 = vcmp.eq.s32.totalorder %v114, %v710
    %vm719 = vcmp.eq.s32.totalorder %v115, %v710
    %vm720 = vcmp.eq.s32.totalorder %v116, %v713
    %vm721 = vcmp.eq.s32.totalorder %v117, %v713
    %vm722 = vmor %vm694, %vm714
    %vm723 = vmor %vm695, %vm715
    %vm724 = vmor %vm696, %vm716
    %vm725 = vmor %vm697, %vm717
    %vm726 = vmor %vm698, %vm718
    %vm727 = vmor %vm699, %vm719
    %vm728 = vmor %vm700, %vm720
    %vm729 = vmor %vm701, %vm721
    %730 = vset.pattern.permute.xlu0 22
    %731 = vperm.xlu0 %730, %v118
    %v732 = vpop.permute.xlu0 %731
    %733 = vset.pattern.permute.xlu0 22
    %734 = vperm.xlu0 %733, %v119
    %v735 = vpop.permute.xlu0 %734
    %736 = vset.pattern.permute.xlu0 22
    %737 = vperm.xlu0 %736, %v120
    %v738 = vpop.permute.xlu0 %737
    %739 = vset.pattern.permute.xlu0 22
    %740 = vperm.xlu0 %739, %v121
    %v741 = vpop.permute.xlu0 %740
    %vm742 = vcmp.eq.s32.totalorder %v110, %v732
    %vm743 = vcmp.eq.s32.totalorder %v111, %v732
    %vm744 = vcmp.eq.s32.totalorder %v112, %v735
    %vm745 = vcmp.eq.s32.totalorder %v113, %v735
    %vm746 = vcmp.eq.s32.totalorder %v114, %v738
    %vm747 = vcmp.eq.s32.totalorder %v115, %v738
    %vm748 = vcmp.eq.s32.totalorder %v116, %v741
    %vm749 = vcmp.eq.s32.totalorder %v117, %v741
    %vm750 = vmor %vm722, %vm742
    %vm751 = vmor %vm723, %vm743
    %vm752 = vmor %vm724, %vm744
    %vm753 = vmor %vm725, %vm745
    %vm754 = vmor %vm726, %vm746
    %vm755 = vmor %vm727, %vm747
    %vm756 = vmor %vm728, %vm748
    %vm757 = vmor %vm729, %vm749
    %758 = vset.pattern.permute.xlu0 23
    %759 = vperm.xlu0 %758, %v118
    %v760 = vpop.permute.xlu0 %759
    %761 = vset.pattern.permute.xlu0 23
    %762 = vperm.xlu0 %761, %v119
    %v763 = vpop.permute.xlu0 %762
    %764 = vset.pattern.permute.xlu0 23
    %765 = vperm.xlu0 %764, %v120
    %v766 = vpop.permute.xlu0 %765
    %767 = vset.pattern.permute.xlu0 23
    %768 = vperm.xlu0 %767, %v121
    %v769 = vpop.permute.xlu0 %768
    %vm770 = vcmp.eq.s32.totalorder %v110, %v760
    %vm771 = vcmp.eq.s32.totalorder %v111, %v760
    %vm772 = vcmp.eq.s32.totalorder %v112, %v763
    %vm773 = vcmp.eq.s32.totalorder %v113, %v763
    %vm774 = vcmp.eq.s32.totalorder %v114, %v766
    %vm775 = vcmp.eq.s32.totalorder %v115, %v766
    %vm776 = vcmp.eq.s32.totalorder %v116, %v769
    %vm777 = vcmp.eq.s32.totalorder %v117, %v769
    %vm778 = vmor %vm750, %vm770
    %vm779 = vmor %vm751, %vm771
    %vm780 = vmor %vm752, %vm772
    %vm781 = vmor %vm753, %vm773
    %vm782 = vmor %vm754, %vm774
    %vm783 = vmor %vm755, %vm775
    %vm784 = vmor %vm756, %vm776
    %vm785 = vmor %vm757, %vm777
    %786 = vset.pattern.permute.xlu0 24
    %787 = vperm.xlu0 %786, %v118
    %v788 = vpop.permute.xlu0 %787
    %789 = vset.pattern.permute.xlu0 24
    %790 = vperm.xlu0 %789, %v119
    %v791 = vpop.permute.xlu0 %790
    %792 = vset.pattern.permute.xlu0 24
    %793 = vperm.xlu0 %792, %v120
    %v794 = vpop.permute.xlu0 %793
    %795 = vset.pattern.permute.xlu0 24
    %796 = vperm.xlu0 %795, %v121
    %v797 = vpop.permute.xlu0 %796
    %vm798 = vcmp.eq.s32.totalorder %v110, %v788
    %vm799 = vcmp.eq.s32.totalorder %v111, %v788
    %vm800 = vcmp.eq.s32.totalorder %v112, %v791
    %vm801 = vcmp.eq.s32.totalorder %v113, %v791
    %vm802 = vcmp.eq.s32.totalorder %v114, %v794
    %vm803 = vcmp.eq.s32.totalorder %v115, %v794
    %vm804 = vcmp.eq.s32.totalorder %v116, %v797
    %vm805 = vcmp.eq.s32.totalorder %v117, %v797
    %vm806 = vmor %vm778, %vm798
    %vm807 = vmor %vm779, %vm799
    %vm808 = vmor %vm780, %vm800
    %vm809 = vmor %vm781, %vm801
    %vm810 = vmor %vm782, %vm802
    %vm811 = vmor %vm783, %vm803
    %vm812 = vmor %vm784, %vm804
    %vm813 = vmor %vm785, %vm805
    %814 = vset.pattern.permute.xlu0 25
    %815 = vperm.xlu0 %814, %v118
    %v816 = vpop.permute.xlu0 %815
    %817 = vset.pattern.permute.xlu0 25
    %818 = vperm.xlu0 %817, %v119
    %v819 = vpop.permute.xlu0 %818
    %820 = vset.pattern.permute.xlu0 25
    %821 = vperm.xlu0 %820, %v120
    %v822 = vpop.permute.xlu0 %821
    %823 = vset.pattern.permute.xlu0 25
    %824 = vperm.xlu0 %823, %v121
    %v825 = vpop.permute.xlu0 %824
    %vm826 = vcmp.eq.s32.totalorder %v110, %v816
    %vm827 = vcmp.eq.s32.totalorder %v111, %v816
    %vm828 = vcmp.eq.s32.totalorder %v112, %v819
    %vm829 = vcmp.eq.s32.totalorder %v113, %v819
    %vm830 = vcmp.eq.s32.totalorder %v114, %v822
    %vm831 = vcmp.eq.s32.totalorder %v115, %v822
    %vm832 = vcmp.eq.s32.totalorder %v116, %v825
    %vm833 = vcmp.eq.s32.totalorder %v117, %v825
    %vm834 = vmor %vm806, %vm826
    %vm835 = vmor %vm807, %vm827
    %vm836 = vmor %vm808, %vm828
    %vm837 = vmor %vm809, %vm829
    %vm838 = vmor %vm810, %vm830
    %vm839 = vmor %vm811, %vm831
    %vm840 = vmor %vm812, %vm832
    %vm841 = vmor %vm813, %vm833
    %842 = vset.pattern.permute.xlu0 26
    %843 = vperm.xlu0 %842, %v118
    %v844 = vpop.permute.xlu0 %843
    %845 = vset.pattern.permute.xlu0 26
    %846 = vperm.xlu0 %845, %v119
    %v847 = vpop.permute.xlu0 %846
    %848 = vset.pattern.permute.xlu0 26
    %849 = vperm.xlu0 %848, %v120
    %v850 = vpop.permute.xlu0 %849
    %851 = vset.pattern.permute.xlu0 26
    %852 = vperm.xlu0 %851, %v121
    %v853 = vpop.permute.xlu0 %852
    %vm854 = vcmp.eq.s32.totalorder %v110, %v844
    %vm855 = vcmp.eq.s32.totalorder %v111, %v844
    %vm856 = vcmp.eq.s32.totalorder %v112, %v847
    %vm857 = vcmp.eq.s32.totalorder %v113, %v847
    %vm858 = vcmp.eq.s32.totalorder %v114, %v850
    %vm859 = vcmp.eq.s32.totalorder %v115, %v850
    %vm860 = vcmp.eq.s32.totalorder %v116, %v853
    %vm861 = vcmp.eq.s32.totalorder %v117, %v853
    %vm862 = vmor %vm834, %vm854
    %vm863 = vmor %vm835, %vm855
    %vm864 = vmor %vm836, %vm856
    %vm865 = vmor %vm837, %vm857
    %vm866 = vmor %vm838, %vm858
    %vm867 = vmor %vm839, %vm859
    %vm868 = vmor %vm840, %vm860
    %vm869 = vmor %vm841, %vm861
    %870 = vset.pattern.permute.xlu0 27
    %871 = vperm.xlu0 %870, %v118
    %v872 = vpop.permute.xlu0 %871
    %873 = vset.pattern.permute.xlu0 27
    %874 = vperm.xlu0 %873, %v119
    %v875 = vpop.permute.xlu0 %874
    %876 = vset.pattern.permute.xlu0 27
    %877 = vperm.xlu0 %876, %v120
    %v878 = vpop.permute.xlu0 %877
    %879 = vset.pattern.permute.xlu0 27
    %880 = vperm.xlu0 %879, %v121
    %v881 = vpop.permute.xlu0 %880
    %vm882 = vcmp.eq.s32.totalorder %v110, %v872
    %vm883 = vcmp.eq.s32.totalorder %v111, %v872
    %vm884 = vcmp.eq.s32.totalorder %v112, %v875
    %vm885 = vcmp.eq.s32.totalorder %v113, %v875
    %vm886 = vcmp.eq.s32.totalorder %v114, %v878
    %vm887 = vcmp.eq.s32.totalorder %v115, %v878
    %vm888 = vcmp.eq.s32.totalorder %v116, %v881
    %vm889 = vcmp.eq.s32.totalorder %v117, %v881
    %vm890 = vmor %vm862, %vm882
    %vm891 = vmor %vm863, %vm883
    %vm892 = vmor %vm864, %vm884
    %vm893 = vmor %vm865, %vm885
    %vm894 = vmor %vm866, %vm886
    %vm895 = vmor %vm867, %vm887
    %vm896 = vmor %vm868, %vm888
    %vm897 = vmor %vm869, %vm889
    %898 = vset.pattern.permute.xlu0 28
    %899 = vperm.xlu0 %898, %v118
    %v900 = vpop.permute.xlu0 %899
    %901 = vset.pattern.permute.xlu0 28
    %902 = vperm.xlu0 %901, %v119
    %v903 = vpop.permute.xlu0 %902
    %904 = vset.pattern.permute.xlu0 28
    %905 = vperm.xlu0 %904, %v120
    %v906 = vpop.permute.xlu0 %905
    %907 = vset.pattern.permute.xlu0 28
    %908 = vperm.xlu0 %907, %v121
    %v909 = vpop.permute.xlu0 %908
    %vm910 = vcmp.eq.s32.totalorder %v110, %v900
    %vm911 = vcmp.eq.s32.totalorder %v111, %v900
    %vm912 = vcmp.eq.s32.totalorder %v112, %v903
    %vm913 = vcmp.eq.s32.totalorder %v113, %v903
    %vm914 = vcmp.eq.s32.totalorder %v114, %v906
    %vm915 = vcmp.eq.s32.totalorder %v115, %v906
    %vm916 = vcmp.eq.s32.totalorder %v116, %v909
    %vm917 = vcmp.eq.s32.totalorder %v117, %v909
    %vm918 = vmor %vm890, %vm910
    %vm919 = vmor %vm891, %vm911
    %vm920 = vmor %vm892, %vm912
    %vm921 = vmor %vm893, %vm913
    %vm922 = vmor %vm894, %vm914
    %vm923 = vmor %vm895, %vm915
    %vm924 = vmor %vm896, %vm916
    %vm925 = vmor %vm897, %vm917
    %926 = vset.pattern.permute.xlu0 29
    %927 = vperm.xlu0 %926, %v118
    %v928 = vpop.permute.xlu0 %927
    %929 = vset.pattern.permute.xlu0 29
    %930 = vperm.xlu0 %929, %v119
    %v931 = vpop.permute.xlu0 %930
    %932 = vset.pattern.permute.xlu0 29
    %933 = vperm.xlu0 %932, %v120
    %v934 = vpop.permute.xlu0 %933
    %935 = vset.pattern.permute.xlu0 29
    %936 = vperm.xlu0 %935, %v121
    %v937 = vpop.permute.xlu0 %936
    %vm938 = vcmp.eq.s32.totalorder %v110, %v928
    %vm939 = vcmp.eq.s32.totalorder %v111, %v928
    %vm940 = vcmp.eq.s32.totalorder %v112, %v931
    %vm941 = vcmp.eq.s32.totalorder %v113, %v931
    %vm942 = vcmp.eq.s32.totalorder %v114, %v934
    %vm943 = vcmp.eq.s32.totalorder %v115, %v934
    %vm944 = vcmp.eq.s32.totalorder %v116, %v937
    %vm945 = vcmp.eq.s32.totalorder %v117, %v937
    %vm946 = vmor %vm918, %vm938
    %vm947 = vmor %vm919, %vm939
    %vm948 = vmor %vm920, %vm940
    %vm949 = vmor %vm921, %vm941
    %vm950 = vmor %vm922, %vm942
    %vm951 = vmor %vm923, %vm943
    %vm952 = vmor %vm924, %vm944
    %vm953 = vmor %vm925, %vm945
    %954 = vset.pattern.permute.xlu0 30
    %955 = vperm.xlu0 %954, %v118
    %v956 = vpop.permute.xlu0 %955
    %957 = vset.pattern.permute.xlu0 30
    %958 = vperm.xlu0 %957, %v119
    %v959 = vpop.permute.xlu0 %958
    %960 = vset.pattern.permute.xlu0 30
    %961 = vperm.xlu0 %960, %v120
    %v962 = vpop.permute.xlu0 %961
    %963 = vset.pattern.permute.xlu0 30
    %964 = vperm.xlu0 %963, %v121
    %v965 = vpop.permute.xlu0 %964
    %vm966 = vcmp.eq.s32.totalorder %v110, %v956
    %vm967 = vcmp.eq.s32.totalorder %v111, %v956
    %vm968 = vcmp.eq.s32.totalorder %v112, %v959
    %vm969 = vcmp.eq.s32.totalorder %v113, %v959
    %vm970 = vcmp.eq.s32.totalorder %v114, %v962
    %vm971 = vcmp.eq.s32.totalorder %v115, %v962
    %vm972 = vcmp.eq.s32.totalorder %v116, %v965
    %vm973 = vcmp.eq.s32.totalorder %v117, %v965
    %vm974 = vmor %vm946, %vm966
    %vm975 = vmor %vm947, %vm967
    %vm976 = vmor %vm948, %vm968
    %vm977 = vmor %vm949, %vm969
    %vm978 = vmor %vm950, %vm970
    %vm979 = vmor %vm951, %vm971
    %vm980 = vmor %vm952, %vm972
    %vm981 = vmor %vm953, %vm973
    %982 = vset.pattern.permute.xlu0 31
    %983 = vperm.xlu0 %982, %v118
    %v984 = vpop.permute.xlu0 %983
    %985 = vset.pattern.permute.xlu0 31
    %986 = vperm.xlu0 %985, %v119
    %v987 = vpop.permute.xlu0 %986
    %988 = vset.pattern.permute.xlu0 31
    %989 = vperm.xlu0 %988, %v120
    %v990 = vpop.permute.xlu0 %989
    %991 = vset.pattern.permute.xlu0 31
    %992 = vperm.xlu0 %991, %v121
    %v993 = vpop.permute.xlu0 %992
    %vm994 = vcmp.eq.s32.totalorder %v110, %v984
    %vm995 = vcmp.eq.s32.totalorder %v111, %v984
    %vm996 = vcmp.eq.s32.totalorder %v112, %v987
    %vm997 = vcmp.eq.s32.totalorder %v113, %v987
    %vm998 = vcmp.eq.s32.totalorder %v114, %v990
    %vm999 = vcmp.eq.s32.totalorder %v115, %v990
    %vm1000 = vcmp.eq.s32.totalorder %v116, %v993
    %vm1001 = vcmp.eq.s32.totalorder %v117, %v993
    %vm1002 = vmor %vm974, %vm994
    %vm1003 = vmor %vm975, %vm995
    %vm1004 = vmor %vm976, %vm996
    %vm1005 = vmor %vm977, %vm997
    %vm1006 = vmor %vm978, %vm998
    %vm1007 = vmor %vm979, %vm999
    %vm1008 = vmor %vm980, %vm1000
    %vm1009 = vmor %vm981, %vm1001
    %1010 = vset.pattern.permute.xlu0 32
    %1011 = vperm.xlu0 %1010, %v118
    %v1012 = vpop.permute.xlu0 %1011
    %1013 = vset.pattern.permute.xlu0 32
    %1014 = vperm.xlu0 %1013, %v119
    %v1015 = vpop.permute.xlu0 %1014
    %1016 = vset.pattern.permute.xlu0 32
    %1017 = vperm.xlu0 %1016, %v120
    %v1018 = vpop.permute.xlu0 %1017
    %1019 = vset.pattern.permute.xlu0 32
    %1020 = vperm.xlu0 %1019, %v121
    %v1021 = vpop.permute.xlu0 %1020
    %vm1022 = vcmp.eq.s32.totalorder %v110, %v1012
    %vm1023 = vcmp.eq.s32.totalorder %v111, %v1012
    %vm1024 = vcmp.eq.s32.totalorder %v112, %v1015
    %vm1025 = vcmp.eq.s32.totalorder %v113, %v1015
    %vm1026 = vcmp.eq.s32.totalorder %v114, %v1018
    %vm1027 = vcmp.eq.s32.totalorder %v115, %v1018
    %vm1028 = vcmp.eq.s32.totalorder %v116, %v1021
    %vm1029 = vcmp.eq.s32.totalorder %v117, %v1021
    %vm1030 = vmor %vm1002, %vm1022
    %vm1031 = vmor %vm1003, %vm1023
    %vm1032 = vmor %vm1004, %vm1024
    %vm1033 = vmor %vm1005, %vm1025
    %vm1034 = vmor %vm1006, %vm1026
    %vm1035 = vmor %vm1007, %vm1027
    %vm1036 = vmor %vm1008, %vm1028
    %vm1037 = vmor %vm1009, %vm1029
    %1038 = vset.pattern.permute.xlu0 33
    %1039 = vperm.xlu0 %1038, %v118
    %v1040 = vpop.permute.xlu0 %1039
    %1041 = vset.pattern.permute.xlu0 33
    %1042 = vperm.xlu0 %1041, %v119
    %v1043 = vpop.permute.xlu0 %1042
    %1044 = vset.pattern.permute.xlu0 33
    %1045 = vperm.xlu0 %1044, %v120
    %v1046 = vpop.permute.xlu0 %1045
    %1047 = vset.pattern.permute.xlu0 33
    %1048 = vperm.xlu0 %1047, %v121
    %v1049 = vpop.permute.xlu0 %1048
    %vm1050 = vcmp.eq.s32.totalorder %v110, %v1040
    %vm1051 = vcmp.eq.s32.totalorder %v111, %v1040
    %vm1052 = vcmp.eq.s32.totalorder %v112, %v1043
    %vm1053 = vcmp.eq.s32.totalorder %v113, %v1043
    %vm1054 = vcmp.eq.s32.totalorder %v114, %v1046
    %vm1055 = vcmp.eq.s32.totalorder %v115, %v1046
    %vm1056 = vcmp.eq.s32.totalorder %v116, %v1049
    %vm1057 = vcmp.eq.s32.totalorder %v117, %v1049
    %vm1058 = vmor %vm1030, %vm1050
    %vm1059 = vmor %vm1031, %vm1051
    %vm1060 = vmor %vm1032, %vm1052
    %vm1061 = vmor %vm1033, %vm1053
    %vm1062 = vmor %vm1034, %vm1054
    %vm1063 = vmor %vm1035, %vm1055
    %vm1064 = vmor %vm1036, %vm1056
    %vm1065 = vmor %vm1037, %vm1057
    %1066 = vset.pattern.permute.xlu0 34
    %1067 = vperm.xlu0 %1066, %v118
    %v1068 = vpop.permute.xlu0 %1067
    %1069 = vset.pattern.permute.xlu0 34
    %1070 = vperm.xlu0 %1069, %v119
    %v1071 = vpop.permute.xlu0 %1070
    %1072 = vset.pattern.permute.xlu0 34
    %1073 = vperm.xlu0 %1072, %v120
    %v1074 = vpop.permute.xlu0 %1073
    %1075 = vset.pattern.permute.xlu0 34
    %1076 = vperm.xlu0 %1075, %v121
    %v1077 = vpop.permute.xlu0 %1076
    %vm1078 = vcmp.eq.s32.totalorder %v110, %v1068
    %vm1079 = vcmp.eq.s32.totalorder %v111, %v1068
    %vm1080 = vcmp.eq.s32.totalorder %v112, %v1071
    %vm1081 = vcmp.eq.s32.totalorder %v113, %v1071
    %vm1082 = vcmp.eq.s32.totalorder %v114, %v1074
    %vm1083 = vcmp.eq.s32.totalorder %v115, %v1074
    %vm1084 = vcmp.eq.s32.totalorder %v116, %v1077
    %vm1085 = vcmp.eq.s32.totalorder %v117, %v1077
    %vm1086 = vmor %vm1058, %vm1078
    %vm1087 = vmor %vm1059, %vm1079
    %vm1088 = vmor %vm1060, %vm1080
    %vm1089 = vmor %vm1061, %vm1081
    %vm1090 = vmor %vm1062, %vm1082
    %vm1091 = vmor %vm1063, %vm1083
    %vm1092 = vmor %vm1064, %vm1084
    %vm1093 = vmor %vm1065, %vm1085
    %1094 = vset.pattern.permute.xlu0 35
    %1095 = vperm.xlu0 %1094, %v118
    %v1096 = vpop.permute.xlu0 %1095
    %1097 = vset.pattern.permute.xlu0 35
    %1098 = vperm.xlu0 %1097, %v119
    %v1099 = vpop.permute.xlu0 %1098
    %1100 = vset.pattern.permute.xlu0 35
    %1101 = vperm.xlu0 %1100, %v120
    %v1102 = vpop.permute.xlu0 %1101
    %1103 = vset.pattern.permute.xlu0 35
    %1104 = vperm.xlu0 %1103, %v121
    %v1105 = vpop.permute.xlu0 %1104
    %vm1106 = vcmp.eq.s32.totalorder %v110, %v1096
    %vm1107 = vcmp.eq.s32.totalorder %v111, %v1096
    %vm1108 = vcmp.eq.s32.totalorder %v112, %v1099
    %vm1109 = vcmp.eq.s32.totalorder %v113, %v1099
    %vm1110 = vcmp.eq.s32.totalorder %v114, %v1102
    %vm1111 = vcmp.eq.s32.totalorder %v115, %v1102
    %vm1112 = vcmp.eq.s32.totalorder %v116, %v1105
    %vm1113 = vcmp.eq.s32.totalorder %v117, %v1105
    %vm1114 = vmor %vm1086, %vm1106
    %vm1115 = vmor %vm1087, %vm1107
    %vm1116 = vmor %vm1088, %vm1108
    %vm1117 = vmor %vm1089, %vm1109
    %vm1118 = vmor %vm1090, %vm1110
    %vm1119 = vmor %vm1091, %vm1111
    %vm1120 = vmor %vm1092, %vm1112
    %vm1121 = vmor %vm1093, %vm1113
    %1122 = vset.pattern.permute.xlu0 36
    %1123 = vperm.xlu0 %1122, %v118
    %v1124 = vpop.permute.xlu0 %1123
    %1125 = vset.pattern.permute.xlu0 36
    %1126 = vperm.xlu0 %1125, %v119
    %v1127 = vpop.permute.xlu0 %1126
    %1128 = vset.pattern.permute.xlu0 36
    %1129 = vperm.xlu0 %1128, %v120
    %v1130 = vpop.permute.xlu0 %1129
    %1131 = vset.pattern.permute.xlu0 36
    %1132 = vperm.xlu0 %1131, %v121
    %v1133 = vpop.permute.xlu0 %1132
    %vm1134 = vcmp.eq.s32.totalorder %v110, %v1124
    %vm1135 = vcmp.eq.s32.totalorder %v111, %v1124
    %vm1136 = vcmp.eq.s32.totalorder %v112, %v1127
    %vm1137 = vcmp.eq.s32.totalorder %v113, %v1127
    %vm1138 = vcmp.eq.s32.totalorder %v114, %v1130
    %vm1139 = vcmp.eq.s32.totalorder %v115, %v1130
    %vm1140 = vcmp.eq.s32.totalorder %v116, %v1133
    %vm1141 = vcmp.eq.s32.totalorder %v117, %v1133
    %vm1142 = vmor %vm1114, %vm1134
    %vm1143 = vmor %vm1115, %vm1135
    %vm1144 = vmor %vm1116, %vm1136
    %vm1145 = vmor %vm1117, %vm1137
    %vm1146 = vmor %vm1118, %vm1138
    %vm1147 = vmor %vm1119, %vm1139
    %vm1148 = vmor %vm1120, %vm1140
    %vm1149 = vmor %vm1121, %vm1141
    %1150 = vset.pattern.permute.xlu0 37
    %1151 = vperm.xlu0 %1150, %v118
    %v1152 = vpop.permute.xlu0 %1151
    %1153 = vset.pattern.permute.xlu0 37
    %1154 = vperm.xlu0 %1153, %v119
    %v1155 = vpop.permute.xlu0 %1154
    %1156 = vset.pattern.permute.xlu0 37
    %1157 = vperm.xlu0 %1156, %v120
    %v1158 = vpop.permute.xlu0 %1157
    %1159 = vset.pattern.permute.xlu0 37
    %1160 = vperm.xlu0 %1159, %v121
    %v1161 = vpop.permute.xlu0 %1160
    %vm1162 = vcmp.eq.s32.totalorder %v110, %v1152
    %vm1163 = vcmp.eq.s32.totalorder %v111, %v1152
    %vm1164 = vcmp.eq.s32.totalorder %v112, %v1155
    %vm1165 = vcmp.eq.s32.totalorder %v113, %v1155
    %vm1166 = vcmp.eq.s32.totalorder %v114, %v1158
    %vm1167 = vcmp.eq.s32.totalorder %v115, %v1158
    %vm1168 = vcmp.eq.s32.totalorder %v116, %v1161
    %vm1169 = vcmp.eq.s32.totalorder %v117, %v1161
    %vm1170 = vmor %vm1142, %vm1162
    %vm1171 = vmor %vm1143, %vm1163
    %vm1172 = vmor %vm1144, %vm1164
    %vm1173 = vmor %vm1145, %vm1165
    %vm1174 = vmor %vm1146, %vm1166
    %vm1175 = vmor %vm1147, %vm1167
    %vm1176 = vmor %vm1148, %vm1168
    %vm1177 = vmor %vm1149, %vm1169
    %1178 = vset.pattern.permute.xlu0 38
    %1179 = vperm.xlu0 %1178, %v118
    %v1180 = vpop.permute.xlu0 %1179
    %1181 = vset.pattern.permute.xlu0 38
    %1182 = vperm.xlu0 %1181, %v119
    %v1183 = vpop.permute.xlu0 %1182
    %1184 = vset.pattern.permute.xlu0 38
    %1185 = vperm.xlu0 %1184, %v120
    %v1186 = vpop.permute.xlu0 %1185
    %1187 = vset.pattern.permute.xlu0 38
    %1188 = vperm.xlu0 %1187, %v121
    %v1189 = vpop.permute.xlu0 %1188
    %vm1190 = vcmp.eq.s32.totalorder %v110, %v1180
    %vm1191 = vcmp.eq.s32.totalorder %v111, %v1180
    %vm1192 = vcmp.eq.s32.totalorder %v112, %v1183
    %vm1193 = vcmp.eq.s32.totalorder %v113, %v1183
    %vm1194 = vcmp.eq.s32.totalorder %v114, %v1186
    %vm1195 = vcmp.eq.s32.totalorder %v115, %v1186
    %vm1196 = vcmp.eq.s32.totalorder %v116, %v1189
    %vm1197 = vcmp.eq.s32.totalorder %v117, %v1189
    %vm1198 = vmor %vm1170, %vm1190
    %vm1199 = vmor %vm1171, %vm1191
    %vm1200 = vmor %vm1172, %vm1192
    %vm1201 = vmor %vm1173, %vm1193
    %vm1202 = vmor %vm1174, %vm1194
    %vm1203 = vmor %vm1175, %vm1195
    %vm1204 = vmor %vm1176, %vm1196
    %vm1205 = vmor %vm1177, %vm1197
    %1206 = vset.pattern.permute.xlu0 39
    %1207 = vperm.xlu0 %1206, %v118
    %v1208 = vpop.permute.xlu0 %1207
    %1209 = vset.pattern.permute.xlu0 39
    %1210 = vperm.xlu0 %1209, %v119
    %v1211 = vpop.permute.xlu0 %1210
    %1212 = vset.pattern.permute.xlu0 39
    %1213 = vperm.xlu0 %1212, %v120
    %v1214 = vpop.permute.xlu0 %1213
    %1215 = vset.pattern.permute.xlu0 39
    %1216 = vperm.xlu0 %1215, %v121
    %v1217 = vpop.permute.xlu0 %1216
    %vm1218 = vcmp.eq.s32.totalorder %v110, %v1208
    %vm1219 = vcmp.eq.s32.totalorder %v111, %v1208
    %vm1220 = vcmp.eq.s32.totalorder %v112, %v1211
    %vm1221 = vcmp.eq.s32.totalorder %v113, %v1211
    %vm1222 = vcmp.eq.s32.totalorder %v114, %v1214
    %vm1223 = vcmp.eq.s32.totalorder %v115, %v1214
    %vm1224 = vcmp.eq.s32.totalorder %v116, %v1217
    %vm1225 = vcmp.eq.s32.totalorder %v117, %v1217
    %vm1226 = vmor %vm1198, %vm1218
    %vm1227 = vmor %vm1199, %vm1219
    %vm1228 = vmor %vm1200, %vm1220
    %vm1229 = vmor %vm1201, %vm1221
    %vm1230 = vmor %vm1202, %vm1222
    %vm1231 = vmor %vm1203, %vm1223
    %vm1232 = vmor %vm1204, %vm1224
    %vm1233 = vmor %vm1205, %vm1225
    %1234 = vset.pattern.permute.xlu0 40
    %1235 = vperm.xlu0 %1234, %v118
    %v1236 = vpop.permute.xlu0 %1235
    %1237 = vset.pattern.permute.xlu0 40
    %1238 = vperm.xlu0 %1237, %v119
    %v1239 = vpop.permute.xlu0 %1238
    %1240 = vset.pattern.permute.xlu0 40
    %1241 = vperm.xlu0 %1240, %v120
    %v1242 = vpop.permute.xlu0 %1241
    %1243 = vset.pattern.permute.xlu0 40
    %1244 = vperm.xlu0 %1243, %v121
    %v1245 = vpop.permute.xlu0 %1244
    %vm1246 = vcmp.eq.s32.totalorder %v110, %v1236
    %vm1247 = vcmp.eq.s32.totalorder %v111, %v1236
    %vm1248 = vcmp.eq.s32.totalorder %v112, %v1239
    %vm1249 = vcmp.eq.s32.totalorder %v113, %v1239
    %vm1250 = vcmp.eq.s32.totalorder %v114, %v1242
    %vm1251 = vcmp.eq.s32.totalorder %v115, %v1242
    %vm1252 = vcmp.eq.s32.totalorder %v116, %v1245
    %vm1253 = vcmp.eq.s32.totalorder %v117, %v1245
    %vm1254 = vmor %vm1226, %vm1246
    %vm1255 = vmor %vm1227, %vm1247
    %vm1256 = vmor %vm1228, %vm1248
    %vm1257 = vmor %vm1229, %vm1249
    %vm1258 = vmor %vm1230, %vm1250
    %vm1259 = vmor %vm1231, %vm1251
    %vm1260 = vmor %vm1232, %vm1252
    %vm1261 = vmor %vm1233, %vm1253
    %1262 = vset.pattern.permute.xlu0 41
    %1263 = vperm.xlu0 %1262, %v118
    %v1264 = vpop.permute.xlu0 %1263
    %1265 = vset.pattern.permute.xlu0 41
    %1266 = vperm.xlu0 %1265, %v119
    %v1267 = vpop.permute.xlu0 %1266
    %1268 = vset.pattern.permute.xlu0 41
    %1269 = vperm.xlu0 %1268, %v120
    %v1270 = vpop.permute.xlu0 %1269
    %1271 = vset.pattern.permute.xlu0 41
    %1272 = vperm.xlu0 %1271, %v121
    %v1273 = vpop.permute.xlu0 %1272
    %vm1274 = vcmp.eq.s32.totalorder %v110, %v1264
    %vm1275 = vcmp.eq.s32.totalorder %v111, %v1264
    %vm1276 = vcmp.eq.s32.totalorder %v112, %v1267
    %vm1277 = vcmp.eq.s32.totalorder %v113, %v1267
    %vm1278 = vcmp.eq.s32.totalorder %v114, %v1270
    %vm1279 = vcmp.eq.s32.totalorder %v115, %v1270
    %vm1280 = vcmp.eq.s32.totalorder %v116, %v1273
    %vm1281 = vcmp.eq.s32.totalorder %v117, %v1273
    %vm1282 = vmor %vm1254, %vm1274
    %vm1283 = vmor %vm1255, %vm1275
    %vm1284 = vmor %vm1256, %vm1276
    %vm1285 = vmor %vm1257, %vm1277
    %vm1286 = vmor %vm1258, %vm1278
    %vm1287 = vmor %vm1259, %vm1279
    %vm1288 = vmor %vm1260, %vm1280
    %vm1289 = vmor %vm1261, %vm1281
    %1290 = vset.pattern.permute.xlu0 42
    %1291 = vperm.xlu0 %1290, %v118
    %v1292 = vpop.permute.xlu0 %1291
    %1293 = vset.pattern.permute.xlu0 42
    %1294 = vperm.xlu0 %1293, %v119
    %v1295 = vpop.permute.xlu0 %1294
    %1296 = vset.pattern.permute.xlu0 42
    %1297 = vperm.xlu0 %1296, %v120
    %v1298 = vpop.permute.xlu0 %1297
    %1299 = vset.pattern.permute.xlu0 42
    %1300 = vperm.xlu0 %1299, %v121
    %v1301 = vpop.permute.xlu0 %1300
    %vm1302 = vcmp.eq.s32.totalorder %v110, %v1292
    %vm1303 = vcmp.eq.s32.totalorder %v111, %v1292
    %vm1304 = vcmp.eq.s32.totalorder %v112, %v1295
    %vm1305 = vcmp.eq.s32.totalorder %v113, %v1295
    %vm1306 = vcmp.eq.s32.totalorder %v114, %v1298
    %vm1307 = vcmp.eq.s32.totalorder %v115, %v1298
    %vm1308 = vcmp.eq.s32.totalorder %v116, %v1301
    %vm1309 = vcmp.eq.s32.totalorder %v117, %v1301
    %vm1310 = vmor %vm1282, %vm1302
    %vm1311 = vmor %vm1283, %vm1303
    %vm1312 = vmor %vm1284, %vm1304
    %vm1313 = vmor %vm1285, %vm1305
    %vm1314 = vmor %vm1286, %vm1306
    %vm1315 = vmor %vm1287, %vm1307
    %vm1316 = vmor %vm1288, %vm1308
    %vm1317 = vmor %vm1289, %vm1309
    %1318 = vset.pattern.permute.xlu0 43
    %1319 = vperm.xlu0 %1318, %v118
    %v1320 = vpop.permute.xlu0 %1319
    %1321 = vset.pattern.permute.xlu0 43
    %1322 = vperm.xlu0 %1321, %v119
    %v1323 = vpop.permute.xlu0 %1322
    %1324 = vset.pattern.permute.xlu0 43
    %1325 = vperm.xlu0 %1324, %v120
    %v1326 = vpop.permute.xlu0 %1325
    %1327 = vset.pattern.permute.xlu0 43
    %1328 = vperm.xlu0 %1327, %v121
    %v1329 = vpop.permute.xlu0 %1328
    %vm1330 = vcmp.eq.s32.totalorder %v110, %v1320
    %vm1331 = vcmp.eq.s32.totalorder %v111, %v1320
    %vm1332 = vcmp.eq.s32.totalorder %v112, %v1323
    %vm1333 = vcmp.eq.s32.totalorder %v113, %v1323
    %vm1334 = vcmp.eq.s32.totalorder %v114, %v1326
    %vm1335 = vcmp.eq.s32.totalorder %v115, %v1326
    %vm1336 = vcmp.eq.s32.totalorder %v116, %v1329
    %vm1337 = vcmp.eq.s32.totalorder %v117, %v1329
    %vm1338 = vmor %vm1310, %vm1330
    %vm1339 = vmor %vm1311, %vm1331
    %vm1340 = vmor %vm1312, %vm1332
    %vm1341 = vmor %vm1313, %vm1333
    %vm1342 = vmor %vm1314, %vm1334
    %vm1343 = vmor %vm1315, %vm1335
    %vm1344 = vmor %vm1316, %vm1336
    %vm1345 = vmor %vm1317, %vm1337
    %1346 = vset.pattern.permute.xlu0 44
    %1347 = vperm.xlu0 %1346, %v118
    %v1348 = vpop.permute.xlu0 %1347
    %1349 = vset.pattern.permute.xlu0 44
    %1350 = vperm.xlu0 %1349, %v119
    %v1351 = vpop.permute.xlu0 %1350
    %1352 = vset.pattern.permute.xlu0 44
    %1353 = vperm.xlu0 %1352, %v120
    %v1354 = vpop.permute.xlu0 %1353
    %1355 = vset.pattern.permute.xlu0 44
    %1356 = vperm.xlu0 %1355, %v121
    %v1357 = vpop.permute.xlu0 %1356
    %vm1358 = vcmp.eq.s32.totalorder %v110, %v1348
    %vm1359 = vcmp.eq.s32.totalorder %v111, %v1348
    %vm1360 = vcmp.eq.s32.totalorder %v112, %v1351
    %vm1361 = vcmp.eq.s32.totalorder %v113, %v1351
    %vm1362 = vcmp.eq.s32.totalorder %v114, %v1354
    %vm1363 = vcmp.eq.s32.totalorder %v115, %v1354
    %vm1364 = vcmp.eq.s32.totalorder %v116, %v1357
    %vm1365 = vcmp.eq.s32.totalorder %v117, %v1357
    %vm1366 = vmor %vm1338, %vm1358
    %vm1367 = vmor %vm1339, %vm1359
    %vm1368 = vmor %vm1340, %vm1360
    %vm1369 = vmor %vm1341, %vm1361
    %vm1370 = vmor %vm1342, %vm1362
    %vm1371 = vmor %vm1343, %vm1363
    %vm1372 = vmor %vm1344, %vm1364
    %vm1373 = vmor %vm1345, %vm1365
    %1374 = vset.pattern.permute.xlu0 45
    %1375 = vperm.xlu0 %1374, %v118
    %v1376 = vpop.permute.xlu0 %1375
    %1377 = vset.pattern.permute.xlu0 45
    %1378 = vperm.xlu0 %1377, %v119
    %v1379 = vpop.permute.xlu0 %1378
    %1380 = vset.pattern.permute.xlu0 45
    %1381 = vperm.xlu0 %1380, %v120
    %v1382 = vpop.permute.xlu0 %1381
    %1383 = vset.pattern.permute.xlu0 45
    %1384 = vperm.xlu0 %1383, %v121
    %v1385 = vpop.permute.xlu0 %1384
    %vm1386 = vcmp.eq.s32.totalorder %v110, %v1376
    %vm1387 = vcmp.eq.s32.totalorder %v111, %v1376
    %vm1388 = vcmp.eq.s32.totalorder %v112, %v1379
    %vm1389 = vcmp.eq.s32.totalorder %v113, %v1379
    %vm1390 = vcmp.eq.s32.totalorder %v114, %v1382
    %vm1391 = vcmp.eq.s32.totalorder %v115, %v1382
    %vm1392 = vcmp.eq.s32.totalorder %v116, %v1385
    %vm1393 = vcmp.eq.s32.totalorder %v117, %v1385
    %vm1394 = vmor %vm1366, %vm1386
    %vm1395 = vmor %vm1367, %vm1387
    %vm1396 = vmor %vm1368, %vm1388
    %vm1397 = vmor %vm1369, %vm1389
    %vm1398 = vmor %vm1370, %vm1390
    %vm1399 = vmor %vm1371, %vm1391
    %vm1400 = vmor %vm1372, %vm1392
    %vm1401 = vmor %vm1373, %vm1393
    %1402 = vset.pattern.permute.xlu0 46
    %1403 = vperm.xlu0 %1402, %v118
    %v1404 = vpop.permute.xlu0 %1403
    %1405 = vset.pattern.permute.xlu0 46
    %1406 = vperm.xlu0 %1405, %v119
    %v1407 = vpop.permute.xlu0 %1406
    %1408 = vset.pattern.permute.xlu0 46
    %1409 = vperm.xlu0 %1408, %v120
    %v1410 = vpop.permute.xlu0 %1409
    %1411 = vset.pattern.permute.xlu0 46
    %1412 = vperm.xlu0 %1411, %v121
    %v1413 = vpop.permute.xlu0 %1412
    %vm1414 = vcmp.eq.s32.totalorder %v110, %v1404
    %vm1415 = vcmp.eq.s32.totalorder %v111, %v1404
    %vm1416 = vcmp.eq.s32.totalorder %v112, %v1407
    %vm1417 = vcmp.eq.s32.totalorder %v113, %v1407
    %vm1418 = vcmp.eq.s32.totalorder %v114, %v1410
    %vm1419 = vcmp.eq.s32.totalorder %v115, %v1410
    %vm1420 = vcmp.eq.s32.totalorder %v116, %v1413
    %vm1421 = vcmp.eq.s32.totalorder %v117, %v1413
    %vm1422 = vmor %vm1394, %vm1414
    %vm1423 = vmor %vm1395, %vm1415
    %vm1424 = vmor %vm1396, %vm1416
    %vm1425 = vmor %vm1397, %vm1417
    %vm1426 = vmor %vm1398, %vm1418
    %vm1427 = vmor %vm1399, %vm1419
    %vm1428 = vmor %vm1400, %vm1420
    %vm1429 = vmor %vm1401, %vm1421
    %1430 = vset.pattern.permute.xlu0 47
    %1431 = vperm.xlu0 %1430, %v118
    %v1432 = vpop.permute.xlu0 %1431
    %1433 = vset.pattern.permute.xlu0 47
    %1434 = vperm.xlu0 %1433, %v119
    %v1435 = vpop.permute.xlu0 %1434
    %1436 = vset.pattern.permute.xlu0 47
    %1437 = vperm.xlu0 %1436, %v120
    %v1438 = vpop.permute.xlu0 %1437
    %1439 = vset.pattern.permute.xlu0 47
    %1440 = vperm.xlu0 %1439, %v121
    %v1441 = vpop.permute.xlu0 %1440
    %vm1442 = vcmp.eq.s32.totalorder %v110, %v1432
    %vm1443 = vcmp.eq.s32.totalorder %v111, %v1432
    %vm1444 = vcmp.eq.s32.totalorder %v112, %v1435
    %vm1445 = vcmp.eq.s32.totalorder %v113, %v1435
    %vm1446 = vcmp.eq.s32.totalorder %v114, %v1438
    %vm1447 = vcmp.eq.s32.totalorder %v115, %v1438
    %vm1448 = vcmp.eq.s32.totalorder %v116, %v1441
    %vm1449 = vcmp.eq.s32.totalorder %v117, %v1441
    %vm1450 = vmor %vm1422, %vm1442
    %vm1451 = vmor %vm1423, %vm1443
    %vm1452 = vmor %vm1424, %vm1444
    %vm1453 = vmor %vm1425, %vm1445
    %vm1454 = vmor %vm1426, %vm1446
    %vm1455 = vmor %vm1427, %vm1447
    %vm1456 = vmor %vm1428, %vm1448
    %vm1457 = vmor %vm1429, %vm1449
    %1458 = vset.pattern.permute.xlu0 48
    %1459 = vperm.xlu0 %1458, %v118
    %v1460 = vpop.permute.xlu0 %1459
    %1461 = vset.pattern.permute.xlu0 48
    %1462 = vperm.xlu0 %1461, %v119
    %v1463 = vpop.permute.xlu0 %1462
    %1464 = vset.pattern.permute.xlu0 48
    %1465 = vperm.xlu0 %1464, %v120
    %v1466 = vpop.permute.xlu0 %1465
    %1467 = vset.pattern.permute.xlu0 48
    %1468 = vperm.xlu0 %1467, %v121
    %v1469 = vpop.permute.xlu0 %1468
    %vm1470 = vcmp.eq.s32.totalorder %v110, %v1460
    %vm1471 = vcmp.eq.s32.totalorder %v111, %v1460
    %vm1472 = vcmp.eq.s32.totalorder %v112, %v1463
    %vm1473 = vcmp.eq.s32.totalorder %v113, %v1463
    %vm1474 = vcmp.eq.s32.totalorder %v114, %v1466
    %vm1475 = vcmp.eq.s32.totalorder %v115, %v1466
    %vm1476 = vcmp.eq.s32.totalorder %v116, %v1469
    %vm1477 = vcmp.eq.s32.totalorder %v117, %v1469
    %vm1478 = vmor %vm1450, %vm1470
    %vm1479 = vmor %vm1451, %vm1471
    %vm1480 = vmor %vm1452, %vm1472
    %vm1481 = vmor %vm1453, %vm1473
    %vm1482 = vmor %vm1454, %vm1474
    %vm1483 = vmor %vm1455, %vm1475
    %vm1484 = vmor %vm1456, %vm1476
    %vm1485 = vmor %vm1457, %vm1477
    %1486 = vset.pattern.permute.xlu0 49
    %1487 = vperm.xlu0 %1486, %v118
    %v1488 = vpop.permute.xlu0 %1487
    %1489 = vset.pattern.permute.xlu0 49
    %1490 = vperm.xlu0 %1489, %v119
    %v1491 = vpop.permute.xlu0 %1490
    %1492 = vset.pattern.permute.xlu0 49
    %1493 = vperm.xlu0 %1492, %v120
    %v1494 = vpop.permute.xlu0 %1493
    %1495 = vset.pattern.permute.xlu0 49
    %1496 = vperm.xlu0 %1495, %v121
    %v1497 = vpop.permute.xlu0 %1496
    %vm1498 = vcmp.eq.s32.totalorder %v110, %v1488
    %vm1499 = vcmp.eq.s32.totalorder %v111, %v1488
    %vm1500 = vcmp.eq.s32.totalorder %v112, %v1491
    %vm1501 = vcmp.eq.s32.totalorder %v113, %v1491
    %vm1502 = vcmp.eq.s32.totalorder %v114, %v1494
    %vm1503 = vcmp.eq.s32.totalorder %v115, %v1494
    %vm1504 = vcmp.eq.s32.totalorder %v116, %v1497
    %vm1505 = vcmp.eq.s32.totalorder %v117, %v1497
    %vm1506 = vmor %vm1478, %vm1498
    %vm1507 = vmor %vm1479, %vm1499
    %vm1508 = vmor %vm1480, %vm1500
    %vm1509 = vmor %vm1481, %vm1501
    %vm1510 = vmor %vm1482, %vm1502
    %vm1511 = vmor %vm1483, %vm1503
    %vm1512 = vmor %vm1484, %vm1504
    %vm1513 = vmor %vm1485, %vm1505
    %1514 = vset.pattern.permute.xlu0 50
    %1515 = vperm.xlu0 %1514, %v118
    %v1516 = vpop.permute.xlu0 %1515
    %1517 = vset.pattern.permute.xlu0 50
    %1518 = vperm.xlu0 %1517, %v119
    %v1519 = vpop.permute.xlu0 %1518
    %1520 = vset.pattern.permute.xlu0 50
    %1521 = vperm.xlu0 %1520, %v120
    %v1522 = vpop.permute.xlu0 %1521
    %1523 = vset.pattern.permute.xlu0 50
    %1524 = vperm.xlu0 %1523, %v121
    %v1525 = vpop.permute.xlu0 %1524
    %vm1526 = vcmp.eq.s32.totalorder %v110, %v1516
    %vm1527 = vcmp.eq.s32.totalorder %v111, %v1516
    %vm1528 = vcmp.eq.s32.totalorder %v112, %v1519
    %vm1529 = vcmp.eq.s32.totalorder %v113, %v1519
    %vm1530 = vcmp.eq.s32.totalorder %v114, %v1522
    %vm1531 = vcmp.eq.s32.totalorder %v115, %v1522
    %vm1532 = vcmp.eq.s32.totalorder %v116, %v1525
    %vm1533 = vcmp.eq.s32.totalorder %v117, %v1525
    %vm1534 = vmor %vm1506, %vm1526
    %vm1535 = vmor %vm1507, %vm1527
    %vm1536 = vmor %vm1508, %vm1528
    %vm1537 = vmor %vm1509, %vm1529
    %vm1538 = vmor %vm1510, %vm1530
    %vm1539 = vmor %vm1511, %vm1531
    %vm1540 = vmor %vm1512, %vm1532
    %vm1541 = vmor %vm1513, %vm1533
    %1542 = vset.pattern.permute.xlu0 51
    %1543 = vperm.xlu0 %1542, %v118
    %v1544 = vpop.permute.xlu0 %1543
    %1545 = vset.pattern.permute.xlu0 51
    %1546 = vperm.xlu0 %1545, %v119
    %v1547 = vpop.permute.xlu0 %1546
    %1548 = vset.pattern.permute.xlu0 51
    %1549 = vperm.xlu0 %1548, %v120
    %v1550 = vpop.permute.xlu0 %1549
    %1551 = vset.pattern.permute.xlu0 51
    %1552 = vperm.xlu0 %1551, %v121
    %v1553 = vpop.permute.xlu0 %1552
    %vm1554 = vcmp.eq.s32.totalorder %v110, %v1544
    %vm1555 = vcmp.eq.s32.totalorder %v111, %v1544
    %vm1556 = vcmp.eq.s32.totalorder %v112, %v1547
    %vm1557 = vcmp.eq.s32.totalorder %v113, %v1547
    %vm1558 = vcmp.eq.s32.totalorder %v114, %v1550
    %vm1559 = vcmp.eq.s32.totalorder %v115, %v1550
    %vm1560 = vcmp.eq.s32.totalorder %v116, %v1553
    %vm1561 = vcmp.eq.s32.totalorder %v117, %v1553
    %vm1562 = vmor %vm1534, %vm1554
    %vm1563 = vmor %vm1535, %vm1555
    %vm1564 = vmor %vm1536, %vm1556
    %vm1565 = vmor %vm1537, %vm1557
    %vm1566 = vmor %vm1538, %vm1558
    %vm1567 = vmor %vm1539, %vm1559
    %vm1568 = vmor %vm1540, %vm1560
    %vm1569 = vmor %vm1541, %vm1561
    %1570 = vset.pattern.permute.xlu0 52
    %1571 = vperm.xlu0 %1570, %v118
    %v1572 = vpop.permute.xlu0 %1571
    %1573 = vset.pattern.permute.xlu0 52
    %1574 = vperm.xlu0 %1573, %v119
    %v1575 = vpop.permute.xlu0 %1574
    %1576 = vset.pattern.permute.xlu0 52
    %1577 = vperm.xlu0 %1576, %v120
    %v1578 = vpop.permute.xlu0 %1577
    %1579 = vset.pattern.permute.xlu0 52
    %1580 = vperm.xlu0 %1579, %v121
    %v1581 = vpop.permute.xlu0 %1580
    %vm1582 = vcmp.eq.s32.totalorder %v110, %v1572
    %vm1583 = vcmp.eq.s32.totalorder %v111, %v1572
    %vm1584 = vcmp.eq.s32.totalorder %v112, %v1575
    %vm1585 = vcmp.eq.s32.totalorder %v113, %v1575
    %vm1586 = vcmp.eq.s32.totalorder %v114, %v1578
    %vm1587 = vcmp.eq.s32.totalorder %v115, %v1578
    %vm1588 = vcmp.eq.s32.totalorder %v116, %v1581
    %vm1589 = vcmp.eq.s32.totalorder %v117, %v1581
    %vm1590 = vmor %vm1562, %vm1582
    %vm1591 = vmor %vm1563, %vm1583
    %vm1592 = vmor %vm1564, %vm1584
    %vm1593 = vmor %vm1565, %vm1585
    %vm1594 = vmor %vm1566, %vm1586
    %vm1595 = vmor %vm1567, %vm1587
    %vm1596 = vmor %vm1568, %vm1588
    %vm1597 = vmor %vm1569, %vm1589
    %1598 = vset.pattern.permute.xlu0 53
    %1599 = vperm.xlu0 %1598, %v118
    %v1600 = vpop.permute.xlu0 %1599
    %1601 = vset.pattern.permute.xlu0 53
    %1602 = vperm.xlu0 %1601, %v119
    %v1603 = vpop.permute.xlu0 %1602
    %1604 = vset.pattern.permute.xlu0 53
    %1605 = vperm.xlu0 %1604, %v120
    %v1606 = vpop.permute.xlu0 %1605
    %1607 = vset.pattern.permute.xlu0 53
    %1608 = vperm.xlu0 %1607, %v121
    %v1609 = vpop.permute.xlu0 %1608
    %vm1610 = vcmp.eq.s32.totalorder %v110, %v1600
    %vm1611 = vcmp.eq.s32.totalorder %v111, %v1600
    %vm1612 = vcmp.eq.s32.totalorder %v112, %v1603
    %vm1613 = vcmp.eq.s32.totalorder %v113, %v1603
    %vm1614 = vcmp.eq.s32.totalorder %v114, %v1606
    %vm1615 = vcmp.eq.s32.totalorder %v115, %v1606
    %vm1616 = vcmp.eq.s32.totalorder %v116, %v1609
    %vm1617 = vcmp.eq.s32.totalorder %v117, %v1609
    %vm1618 = vmor %vm1590, %vm1610
    %vm1619 = vmor %vm1591, %vm1611
    %vm1620 = vmor %vm1592, %vm1612
    %vm1621 = vmor %vm1593, %vm1613
    %vm1622 = vmor %vm1594, %vm1614
    %vm1623 = vmor %vm1595, %vm1615
    %vm1624 = vmor %vm1596, %vm1616
    %vm1625 = vmor %vm1597, %vm1617
    %1626 = vset.pattern.permute.xlu0 54
    %1627 = vperm.xlu0 %1626, %v118
    %v1628 = vpop.permute.xlu0 %1627
    %1629 = vset.pattern.permute.xlu0 54
    %1630 = vperm.xlu0 %1629, %v119
    %v1631 = vpop.permute.xlu0 %1630
    %1632 = vset.pattern.permute.xlu0 54
    %1633 = vperm.xlu0 %1632, %v120
    %v1634 = vpop.permute.xlu0 %1633
    %1635 = vset.pattern.permute.xlu0 54
    %1636 = vperm.xlu0 %1635, %v121
    %v1637 = vpop.permute.xlu0 %1636
    %vm1638 = vcmp.eq.s32.totalorder %v110, %v1628
    %vm1639 = vcmp.eq.s32.totalorder %v111, %v1628
    %vm1640 = vcmp.eq.s32.totalorder %v112, %v1631
    %vm1641 = vcmp.eq.s32.totalorder %v113, %v1631
    %vm1642 = vcmp.eq.s32.totalorder %v114, %v1634
    %vm1643 = vcmp.eq.s32.totalorder %v115, %v1634
    %vm1644 = vcmp.eq.s32.totalorder %v116, %v1637
    %vm1645 = vcmp.eq.s32.totalorder %v117, %v1637
    %vm1646 = vmor %vm1618, %vm1638
    %vm1647 = vmor %vm1619, %vm1639
    %vm1648 = vmor %vm1620, %vm1640
    %vm1649 = vmor %vm1621, %vm1641
    %vm1650 = vmor %vm1622, %vm1642
    %vm1651 = vmor %vm1623, %vm1643
    %vm1652 = vmor %vm1624, %vm1644
    %vm1653 = vmor %vm1625, %vm1645
    %1654 = vset.pattern.permute.xlu0 55
    %1655 = vperm.xlu0 %1654, %v118
    %v1656 = vpop.permute.xlu0 %1655
    %1657 = vset.pattern.permute.xlu0 55
    %1658 = vperm.xlu0 %1657, %v119
    %v1659 = vpop.permute.xlu0 %1658
    %1660 = vset.pattern.permute.xlu0 55
    %1661 = vperm.xlu0 %1660, %v120
    %v1662 = vpop.permute.xlu0 %1661
    %1663 = vset.pattern.permute.xlu0 55
    %1664 = vperm.xlu0 %1663, %v121
    %v1665 = vpop.permute.xlu0 %1664
    %vm1666 = vcmp.eq.s32.totalorder %v110, %v1656
    %vm1667 = vcmp.eq.s32.totalorder %v111, %v1656
    %vm1668 = vcmp.eq.s32.totalorder %v112, %v1659
    %vm1669 = vcmp.eq.s32.totalorder %v113, %v1659
    %vm1670 = vcmp.eq.s32.totalorder %v114, %v1662
    %vm1671 = vcmp.eq.s32.totalorder %v115, %v1662
    %vm1672 = vcmp.eq.s32.totalorder %v116, %v1665
    %vm1673 = vcmp.eq.s32.totalorder %v117, %v1665
    %vm1674 = vmor %vm1646, %vm1666
    %vm1675 = vmor %vm1647, %vm1667
    %vm1676 = vmor %vm1648, %vm1668
    %vm1677 = vmor %vm1649, %vm1669
    %vm1678 = vmor %vm1650, %vm1670
    %vm1679 = vmor %vm1651, %vm1671
    %vm1680 = vmor %vm1652, %vm1672
    %vm1681 = vmor %vm1653, %vm1673
    %1682 = vset.pattern.permute.xlu0 56
    %1683 = vperm.xlu0 %1682, %v118
    %v1684 = vpop.permute.xlu0 %1683
    %1685 = vset.pattern.permute.xlu0 56
    %1686 = vperm.xlu0 %1685, %v119
    %v1687 = vpop.permute.xlu0 %1686
    %1688 = vset.pattern.permute.xlu0 56
    %1689 = vperm.xlu0 %1688, %v120
    %v1690 = vpop.permute.xlu0 %1689
    %1691 = vset.pattern.permute.xlu0 56
    %1692 = vperm.xlu0 %1691, %v121
    %v1693 = vpop.permute.xlu0 %1692
    %vm1694 = vcmp.eq.s32.totalorder %v110, %v1684
    %vm1695 = vcmp.eq.s32.totalorder %v111, %v1684
    %vm1696 = vcmp.eq.s32.totalorder %v112, %v1687
    %vm1697 = vcmp.eq.s32.totalorder %v113, %v1687
    %vm1698 = vcmp.eq.s32.totalorder %v114, %v1690
    %vm1699 = vcmp.eq.s32.totalorder %v115, %v1690
    %vm1700 = vcmp.eq.s32.totalorder %v116, %v1693
    %vm1701 = vcmp.eq.s32.totalorder %v117, %v1693
    %vm1702 = vmor %vm1674, %vm1694
    %vm1703 = vmor %vm1675, %vm1695
    %vm1704 = vmor %vm1676, %vm1696
    %vm1705 = vmor %vm1677, %vm1697
    %vm1706 = vmor %vm1678, %vm1698
    %vm1707 = vmor %vm1679, %vm1699
    %vm1708 = vmor %vm1680, %vm1700
    %vm1709 = vmor %vm1681, %vm1701
    %1710 = vset.pattern.permute.xlu0 57
    %1711 = vperm.xlu0 %1710, %v118
    %v1712 = vpop.permute.xlu0 %1711
    %1713 = vset.pattern.permute.xlu0 57
    %1714 = vperm.xlu0 %1713, %v119
    %v1715 = vpop.permute.xlu0 %1714
    %1716 = vset.pattern.permute.xlu0 57
    %1717 = vperm.xlu0 %1716, %v120
    %v1718 = vpop.permute.xlu0 %1717
    %1719 = vset.pattern.permute.xlu0 57
    %1720 = vperm.xlu0 %1719, %v121
    %v1721 = vpop.permute.xlu0 %1720
    %vm1722 = vcmp.eq.s32.totalorder %v110, %v1712
    %vm1723 = vcmp.eq.s32.totalorder %v111, %v1712
    %vm1724 = vcmp.eq.s32.totalorder %v112, %v1715
    %vm1725 = vcmp.eq.s32.totalorder %v113, %v1715
    %vm1726 = vcmp.eq.s32.totalorder %v114, %v1718
    %vm1727 = vcmp.eq.s32.totalorder %v115, %v1718
    %vm1728 = vcmp.eq.s32.totalorder %v116, %v1721
    %vm1729 = vcmp.eq.s32.totalorder %v117, %v1721
    %vm1730 = vmor %vm1702, %vm1722
    %vm1731 = vmor %vm1703, %vm1723
    %vm1732 = vmor %vm1704, %vm1724
    %vm1733 = vmor %vm1705, %vm1725
    %vm1734 = vmor %vm1706, %vm1726
    %vm1735 = vmor %vm1707, %vm1727
    %vm1736 = vmor %vm1708, %vm1728
    %vm1737 = vmor %vm1709, %vm1729
    %1738 = vset.pattern.permute.xlu0 58
    %1739 = vperm.xlu0 %1738, %v118
    %v1740 = vpop.permute.xlu0 %1739
    %1741 = vset.pattern.permute.xlu0 58
    %1742 = vperm.xlu0 %1741, %v119
    %v1743 = vpop.permute.xlu0 %1742
    %1744 = vset.pattern.permute.xlu0 58
    %1745 = vperm.xlu0 %1744, %v120
    %v1746 = vpop.permute.xlu0 %1745
    %1747 = vset.pattern.permute.xlu0 58
    %1748 = vperm.xlu0 %1747, %v121
    %v1749 = vpop.permute.xlu0 %1748
    %vm1750 = vcmp.eq.s32.totalorder %v110, %v1740
    %vm1751 = vcmp.eq.s32.totalorder %v111, %v1740
    %vm1752 = vcmp.eq.s32.totalorder %v112, %v1743
    %vm1753 = vcmp.eq.s32.totalorder %v113, %v1743
    %vm1754 = vcmp.eq.s32.totalorder %v114, %v1746
    %vm1755 = vcmp.eq.s32.totalorder %v115, %v1746
    %vm1756 = vcmp.eq.s32.totalorder %v116, %v1749
    %vm1757 = vcmp.eq.s32.totalorder %v117, %v1749
    %vm1758 = vmor %vm1730, %vm1750
    %vm1759 = vmor %vm1731, %vm1751
    %vm1760 = vmor %vm1732, %vm1752
    %vm1761 = vmor %vm1733, %vm1753
    %vm1762 = vmor %vm1734, %vm1754
    %vm1763 = vmor %vm1735, %vm1755
    %vm1764 = vmor %vm1736, %vm1756
    %vm1765 = vmor %vm1737, %vm1757
    %1766 = vset.pattern.permute.xlu0 59
    %1767 = vperm.xlu0 %1766, %v118
    %v1768 = vpop.permute.xlu0 %1767
    %1769 = vset.pattern.permute.xlu0 59
    %1770 = vperm.xlu0 %1769, %v119
    %v1771 = vpop.permute.xlu0 %1770
    %1772 = vset.pattern.permute.xlu0 59
    %1773 = vperm.xlu0 %1772, %v120
    %v1774 = vpop.permute.xlu0 %1773
    %1775 = vset.pattern.permute.xlu0 59
    %1776 = vperm.xlu0 %1775, %v121
    %v1777 = vpop.permute.xlu0 %1776
    %vm1778 = vcmp.eq.s32.totalorder %v110, %v1768
    %vm1779 = vcmp.eq.s32.totalorder %v111, %v1768
    %vm1780 = vcmp.eq.s32.totalorder %v112, %v1771
    %vm1781 = vcmp.eq.s32.totalorder %v113, %v1771
    %vm1782 = vcmp.eq.s32.totalorder %v114, %v1774
    %vm1783 = vcmp.eq.s32.totalorder %v115, %v1774
    %vm1784 = vcmp.eq.s32.totalorder %v116, %v1777
    %vm1785 = vcmp.eq.s32.totalorder %v117, %v1777
    %vm1786 = vmor %vm1758, %vm1778
    %vm1787 = vmor %vm1759, %vm1779
    %vm1788 = vmor %vm1760, %vm1780
    %vm1789 = vmor %vm1761, %vm1781
    %vm1790 = vmor %vm1762, %vm1782
    %vm1791 = vmor %vm1763, %vm1783
    %vm1792 = vmor %vm1764, %vm1784
    %vm1793 = vmor %vm1765, %vm1785
    %1794 = vset.pattern.permute.xlu0 60
    %1795 = vperm.xlu0 %1794, %v118
    %v1796 = vpop.permute.xlu0 %1795
    %1797 = vset.pattern.permute.xlu0 60
    %1798 = vperm.xlu0 %1797, %v119
    %v1799 = vpop.permute.xlu0 %1798
    %1800 = vset.pattern.permute.xlu0 60
    %1801 = vperm.xlu0 %1800, %v120
    %v1802 = vpop.permute.xlu0 %1801
    %1803 = vset.pattern.permute.xlu0 60
    %1804 = vperm.xlu0 %1803, %v121
    %v1805 = vpop.permute.xlu0 %1804
    %vm1806 = vcmp.eq.s32.totalorder %v110, %v1796
    %vm1807 = vcmp.eq.s32.totalorder %v111, %v1796
    %vm1808 = vcmp.eq.s32.totalorder %v112, %v1799
    %vm1809 = vcmp.eq.s32.totalorder %v113, %v1799
    %vm1810 = vcmp.eq.s32.totalorder %v114, %v1802
    %vm1811 = vcmp.eq.s32.totalorder %v115, %v1802
    %vm1812 = vcmp.eq.s32.totalorder %v116, %v1805
    %vm1813 = vcmp.eq.s32.totalorder %v117, %v1805
    %vm1814 = vmor %vm1786, %vm1806
    %vm1815 = vmor %vm1787, %vm1807
    %vm1816 = vmor %vm1788, %vm1808
    %vm1817 = vmor %vm1789, %vm1809
    %vm1818 = vmor %vm1790, %vm1810
    %vm1819 = vmor %vm1791, %vm1811
    %vm1820 = vmor %vm1792, %vm1812
    %vm1821 = vmor %vm1793, %vm1813
    %1822 = vset.pattern.permute.xlu0 61
    %1823 = vperm.xlu0 %1822, %v118
    %v1824 = vpop.permute.xlu0 %1823
    %1825 = vset.pattern.permute.xlu0 61
    %1826 = vperm.xlu0 %1825, %v119
    %v1827 = vpop.permute.xlu0 %1826
    %1828 = vset.pattern.permute.xlu0 61
    %1829 = vperm.xlu0 %1828, %v120
    %v1830 = vpop.permute.xlu0 %1829
    %1831 = vset.pattern.permute.xlu0 61
    %1832 = vperm.xlu0 %1831, %v121
    %v1833 = vpop.permute.xlu0 %1832
    %vm1834 = vcmp.eq.s32.totalorder %v110, %v1824
    %vm1835 = vcmp.eq.s32.totalorder %v111, %v1824
    %vm1836 = vcmp.eq.s32.totalorder %v112, %v1827
    %vm1837 = vcmp.eq.s32.totalorder %v113, %v1827
    %vm1838 = vcmp.eq.s32.totalorder %v114, %v1830
    %vm1839 = vcmp.eq.s32.totalorder %v115, %v1830
    %vm1840 = vcmp.eq.s32.totalorder %v116, %v1833
    %vm1841 = vcmp.eq.s32.totalorder %v117, %v1833
    %vm1842 = vmor %vm1814, %vm1834
    %vm1843 = vmor %vm1815, %vm1835
    %vm1844 = vmor %vm1816, %vm1836
    %vm1845 = vmor %vm1817, %vm1837
    %vm1846 = vmor %vm1818, %vm1838
    %vm1847 = vmor %vm1819, %vm1839
    %vm1848 = vmor %vm1820, %vm1840
    %vm1849 = vmor %vm1821, %vm1841
    %1850 = vset.pattern.permute.xlu0 62
    %1851 = vperm.xlu0 %1850, %v118
    %v1852 = vpop.permute.xlu0 %1851
    %1853 = vset.pattern.permute.xlu0 62
    %1854 = vperm.xlu0 %1853, %v119
    %v1855 = vpop.permute.xlu0 %1854
    %1856 = vset.pattern.permute.xlu0 62
    %1857 = vperm.xlu0 %1856, %v120
    %v1858 = vpop.permute.xlu0 %1857
    %1859 = vset.pattern.permute.xlu0 62
    %1860 = vperm.xlu0 %1859, %v121
    %v1861 = vpop.permute.xlu0 %1860
    %vm1862 = vcmp.eq.s32.totalorder %v110, %v1852
    %vm1863 = vcmp.eq.s32.totalorder %v111, %v1852
    %vm1864 = vcmp.eq.s32.totalorder %v112, %v1855
    %vm1865 = vcmp.eq.s32.totalorder %v113, %v1855
    %vm1866 = vcmp.eq.s32.totalorder %v114, %v1858
    %vm1867 = vcmp.eq.s32.totalorder %v115, %v1858
    %vm1868 = vcmp.eq.s32.totalorder %v116, %v1861
    %vm1869 = vcmp.eq.s32.totalorder %v117, %v1861
    %vm1870 = vmor %vm1842, %vm1862
    %vm1871 = vmor %vm1843, %vm1863
    %vm1872 = vmor %vm1844, %vm1864
    %vm1873 = vmor %vm1845, %vm1865
    %vm1874 = vmor %vm1846, %vm1866
    %vm1875 = vmor %vm1847, %vm1867
    %vm1876 = vmor %vm1848, %vm1868
    %vm1877 = vmor %vm1849, %vm1869
    %1878 = vset.pattern.permute.xlu0 63
    %1879 = vperm.xlu0 %1878, %v118
    %v1880 = vpop.permute.xlu0 %1879
    %1881 = vset.pattern.permute.xlu0 63
    %1882 = vperm.xlu0 %1881, %v119
    %v1883 = vpop.permute.xlu0 %1882
    %1884 = vset.pattern.permute.xlu0 63
    %1885 = vperm.xlu0 %1884, %v120
    %v1886 = vpop.permute.xlu0 %1885
    %1887 = vset.pattern.permute.xlu0 63
    %1888 = vperm.xlu0 %1887, %v121
    %v1889 = vpop.permute.xlu0 %1888
    %vm1890 = vcmp.eq.s32.totalorder %v110, %v1880
    %vm1891 = vcmp.eq.s32.totalorder %v111, %v1880
    %vm1892 = vcmp.eq.s32.totalorder %v112, %v1883
    %vm1893 = vcmp.eq.s32.totalorder %v113, %v1883
    %vm1894 = vcmp.eq.s32.totalorder %v114, %v1886
    %vm1895 = vcmp.eq.s32.totalorder %v115, %v1886
    %vm1896 = vcmp.eq.s32.totalorder %v116, %v1889
    %vm1897 = vcmp.eq.s32.totalorder %v117, %v1889
    %vm1898 = vmor %vm1870, %vm1890
    %vm1899 = vmor %vm1871, %vm1891
    %vm1900 = vmor %vm1872, %vm1892
    %vm1901 = vmor %vm1873, %vm1893
    %vm1902 = vmor %vm1874, %vm1894
    %vm1903 = vmor %vm1875, %vm1895
    %vm1904 = vmor %vm1876, %vm1896
    %vm1905 = vmor %vm1877, %vm1897
    %1906 = vset.pattern.permute.xlu0 64
    %1907 = vperm.xlu0 %1906, %v118
    %v1908 = vpop.permute.xlu0 %1907
    %1909 = vset.pattern.permute.xlu0 64
    %1910 = vperm.xlu0 %1909, %v119
    %v1911 = vpop.permute.xlu0 %1910
    %1912 = vset.pattern.permute.xlu0 64
    %1913 = vperm.xlu0 %1912, %v120
    %v1914 = vpop.permute.xlu0 %1913
    %1915 = vset.pattern.permute.xlu0 64
    %1916 = vperm.xlu0 %1915, %v121
    %v1917 = vpop.permute.xlu0 %1916
    %vm1918 = vcmp.eq.s32.totalorder %v110, %v1908
    %vm1919 = vcmp.eq.s32.totalorder %v111, %v1908
    %vm1920 = vcmp.eq.s32.totalorder %v112, %v1911
    %vm1921 = vcmp.eq.s32.totalorder %v113, %v1911
    %vm1922 = vcmp.eq.s32.totalorder %v114, %v1914
    %vm1923 = vcmp.eq.s32.totalorder %v115, %v1914
    %vm1924 = vcmp.eq.s32.totalorder %v116, %v1917
    %vm1925 = vcmp.eq.s32.totalorder %v117, %v1917
    %vm1926 = vmor %vm1898, %vm1918
    %vm1927 = vmor %vm1899, %vm1919
    %vm1928 = vmor %vm1900, %vm1920
    %vm1929 = vmor %vm1901, %vm1921
    %vm1930 = vmor %vm1902, %vm1922
    %vm1931 = vmor %vm1903, %vm1923
    %vm1932 = vmor %vm1904, %vm1924
    %vm1933 = vmor %vm1905, %vm1925
    %1934 = vset.pattern.permute.xlu0 65
    %1935 = vperm.xlu0 %1934, %v118
    %v1936 = vpop.permute.xlu0 %1935
    %1937 = vset.pattern.permute.xlu0 65
    %1938 = vperm.xlu0 %1937, %v119
    %v1939 = vpop.permute.xlu0 %1938
    %1940 = vset.pattern.permute.xlu0 65
    %1941 = vperm.xlu0 %1940, %v120
    %v1942 = vpop.permute.xlu0 %1941
    %1943 = vset.pattern.permute.xlu0 65
    %1944 = vperm.xlu0 %1943, %v121
    %v1945 = vpop.permute.xlu0 %1944
    %vm1946 = vcmp.eq.s32.totalorder %v110, %v1936
    %vm1947 = vcmp.eq.s32.totalorder %v111, %v1936
    %vm1948 = vcmp.eq.s32.totalorder %v112, %v1939
    %vm1949 = vcmp.eq.s32.totalorder %v113, %v1939
    %vm1950 = vcmp.eq.s32.totalorder %v114, %v1942
    %vm1951 = vcmp.eq.s32.totalorder %v115, %v1942
    %vm1952 = vcmp.eq.s32.totalorder %v116, %v1945
    %vm1953 = vcmp.eq.s32.totalorder %v117, %v1945
    %vm1954 = vmor %vm1926, %vm1946
    %vm1955 = vmor %vm1927, %vm1947
    %vm1956 = vmor %vm1928, %vm1948
    %vm1957 = vmor %vm1929, %vm1949
    %vm1958 = vmor %vm1930, %vm1950
    %vm1959 = vmor %vm1931, %vm1951
    %vm1960 = vmor %vm1932, %vm1952
    %vm1961 = vmor %vm1933, %vm1953
    %1962 = vset.pattern.permute.xlu0 66
    %1963 = vperm.xlu0 %1962, %v118
    %v1964 = vpop.permute.xlu0 %1963
    %1965 = vset.pattern.permute.xlu0 66
    %1966 = vperm.xlu0 %1965, %v119
    %v1967 = vpop.permute.xlu0 %1966
    %1968 = vset.pattern.permute.xlu0 66
    %1969 = vperm.xlu0 %1968, %v120
    %v1970 = vpop.permute.xlu0 %1969
    %1971 = vset.pattern.permute.xlu0 66
    %1972 = vperm.xlu0 %1971, %v121
    %v1973 = vpop.permute.xlu0 %1972
    %vm1974 = vcmp.eq.s32.totalorder %v110, %v1964
    %vm1975 = vcmp.eq.s32.totalorder %v111, %v1964
    %vm1976 = vcmp.eq.s32.totalorder %v112, %v1967
    %vm1977 = vcmp.eq.s32.totalorder %v113, %v1967
    %vm1978 = vcmp.eq.s32.totalorder %v114, %v1970
    %vm1979 = vcmp.eq.s32.totalorder %v115, %v1970
    %vm1980 = vcmp.eq.s32.totalorder %v116, %v1973
    %vm1981 = vcmp.eq.s32.totalorder %v117, %v1973
    %vm1982 = vmor %vm1954, %vm1974
    %vm1983 = vmor %vm1955, %vm1975
    %vm1984 = vmor %vm1956, %vm1976
    %vm1985 = vmor %vm1957, %vm1977
    %vm1986 = vmor %vm1958, %vm1978
    %vm1987 = vmor %vm1959, %vm1979
    %vm1988 = vmor %vm1960, %vm1980
    %vm1989 = vmor %vm1961, %vm1981
    %1990 = vset.pattern.permute.xlu0 67
    %1991 = vperm.xlu0 %1990, %v118
    %v1992 = vpop.permute.xlu0 %1991
    %1993 = vset.pattern.permute.xlu0 67
    %1994 = vperm.xlu0 %1993, %v119
    %v1995 = vpop.permute.xlu0 %1994
    %1996 = vset.pattern.permute.xlu0 67
    %1997 = vperm.xlu0 %1996, %v120
    %v1998 = vpop.permute.xlu0 %1997
    %1999 = vset.pattern.permute.xlu0 67
    %2000 = vperm.xlu0 %1999, %v121
    %v2001 = vpop.permute.xlu0 %2000
    %vm2002 = vcmp.eq.s32.totalorder %v110, %v1992
    %vm2003 = vcmp.eq.s32.totalorder %v111, %v1992
    %vm2004 = vcmp.eq.s32.totalorder %v112, %v1995
    %vm2005 = vcmp.eq.s32.totalorder %v113, %v1995
    %vm2006 = vcmp.eq.s32.totalorder %v114, %v1998
    %vm2007 = vcmp.eq.s32.totalorder %v115, %v1998
    %vm2008 = vcmp.eq.s32.totalorder %v116, %v2001
    %vm2009 = vcmp.eq.s32.totalorder %v117, %v2001
    %vm2010 = vmor %vm1982, %vm2002
    %vm2011 = vmor %vm1983, %vm2003
    %vm2012 = vmor %vm1984, %vm2004
    %vm2013 = vmor %vm1985, %vm2005
    %vm2014 = vmor %vm1986, %vm2006
    %vm2015 = vmor %vm1987, %vm2007
    %vm2016 = vmor %vm1988, %vm2008
    %vm2017 = vmor %vm1989, %vm2009
    %2018 = vset.pattern.permute.xlu0 68
    %2019 = vperm.xlu0 %2018, %v118
    %v2020 = vpop.permute.xlu0 %2019
    %2021 = vset.pattern.permute.xlu0 68
    %2022 = vperm.xlu0 %2021, %v119
    %v2023 = vpop.permute.xlu0 %2022
    %2024 = vset.pattern.permute.xlu0 68
    %2025 = vperm.xlu0 %2024, %v120
    %v2026 = vpop.permute.xlu0 %2025
    %2027 = vset.pattern.permute.xlu0 68
    %2028 = vperm.xlu0 %2027, %v121
    %v2029 = vpop.permute.xlu0 %2028
    %vm2030 = vcmp.eq.s32.totalorder %v110, %v2020
    %vm2031 = vcmp.eq.s32.totalorder %v111, %v2020
    %vm2032 = vcmp.eq.s32.totalorder %v112, %v2023
    %vm2033 = vcmp.eq.s32.totalorder %v113, %v2023
    %vm2034 = vcmp.eq.s32.totalorder %v114, %v2026
    %vm2035 = vcmp.eq.s32.totalorder %v115, %v2026
    %vm2036 = vcmp.eq.s32.totalorder %v116, %v2029
    %vm2037 = vcmp.eq.s32.totalorder %v117, %v2029
    %vm2038 = vmor %vm2010, %vm2030
    %vm2039 = vmor %vm2011, %vm2031
    %vm2040 = vmor %vm2012, %vm2032
    %vm2041 = vmor %vm2013, %vm2033
    %vm2042 = vmor %vm2014, %vm2034
    %vm2043 = vmor %vm2015, %vm2035
    %vm2044 = vmor %vm2016, %vm2036
    %vm2045 = vmor %vm2017, %vm2037
    %2046 = vset.pattern.permute.xlu0 69
    %2047 = vperm.xlu0 %2046, %v118
    %v2048 = vpop.permute.xlu0 %2047
    %2049 = vset.pattern.permute.xlu0 69
    %2050 = vperm.xlu0 %2049, %v119
    %v2051 = vpop.permute.xlu0 %2050
    %2052 = vset.pattern.permute.xlu0 69
    %2053 = vperm.xlu0 %2052, %v120
    %v2054 = vpop.permute.xlu0 %2053
    %2055 = vset.pattern.permute.xlu0 69
    %2056 = vperm.xlu0 %2055, %v121
    %v2057 = vpop.permute.xlu0 %2056
    %vm2058 = vcmp.eq.s32.totalorder %v110, %v2048
    %vm2059 = vcmp.eq.s32.totalorder %v111, %v2048
    %vm2060 = vcmp.eq.s32.totalorder %v112, %v2051
    %vm2061 = vcmp.eq.s32.totalorder %v113, %v2051
    %vm2062 = vcmp.eq.s32.totalorder %v114, %v2054
    %vm2063 = vcmp.eq.s32.totalorder %v115, %v2054
    %vm2064 = vcmp.eq.s32.totalorder %v116, %v2057
    %vm2065 = vcmp.eq.s32.totalorder %v117, %v2057
    %vm2066 = vmor %vm2038, %vm2058
    %vm2067 = vmor %vm2039, %vm2059
    %vm2068 = vmor %vm2040, %vm2060
    %vm2069 = vmor %vm2041, %vm2061
    %vm2070 = vmor %vm2042, %vm2062
    %vm2071 = vmor %vm2043, %vm2063
    %vm2072 = vmor %vm2044, %vm2064
    %vm2073 = vmor %vm2045, %vm2065
    %2074 = vset.pattern.permute.xlu0 70
    %2075 = vperm.xlu0 %2074, %v118
    %v2076 = vpop.permute.xlu0 %2075
    %2077 = vset.pattern.permute.xlu0 70
    %2078 = vperm.xlu0 %2077, %v119
    %v2079 = vpop.permute.xlu0 %2078
    %2080 = vset.pattern.permute.xlu0 70
    %2081 = vperm.xlu0 %2080, %v120
    %v2082 = vpop.permute.xlu0 %2081
    %2083 = vset.pattern.permute.xlu0 70
    %2084 = vperm.xlu0 %2083, %v121
    %v2085 = vpop.permute.xlu0 %2084
    %vm2086 = vcmp.eq.s32.totalorder %v110, %v2076
    %vm2087 = vcmp.eq.s32.totalorder %v111, %v2076
    %vm2088 = vcmp.eq.s32.totalorder %v112, %v2079
    %vm2089 = vcmp.eq.s32.totalorder %v113, %v2079
    %vm2090 = vcmp.eq.s32.totalorder %v114, %v2082
    %vm2091 = vcmp.eq.s32.totalorder %v115, %v2082
    %vm2092 = vcmp.eq.s32.totalorder %v116, %v2085
    %vm2093 = vcmp.eq.s32.totalorder %v117, %v2085
    %vm2094 = vmor %vm2066, %vm2086
    %vm2095 = vmor %vm2067, %vm2087
    %vm2096 = vmor %vm2068, %vm2088
    %vm2097 = vmor %vm2069, %vm2089
    %vm2098 = vmor %vm2070, %vm2090
    %vm2099 = vmor %vm2071, %vm2091
    %vm2100 = vmor %vm2072, %vm2092
    %vm2101 = vmor %vm2073, %vm2093
    %2102 = vset.pattern.permute.xlu0 71
    %2103 = vperm.xlu0 %2102, %v118
    %v2104 = vpop.permute.xlu0 %2103
    %2105 = vset.pattern.permute.xlu0 71
    %2106 = vperm.xlu0 %2105, %v119
    %v2107 = vpop.permute.xlu0 %2106
    %2108 = vset.pattern.permute.xlu0 71
    %2109 = vperm.xlu0 %2108, %v120
    %v2110 = vpop.permute.xlu0 %2109
    %2111 = vset.pattern.permute.xlu0 71
    %2112 = vperm.xlu0 %2111, %v121
    %v2113 = vpop.permute.xlu0 %2112
    %vm2114 = vcmp.eq.s32.totalorder %v110, %v2104
    %vm2115 = vcmp.eq.s32.totalorder %v111, %v2104
    %vm2116 = vcmp.eq.s32.totalorder %v112, %v2107
    %vm2117 = vcmp.eq.s32.totalorder %v113, %v2107
    %vm2118 = vcmp.eq.s32.totalorder %v114, %v2110
    %vm2119 = vcmp.eq.s32.totalorder %v115, %v2110
    %vm2120 = vcmp.eq.s32.totalorder %v116, %v2113
    %vm2121 = vcmp.eq.s32.totalorder %v117, %v2113
    %vm2122 = vmor %vm2094, %vm2114
    %vm2123 = vmor %vm2095, %vm2115
    %vm2124 = vmor %vm2096, %vm2116
    %vm2125 = vmor %vm2097, %vm2117
    %vm2126 = vmor %vm2098, %vm2118
    %vm2127 = vmor %vm2099, %vm2119
    %vm2128 = vmor %vm2100, %vm2120
    %vm2129 = vmor %vm2101, %vm2121
    %2130 = vset.pattern.permute.xlu0 72
    %2131 = vperm.xlu0 %2130, %v118
    %v2132 = vpop.permute.xlu0 %2131
    %2133 = vset.pattern.permute.xlu0 72
    %2134 = vperm.xlu0 %2133, %v119
    %v2135 = vpop.permute.xlu0 %2134
    %2136 = vset.pattern.permute.xlu0 72
    %2137 = vperm.xlu0 %2136, %v120
    %v2138 = vpop.permute.xlu0 %2137
    %2139 = vset.pattern.permute.xlu0 72
    %2140 = vperm.xlu0 %2139, %v121
    %v2141 = vpop.permute.xlu0 %2140
    %vm2142 = vcmp.eq.s32.totalorder %v110, %v2132
    %vm2143 = vcmp.eq.s32.totalorder %v111, %v2132
    %vm2144 = vcmp.eq.s32.totalorder %v112, %v2135
    %vm2145 = vcmp.eq.s32.totalorder %v113, %v2135
    %vm2146 = vcmp.eq.s32.totalorder %v114, %v2138
    %vm2147 = vcmp.eq.s32.totalorder %v115, %v2138
    %vm2148 = vcmp.eq.s32.totalorder %v116, %v2141
    %vm2149 = vcmp.eq.s32.totalorder %v117, %v2141
    %vm2150 = vmor %vm2122, %vm2142
    %vm2151 = vmor %vm2123, %vm2143
    %vm2152 = vmor %vm2124, %vm2144
    %vm2153 = vmor %vm2125, %vm2145
    %vm2154 = vmor %vm2126, %vm2146
    %vm2155 = vmor %vm2127, %vm2147
    %vm2156 = vmor %vm2128, %vm2148
    %vm2157 = vmor %vm2129, %vm2149
    %2158 = vset.pattern.permute.xlu0 73
    %2159 = vperm.xlu0 %2158, %v118
    %v2160 = vpop.permute.xlu0 %2159
    %2161 = vset.pattern.permute.xlu0 73
    %2162 = vperm.xlu0 %2161, %v119
    %v2163 = vpop.permute.xlu0 %2162
    %2164 = vset.pattern.permute.xlu0 73
    %2165 = vperm.xlu0 %2164, %v120
    %v2166 = vpop.permute.xlu0 %2165
    %2167 = vset.pattern.permute.xlu0 73
    %2168 = vperm.xlu0 %2167, %v121
    %v2169 = vpop.permute.xlu0 %2168
    %vm2170 = vcmp.eq.s32.totalorder %v110, %v2160
    %vm2171 = vcmp.eq.s32.totalorder %v111, %v2160
    %vm2172 = vcmp.eq.s32.totalorder %v112, %v2163
    %vm2173 = vcmp.eq.s32.totalorder %v113, %v2163
    %vm2174 = vcmp.eq.s32.totalorder %v114, %v2166
    %vm2175 = vcmp.eq.s32.totalorder %v115, %v2166
    %vm2176 = vcmp.eq.s32.totalorder %v116, %v2169
    %vm2177 = vcmp.eq.s32.totalorder %v117, %v2169
    %vm2178 = vmor %vm2150, %vm2170
    %vm2179 = vmor %vm2151, %vm2171
    %vm2180 = vmor %vm2152, %vm2172
    %vm2181 = vmor %vm2153, %vm2173
    %vm2182 = vmor %vm2154, %vm2174
    %vm2183 = vmor %vm2155, %vm2175
    %vm2184 = vmor %vm2156, %vm2176
    %vm2185 = vmor %vm2157, %vm2177
    %2186 = vset.pattern.permute.xlu0 74
    %2187 = vperm.xlu0 %2186, %v118
    %v2188 = vpop.permute.xlu0 %2187
    %2189 = vset.pattern.permute.xlu0 74
    %2190 = vperm.xlu0 %2189, %v119
    %v2191 = vpop.permute.xlu0 %2190
    %2192 = vset.pattern.permute.xlu0 74
    %2193 = vperm.xlu0 %2192, %v120
    %v2194 = vpop.permute.xlu0 %2193
    %2195 = vset.pattern.permute.xlu0 74
    %2196 = vperm.xlu0 %2195, %v121
    %v2197 = vpop.permute.xlu0 %2196
    %vm2198 = vcmp.eq.s32.totalorder %v110, %v2188
    %vm2199 = vcmp.eq.s32.totalorder %v111, %v2188
    %vm2200 = vcmp.eq.s32.totalorder %v112, %v2191
    %vm2201 = vcmp.eq.s32.totalorder %v113, %v2191
    %vm2202 = vcmp.eq.s32.totalorder %v114, %v2194
    %vm2203 = vcmp.eq.s32.totalorder %v115, %v2194
    %vm2204 = vcmp.eq.s32.totalorder %v116, %v2197
    %vm2205 = vcmp.eq.s32.totalorder %v117, %v2197
    %vm2206 = vmor %vm2178, %vm2198
    %vm2207 = vmor %vm2179, %vm2199
    %vm2208 = vmor %vm2180, %vm2200
    %vm2209 = vmor %vm2181, %vm2201
    %vm2210 = vmor %vm2182, %vm2202
    %vm2211 = vmor %vm2183, %vm2203
    %vm2212 = vmor %vm2184, %vm2204
    %vm2213 = vmor %vm2185, %vm2205
    %2214 = vset.pattern.permute.xlu0 75
    %2215 = vperm.xlu0 %2214, %v118
    %v2216 = vpop.permute.xlu0 %2215
    %2217 = vset.pattern.permute.xlu0 75
    %2218 = vperm.xlu0 %2217, %v119
    %v2219 = vpop.permute.xlu0 %2218
    %2220 = vset.pattern.permute.xlu0 75
    %2221 = vperm.xlu0 %2220, %v120
    %v2222 = vpop.permute.xlu0 %2221
    %2223 = vset.pattern.permute.xlu0 75
    %2224 = vperm.xlu0 %2223, %v121
    %v2225 = vpop.permute.xlu0 %2224
    %vm2226 = vcmp.eq.s32.totalorder %v110, %v2216
    %vm2227 = vcmp.eq.s32.totalorder %v111, %v2216
    %vm2228 = vcmp.eq.s32.totalorder %v112, %v2219
    %vm2229 = vcmp.eq.s32.totalorder %v113, %v2219
    %vm2230 = vcmp.eq.s32.totalorder %v114, %v2222
    %vm2231 = vcmp.eq.s32.totalorder %v115, %v2222
    %vm2232 = vcmp.eq.s32.totalorder %v116, %v2225
    %vm2233 = vcmp.eq.s32.totalorder %v117, %v2225
    %vm2234 = vmor %vm2206, %vm2226
    %vm2235 = vmor %vm2207, %vm2227
    %vm2236 = vmor %vm2208, %vm2228
    %vm2237 = vmor %vm2209, %vm2229
    %vm2238 = vmor %vm2210, %vm2230
    %vm2239 = vmor %vm2211, %vm2231
    %vm2240 = vmor %vm2212, %vm2232
    %vm2241 = vmor %vm2213, %vm2233
    %2242 = vset.pattern.permute.xlu0 76
    %2243 = vperm.xlu0 %2242, %v118
    %v2244 = vpop.permute.xlu0 %2243
    %2245 = vset.pattern.permute.xlu0 76
    %2246 = vperm.xlu0 %2245, %v119
    %v2247 = vpop.permute.xlu0 %2246
    %2248 = vset.pattern.permute.xlu0 76
    %2249 = vperm.xlu0 %2248, %v120
    %v2250 = vpop.permute.xlu0 %2249
    %2251 = vset.pattern.permute.xlu0 76
    %2252 = vperm.xlu0 %2251, %v121
    %v2253 = vpop.permute.xlu0 %2252
    %vm2254 = vcmp.eq.s32.totalorder %v110, %v2244
    %vm2255 = vcmp.eq.s32.totalorder %v111, %v2244
    %vm2256 = vcmp.eq.s32.totalorder %v112, %v2247
    %vm2257 = vcmp.eq.s32.totalorder %v113, %v2247
    %vm2258 = vcmp.eq.s32.totalorder %v114, %v2250
    %vm2259 = vcmp.eq.s32.totalorder %v115, %v2250
    %vm2260 = vcmp.eq.s32.totalorder %v116, %v2253
    %vm2261 = vcmp.eq.s32.totalorder %v117, %v2253
    %vm2262 = vmor %vm2234, %vm2254
    %vm2263 = vmor %vm2235, %vm2255
    %vm2264 = vmor %vm2236, %vm2256
    %vm2265 = vmor %vm2237, %vm2257
    %vm2266 = vmor %vm2238, %vm2258
    %vm2267 = vmor %vm2239, %vm2259
    %vm2268 = vmor %vm2240, %vm2260
    %vm2269 = vmor %vm2241, %vm2261
    %2270 = vset.pattern.permute.xlu0 77
    %2271 = vperm.xlu0 %2270, %v118
    %v2272 = vpop.permute.xlu0 %2271
    %2273 = vset.pattern.permute.xlu0 77
    %2274 = vperm.xlu0 %2273, %v119
    %v2275 = vpop.permute.xlu0 %2274
    %2276 = vset.pattern.permute.xlu0 77
    %2277 = vperm.xlu0 %2276, %v120
    %v2278 = vpop.permute.xlu0 %2277
    %2279 = vset.pattern.permute.xlu0 77
    %2280 = vperm.xlu0 %2279, %v121
    %v2281 = vpop.permute.xlu0 %2280
    %vm2282 = vcmp.eq.s32.totalorder %v110, %v2272
    %vm2283 = vcmp.eq.s32.totalorder %v111, %v2272
    %vm2284 = vcmp.eq.s32.totalorder %v112, %v2275
    %vm2285 = vcmp.eq.s32.totalorder %v113, %v2275
    %vm2286 = vcmp.eq.s32.totalorder %v114, %v2278
    %vm2287 = vcmp.eq.s32.totalorder %v115, %v2278
    %vm2288 = vcmp.eq.s32.totalorder %v116, %v2281
    %vm2289 = vcmp.eq.s32.totalorder %v117, %v2281
    %vm2290 = vmor %vm2262, %vm2282
    %vm2291 = vmor %vm2263, %vm2283
    %vm2292 = vmor %vm2264, %vm2284
    %vm2293 = vmor %vm2265, %vm2285
    %vm2294 = vmor %vm2266, %vm2286
    %vm2295 = vmor %vm2267, %vm2287
    %vm2296 = vmor %vm2268, %vm2288
    %vm2297 = vmor %vm2269, %vm2289
    %2298 = vset.pattern.permute.xlu0 78
    %2299 = vperm.xlu0 %2298, %v118
    %v2300 = vpop.permute.xlu0 %2299
    %2301 = vset.pattern.permute.xlu0 78
    %2302 = vperm.xlu0 %2301, %v119
    %v2303 = vpop.permute.xlu0 %2302
    %2304 = vset.pattern.permute.xlu0 78
    %2305 = vperm.xlu0 %2304, %v120
    %v2306 = vpop.permute.xlu0 %2305
    %2307 = vset.pattern.permute.xlu0 78
    %2308 = vperm.xlu0 %2307, %v121
    %v2309 = vpop.permute.xlu0 %2308
    %vm2310 = vcmp.eq.s32.totalorder %v110, %v2300
    %vm2311 = vcmp.eq.s32.totalorder %v111, %v2300
    %vm2312 = vcmp.eq.s32.totalorder %v112, %v2303
    %vm2313 = vcmp.eq.s32.totalorder %v113, %v2303
    %vm2314 = vcmp.eq.s32.totalorder %v114, %v2306
    %vm2315 = vcmp.eq.s32.totalorder %v115, %v2306
    %vm2316 = vcmp.eq.s32.totalorder %v116, %v2309
    %vm2317 = vcmp.eq.s32.totalorder %v117, %v2309
    %vm2318 = vmor %vm2290, %vm2310
    %vm2319 = vmor %vm2291, %vm2311
    %vm2320 = vmor %vm2292, %vm2312
    %vm2321 = vmor %vm2293, %vm2313
    %vm2322 = vmor %vm2294, %vm2314
    %vm2323 = vmor %vm2295, %vm2315
    %vm2324 = vmor %vm2296, %vm2316
    %vm2325 = vmor %vm2297, %vm2317
    %2326 = vset.pattern.permute.xlu0 79
    %2327 = vperm.xlu0 %2326, %v118
    %v2328 = vpop.permute.xlu0 %2327
    %2329 = vset.pattern.permute.xlu0 79
    %2330 = vperm.xlu0 %2329, %v119
    %v2331 = vpop.permute.xlu0 %2330
    %2332 = vset.pattern.permute.xlu0 79
    %2333 = vperm.xlu0 %2332, %v120
    %v2334 = vpop.permute.xlu0 %2333
    %2335 = vset.pattern.permute.xlu0 79
    %2336 = vperm.xlu0 %2335, %v121
    %v2337 = vpop.permute.xlu0 %2336
    %vm2338 = vcmp.eq.s32.totalorder %v110, %v2328
    %vm2339 = vcmp.eq.s32.totalorder %v111, %v2328
    %vm2340 = vcmp.eq.s32.totalorder %v112, %v2331
    %vm2341 = vcmp.eq.s32.totalorder %v113, %v2331
    %vm2342 = vcmp.eq.s32.totalorder %v114, %v2334
    %vm2343 = vcmp.eq.s32.totalorder %v115, %v2334
    %vm2344 = vcmp.eq.s32.totalorder %v116, %v2337
    %vm2345 = vcmp.eq.s32.totalorder %v117, %v2337
    %vm2346 = vmor %vm2318, %vm2338
    %vm2347 = vmor %vm2319, %vm2339
    %vm2348 = vmor %vm2320, %vm2340
    %vm2349 = vmor %vm2321, %vm2341
    %vm2350 = vmor %vm2322, %vm2342
    %vm2351 = vmor %vm2323, %vm2343
    %vm2352 = vmor %vm2324, %vm2344
    %vm2353 = vmor %vm2325, %vm2345
    %2354 = vset.pattern.permute.xlu0 80
    %2355 = vperm.xlu0 %2354, %v118
    %v2356 = vpop.permute.xlu0 %2355
    %2357 = vset.pattern.permute.xlu0 80
    %2358 = vperm.xlu0 %2357, %v119
    %v2359 = vpop.permute.xlu0 %2358
    %2360 = vset.pattern.permute.xlu0 80
    %2361 = vperm.xlu0 %2360, %v120
    %v2362 = vpop.permute.xlu0 %2361
    %2363 = vset.pattern.permute.xlu0 80
    %2364 = vperm.xlu0 %2363, %v121
    %v2365 = vpop.permute.xlu0 %2364
    %vm2366 = vcmp.eq.s32.totalorder %v110, %v2356
    %vm2367 = vcmp.eq.s32.totalorder %v111, %v2356
    %vm2368 = vcmp.eq.s32.totalorder %v112, %v2359
    %vm2369 = vcmp.eq.s32.totalorder %v113, %v2359
    %vm2370 = vcmp.eq.s32.totalorder %v114, %v2362
    %vm2371 = vcmp.eq.s32.totalorder %v115, %v2362
    %vm2372 = vcmp.eq.s32.totalorder %v116, %v2365
    %vm2373 = vcmp.eq.s32.totalorder %v117, %v2365
    %vm2374 = vmor %vm2346, %vm2366
    %vm2375 = vmor %vm2347, %vm2367
    %vm2376 = vmor %vm2348, %vm2368
    %vm2377 = vmor %vm2349, %vm2369
    %vm2378 = vmor %vm2350, %vm2370
    %vm2379 = vmor %vm2351, %vm2371
    %vm2380 = vmor %vm2352, %vm2372
    %vm2381 = vmor %vm2353, %vm2373
    %2382 = vset.pattern.permute.xlu0 81
    %2383 = vperm.xlu0 %2382, %v118
    %v2384 = vpop.permute.xlu0 %2383
    %2385 = vset.pattern.permute.xlu0 81
    %2386 = vperm.xlu0 %2385, %v119
    %v2387 = vpop.permute.xlu0 %2386
    %2388 = vset.pattern.permute.xlu0 81
    %2389 = vperm.xlu0 %2388, %v120
    %v2390 = vpop.permute.xlu0 %2389
    %2391 = vset.pattern.permute.xlu0 81
    %2392 = vperm.xlu0 %2391, %v121
    %v2393 = vpop.permute.xlu0 %2392
    %vm2394 = vcmp.eq.s32.totalorder %v110, %v2384
    %vm2395 = vcmp.eq.s32.totalorder %v111, %v2384
    %vm2396 = vcmp.eq.s32.totalorder %v112, %v2387
    %vm2397 = vcmp.eq.s32.totalorder %v113, %v2387
    %vm2398 = vcmp.eq.s32.totalorder %v114, %v2390
    %vm2399 = vcmp.eq.s32.totalorder %v115, %v2390
    %vm2400 = vcmp.eq.s32.totalorder %v116, %v2393
    %vm2401 = vcmp.eq.s32.totalorder %v117, %v2393
    %vm2402 = vmor %vm2374, %vm2394
    %vm2403 = vmor %vm2375, %vm2395
    %vm2404 = vmor %vm2376, %vm2396
    %vm2405 = vmor %vm2377, %vm2397
    %vm2406 = vmor %vm2378, %vm2398
    %vm2407 = vmor %vm2379, %vm2399
    %vm2408 = vmor %vm2380, %vm2400
    %vm2409 = vmor %vm2381, %vm2401
    %2410 = vset.pattern.permute.xlu0 82
    %2411 = vperm.xlu0 %2410, %v118
    %v2412 = vpop.permute.xlu0 %2411
    %2413 = vset.pattern.permute.xlu0 82
    %2414 = vperm.xlu0 %2413, %v119
    %v2415 = vpop.permute.xlu0 %2414
    %2416 = vset.pattern.permute.xlu0 82
    %2417 = vperm.xlu0 %2416, %v120
    %v2418 = vpop.permute.xlu0 %2417
    %2419 = vset.pattern.permute.xlu0 82
    %2420 = vperm.xlu0 %2419, %v121
    %v2421 = vpop.permute.xlu0 %2420
    %vm2422 = vcmp.eq.s32.totalorder %v110, %v2412
    %vm2423 = vcmp.eq.s32.totalorder %v111, %v2412
    %vm2424 = vcmp.eq.s32.totalorder %v112, %v2415
    %vm2425 = vcmp.eq.s32.totalorder %v113, %v2415
    %vm2426 = vcmp.eq.s32.totalorder %v114, %v2418
    %vm2427 = vcmp.eq.s32.totalorder %v115, %v2418
    %vm2428 = vcmp.eq.s32.totalorder %v116, %v2421
    %vm2429 = vcmp.eq.s32.totalorder %v117, %v2421
    %vm2430 = vmor %vm2402, %vm2422
    %vm2431 = vmor %vm2403, %vm2423
    %vm2432 = vmor %vm2404, %vm2424
    %vm2433 = vmor %vm2405, %vm2425
    %vm2434 = vmor %vm2406, %vm2426
    %vm2435 = vmor %vm2407, %vm2427
    %vm2436 = vmor %vm2408, %vm2428
    %vm2437 = vmor %vm2409, %vm2429
    %2438 = vset.pattern.permute.xlu0 83
    %2439 = vperm.xlu0 %2438, %v118
    %v2440 = vpop.permute.xlu0 %2439
    %2441 = vset.pattern.permute.xlu0 83
    %2442 = vperm.xlu0 %2441, %v119
    %v2443 = vpop.permute.xlu0 %2442
    %2444 = vset.pattern.permute.xlu0 83
    %2445 = vperm.xlu0 %2444, %v120
    %v2446 = vpop.permute.xlu0 %2445
    %2447 = vset.pattern.permute.xlu0 83
    %2448 = vperm.xlu0 %2447, %v121
    %v2449 = vpop.permute.xlu0 %2448
    %vm2450 = vcmp.eq.s32.totalorder %v110, %v2440
    %vm2451 = vcmp.eq.s32.totalorder %v111, %v2440
    %vm2452 = vcmp.eq.s32.totalorder %v112, %v2443
    %vm2453 = vcmp.eq.s32.totalorder %v113, %v2443
    %vm2454 = vcmp.eq.s32.totalorder %v114, %v2446
    %vm2455 = vcmp.eq.s32.totalorder %v115, %v2446
    %vm2456 = vcmp.eq.s32.totalorder %v116, %v2449
    %vm2457 = vcmp.eq.s32.totalorder %v117, %v2449
    %vm2458 = vmor %vm2430, %vm2450
    %vm2459 = vmor %vm2431, %vm2451
    %vm2460 = vmor %vm2432, %vm2452
    %vm2461 = vmor %vm2433, %vm2453
    %vm2462 = vmor %vm2434, %vm2454
    %vm2463 = vmor %vm2435, %vm2455
    %vm2464 = vmor %vm2436, %vm2456
    %vm2465 = vmor %vm2437, %vm2457
    %2466 = vset.pattern.permute.xlu0 84
    %2467 = vperm.xlu0 %2466, %v118
    %v2468 = vpop.permute.xlu0 %2467
    %2469 = vset.pattern.permute.xlu0 84
    %2470 = vperm.xlu0 %2469, %v119
    %v2471 = vpop.permute.xlu0 %2470
    %2472 = vset.pattern.permute.xlu0 84
    %2473 = vperm.xlu0 %2472, %v120
    %v2474 = vpop.permute.xlu0 %2473
    %2475 = vset.pattern.permute.xlu0 84
    %2476 = vperm.xlu0 %2475, %v121
    %v2477 = vpop.permute.xlu0 %2476
    %vm2478 = vcmp.eq.s32.totalorder %v110, %v2468
    %vm2479 = vcmp.eq.s32.totalorder %v111, %v2468
    %vm2480 = vcmp.eq.s32.totalorder %v112, %v2471
    %vm2481 = vcmp.eq.s32.totalorder %v113, %v2471
    %vm2482 = vcmp.eq.s32.totalorder %v114, %v2474
    %vm2483 = vcmp.eq.s32.totalorder %v115, %v2474
    %vm2484 = vcmp.eq.s32.totalorder %v116, %v2477
    %vm2485 = vcmp.eq.s32.totalorder %v117, %v2477
    %vm2486 = vmor %vm2458, %vm2478
    %vm2487 = vmor %vm2459, %vm2479
    %vm2488 = vmor %vm2460, %vm2480
    %vm2489 = vmor %vm2461, %vm2481
    %vm2490 = vmor %vm2462, %vm2482
    %vm2491 = vmor %vm2463, %vm2483
    %vm2492 = vmor %vm2464, %vm2484
    %vm2493 = vmor %vm2465, %vm2485
    %2494 = vset.pattern.permute.xlu0 85
    %2495 = vperm.xlu0 %2494, %v118
    %v2496 = vpop.permute.xlu0 %2495
    %2497 = vset.pattern.permute.xlu0 85
    %2498 = vperm.xlu0 %2497, %v119
    %v2499 = vpop.permute.xlu0 %2498
    %2500 = vset.pattern.permute.xlu0 85
    %2501 = vperm.xlu0 %2500, %v120
    %v2502 = vpop.permute.xlu0 %2501
    %2503 = vset.pattern.permute.xlu0 85
    %2504 = vperm.xlu0 %2503, %v121
    %v2505 = vpop.permute.xlu0 %2504
    %vm2506 = vcmp.eq.s32.totalorder %v110, %v2496
    %vm2507 = vcmp.eq.s32.totalorder %v111, %v2496
    %vm2508 = vcmp.eq.s32.totalorder %v112, %v2499
    %vm2509 = vcmp.eq.s32.totalorder %v113, %v2499
    %vm2510 = vcmp.eq.s32.totalorder %v114, %v2502
    %vm2511 = vcmp.eq.s32.totalorder %v115, %v2502
    %vm2512 = vcmp.eq.s32.totalorder %v116, %v2505
    %vm2513 = vcmp.eq.s32.totalorder %v117, %v2505
    %vm2514 = vmor %vm2486, %vm2506
    %vm2515 = vmor %vm2487, %vm2507
    %vm2516 = vmor %vm2488, %vm2508
    %vm2517 = vmor %vm2489, %vm2509
    %vm2518 = vmor %vm2490, %vm2510
    %vm2519 = vmor %vm2491, %vm2511
    %vm2520 = vmor %vm2492, %vm2512
    %vm2521 = vmor %vm2493, %vm2513
    %2522 = vset.pattern.permute.xlu0 86
    %2523 = vperm.xlu0 %2522, %v118
    %v2524 = vpop.permute.xlu0 %2523
    %2525 = vset.pattern.permute.xlu0 86
    %2526 = vperm.xlu0 %2525, %v119
    %v2527 = vpop.permute.xlu0 %2526
    %2528 = vset.pattern.permute.xlu0 86
    %2529 = vperm.xlu0 %2528, %v120
    %v2530 = vpop.permute.xlu0 %2529
    %2531 = vset.pattern.permute.xlu0 86
    %2532 = vperm.xlu0 %2531, %v121
    %v2533 = vpop.permute.xlu0 %2532
    %vm2534 = vcmp.eq.s32.totalorder %v110, %v2524
    %vm2535 = vcmp.eq.s32.totalorder %v111, %v2524
    %vm2536 = vcmp.eq.s32.totalorder %v112, %v2527
    %vm2537 = vcmp.eq.s32.totalorder %v113, %v2527
    %vm2538 = vcmp.eq.s32.totalorder %v114, %v2530
    %vm2539 = vcmp.eq.s32.totalorder %v115, %v2530
    %vm2540 = vcmp.eq.s32.totalorder %v116, %v2533
    %vm2541 = vcmp.eq.s32.totalorder %v117, %v2533
    %vm2542 = vmor %vm2514, %vm2534
    %vm2543 = vmor %vm2515, %vm2535
    %vm2544 = vmor %vm2516, %vm2536
    %vm2545 = vmor %vm2517, %vm2537
    %vm2546 = vmor %vm2518, %vm2538
    %vm2547 = vmor %vm2519, %vm2539
    %vm2548 = vmor %vm2520, %vm2540
    %vm2549 = vmor %vm2521, %vm2541
    %2550 = vset.pattern.permute.xlu0 87
    %2551 = vperm.xlu0 %2550, %v118
    %v2552 = vpop.permute.xlu0 %2551
    %2553 = vset.pattern.permute.xlu0 87
    %2554 = vperm.xlu0 %2553, %v119
    %v2555 = vpop.permute.xlu0 %2554
    %2556 = vset.pattern.permute.xlu0 87
    %2557 = vperm.xlu0 %2556, %v120
    %v2558 = vpop.permute.xlu0 %2557
    %2559 = vset.pattern.permute.xlu0 87
    %2560 = vperm.xlu0 %2559, %v121
    %v2561 = vpop.permute.xlu0 %2560
    %vm2562 = vcmp.eq.s32.totalorder %v110, %v2552
    %vm2563 = vcmp.eq.s32.totalorder %v111, %v2552
    %vm2564 = vcmp.eq.s32.totalorder %v112, %v2555
    %vm2565 = vcmp.eq.s32.totalorder %v113, %v2555
    %vm2566 = vcmp.eq.s32.totalorder %v114, %v2558
    %vm2567 = vcmp.eq.s32.totalorder %v115, %v2558
    %vm2568 = vcmp.eq.s32.totalorder %v116, %v2561
    %vm2569 = vcmp.eq.s32.totalorder %v117, %v2561
    %vm2570 = vmor %vm2542, %vm2562
    %vm2571 = vmor %vm2543, %vm2563
    %vm2572 = vmor %vm2544, %vm2564
    %vm2573 = vmor %vm2545, %vm2565
    %vm2574 = vmor %vm2546, %vm2566
    %vm2575 = vmor %vm2547, %vm2567
    %vm2576 = vmor %vm2548, %vm2568
    %vm2577 = vmor %vm2549, %vm2569
    %2578 = vset.pattern.permute.xlu0 88
    %2579 = vperm.xlu0 %2578, %v118
    %v2580 = vpop.permute.xlu0 %2579
    %2581 = vset.pattern.permute.xlu0 88
    %2582 = vperm.xlu0 %2581, %v119
    %v2583 = vpop.permute.xlu0 %2582
    %2584 = vset.pattern.permute.xlu0 88
    %2585 = vperm.xlu0 %2584, %v120
    %v2586 = vpop.permute.xlu0 %2585
    %2587 = vset.pattern.permute.xlu0 88
    %2588 = vperm.xlu0 %2587, %v121
    %v2589 = vpop.permute.xlu0 %2588
    %vm2590 = vcmp.eq.s32.totalorder %v110, %v2580
    %vm2591 = vcmp.eq.s32.totalorder %v111, %v2580
    %vm2592 = vcmp.eq.s32.totalorder %v112, %v2583
    %vm2593 = vcmp.eq.s32.totalorder %v113, %v2583
    %vm2594 = vcmp.eq.s32.totalorder %v114, %v2586
    %vm2595 = vcmp.eq.s32.totalorder %v115, %v2586
    %vm2596 = vcmp.eq.s32.totalorder %v116, %v2589
    %vm2597 = vcmp.eq.s32.totalorder %v117, %v2589
    %vm2598 = vmor %vm2570, %vm2590
    %vm2599 = vmor %vm2571, %vm2591
    %vm2600 = vmor %vm2572, %vm2592
    %vm2601 = vmor %vm2573, %vm2593
    %vm2602 = vmor %vm2574, %vm2594
    %vm2603 = vmor %vm2575, %vm2595
    %vm2604 = vmor %vm2576, %vm2596
    %vm2605 = vmor %vm2577, %vm2597
    %2606 = vset.pattern.permute.xlu0 89
    %2607 = vperm.xlu0 %2606, %v118
    %v2608 = vpop.permute.xlu0 %2607
    %2609 = vset.pattern.permute.xlu0 89
    %2610 = vperm.xlu0 %2609, %v119
    %v2611 = vpop.permute.xlu0 %2610
    %2612 = vset.pattern.permute.xlu0 89
    %2613 = vperm.xlu0 %2612, %v120
    %v2614 = vpop.permute.xlu0 %2613
    %2615 = vset.pattern.permute.xlu0 89
    %2616 = vperm.xlu0 %2615, %v121
    %v2617 = vpop.permute.xlu0 %2616
    %vm2618 = vcmp.eq.s32.totalorder %v110, %v2608
    %vm2619 = vcmp.eq.s32.totalorder %v111, %v2608
    %vm2620 = vcmp.eq.s32.totalorder %v112, %v2611
    %vm2621 = vcmp.eq.s32.totalorder %v113, %v2611
    %vm2622 = vcmp.eq.s32.totalorder %v114, %v2614
    %vm2623 = vcmp.eq.s32.totalorder %v115, %v2614
    %vm2624 = vcmp.eq.s32.totalorder %v116, %v2617
    %vm2625 = vcmp.eq.s32.totalorder %v117, %v2617
    %vm2626 = vmor %vm2598, %vm2618
    %vm2627 = vmor %vm2599, %vm2619
    %vm2628 = vmor %vm2600, %vm2620
    %vm2629 = vmor %vm2601, %vm2621
    %vm2630 = vmor %vm2602, %vm2622
    %vm2631 = vmor %vm2603, %vm2623
    %vm2632 = vmor %vm2604, %vm2624
    %vm2633 = vmor %vm2605, %vm2625
    %2634 = vset.pattern.permute.xlu0 90
    %2635 = vperm.xlu0 %2634, %v118
    %v2636 = vpop.permute.xlu0 %2635
    %2637 = vset.pattern.permute.xlu0 90
    %2638 = vperm.xlu0 %2637, %v119
    %v2639 = vpop.permute.xlu0 %2638
    %2640 = vset.pattern.permute.xlu0 90
    %2641 = vperm.xlu0 %2640, %v120
    %v2642 = vpop.permute.xlu0 %2641
    %2643 = vset.pattern.permute.xlu0 90
    %2644 = vperm.xlu0 %2643, %v121
    %v2645 = vpop.permute.xlu0 %2644
    %vm2646 = vcmp.eq.s32.totalorder %v110, %v2636
    %vm2647 = vcmp.eq.s32.totalorder %v111, %v2636
    %vm2648 = vcmp.eq.s32.totalorder %v112, %v2639
    %vm2649 = vcmp.eq.s32.totalorder %v113, %v2639
    %vm2650 = vcmp.eq.s32.totalorder %v114, %v2642
    %vm2651 = vcmp.eq.s32.totalorder %v115, %v2642
    %vm2652 = vcmp.eq.s32.totalorder %v116, %v2645
    %vm2653 = vcmp.eq.s32.totalorder %v117, %v2645
    %vm2654 = vmor %vm2626, %vm2646
    %vm2655 = vmor %vm2627, %vm2647
    %vm2656 = vmor %vm2628, %vm2648
    %vm2657 = vmor %vm2629, %vm2649
    %vm2658 = vmor %vm2630, %vm2650
    %vm2659 = vmor %vm2631, %vm2651
    %vm2660 = vmor %vm2632, %vm2652
    %vm2661 = vmor %vm2633, %vm2653
    %2662 = vset.pattern.permute.xlu0 91
    %2663 = vperm.xlu0 %2662, %v118
    %v2664 = vpop.permute.xlu0 %2663
    %2665 = vset.pattern.permute.xlu0 91
    %2666 = vperm.xlu0 %2665, %v119
    %v2667 = vpop.permute.xlu0 %2666
    %2668 = vset.pattern.permute.xlu0 91
    %2669 = vperm.xlu0 %2668, %v120
    %v2670 = vpop.permute.xlu0 %2669
    %2671 = vset.pattern.permute.xlu0 91
    %2672 = vperm.xlu0 %2671, %v121
    %v2673 = vpop.permute.xlu0 %2672
    %vm2674 = vcmp.eq.s32.totalorder %v110, %v2664
    %vm2675 = vcmp.eq.s32.totalorder %v111, %v2664
    %vm2676 = vcmp.eq.s32.totalorder %v112, %v2667
    %vm2677 = vcmp.eq.s32.totalorder %v113, %v2667
    %vm2678 = vcmp.eq.s32.totalorder %v114, %v2670
    %vm2679 = vcmp.eq.s32.totalorder %v115, %v2670
    %vm2680 = vcmp.eq.s32.totalorder %v116, %v2673
    %vm2681 = vcmp.eq.s32.totalorder %v117, %v2673
    %vm2682 = vmor %vm2654, %vm2674
    %vm2683 = vmor %vm2655, %vm2675
    %vm2684 = vmor %vm2656, %vm2676
    %vm2685 = vmor %vm2657, %vm2677
    %vm2686 = vmor %vm2658, %vm2678
    %vm2687 = vmor %vm2659, %vm2679
    %vm2688 = vmor %vm2660, %vm2680
    %vm2689 = vmor %vm2661, %vm2681
    %2690 = vset.pattern.permute.xlu0 92
    %2691 = vperm.xlu0 %2690, %v118
    %v2692 = vpop.permute.xlu0 %2691
    %2693 = vset.pattern.permute.xlu0 92
    %2694 = vperm.xlu0 %2693, %v119
    %v2695 = vpop.permute.xlu0 %2694
    %2696 = vset.pattern.permute.xlu0 92
    %2697 = vperm.xlu0 %2696, %v120
    %v2698 = vpop.permute.xlu0 %2697
    %2699 = vset.pattern.permute.xlu0 92
    %2700 = vperm.xlu0 %2699, %v121
    %v2701 = vpop.permute.xlu0 %2700
    %vm2702 = vcmp.eq.s32.totalorder %v110, %v2692
    %vm2703 = vcmp.eq.s32.totalorder %v111, %v2692
    %vm2704 = vcmp.eq.s32.totalorder %v112, %v2695
    %vm2705 = vcmp.eq.s32.totalorder %v113, %v2695
    %vm2706 = vcmp.eq.s32.totalorder %v114, %v2698
    %vm2707 = vcmp.eq.s32.totalorder %v115, %v2698
    %vm2708 = vcmp.eq.s32.totalorder %v116, %v2701
    %vm2709 = vcmp.eq.s32.totalorder %v117, %v2701
    %vm2710 = vmor %vm2682, %vm2702
    %vm2711 = vmor %vm2683, %vm2703
    %vm2712 = vmor %vm2684, %vm2704
    %vm2713 = vmor %vm2685, %vm2705
    %vm2714 = vmor %vm2686, %vm2706
    %vm2715 = vmor %vm2687, %vm2707
    %vm2716 = vmor %vm2688, %vm2708
    %vm2717 = vmor %vm2689, %vm2709
    %2718 = vset.pattern.permute.xlu0 93
    %2719 = vperm.xlu0 %2718, %v118
    %v2720 = vpop.permute.xlu0 %2719
    %2721 = vset.pattern.permute.xlu0 93
    %2722 = vperm.xlu0 %2721, %v119
    %v2723 = vpop.permute.xlu0 %2722
    %2724 = vset.pattern.permute.xlu0 93
    %2725 = vperm.xlu0 %2724, %v120
    %v2726 = vpop.permute.xlu0 %2725
    %2727 = vset.pattern.permute.xlu0 93
    %2728 = vperm.xlu0 %2727, %v121
    %v2729 = vpop.permute.xlu0 %2728
    %vm2730 = vcmp.eq.s32.totalorder %v110, %v2720
    %vm2731 = vcmp.eq.s32.totalorder %v111, %v2720
    %vm2732 = vcmp.eq.s32.totalorder %v112, %v2723
    %vm2733 = vcmp.eq.s32.totalorder %v113, %v2723
    %vm2734 = vcmp.eq.s32.totalorder %v114, %v2726
    %vm2735 = vcmp.eq.s32.totalorder %v115, %v2726
    %vm2736 = vcmp.eq.s32.totalorder %v116, %v2729
    %vm2737 = vcmp.eq.s32.totalorder %v117, %v2729
    %vm2738 = vmor %vm2710, %vm2730
    %vm2739 = vmor %vm2711, %vm2731
    %vm2740 = vmor %vm2712, %vm2732
    %vm2741 = vmor %vm2713, %vm2733
    %vm2742 = vmor %vm2714, %vm2734
    %vm2743 = vmor %vm2715, %vm2735
    %vm2744 = vmor %vm2716, %vm2736
    %vm2745 = vmor %vm2717, %vm2737
    %2746 = vset.pattern.permute.xlu0 94
    %2747 = vperm.xlu0 %2746, %v118
    %v2748 = vpop.permute.xlu0 %2747
    %2749 = vset.pattern.permute.xlu0 94
    %2750 = vperm.xlu0 %2749, %v119
    %v2751 = vpop.permute.xlu0 %2750
    %2752 = vset.pattern.permute.xlu0 94
    %2753 = vperm.xlu0 %2752, %v120
    %v2754 = vpop.permute.xlu0 %2753
    %2755 = vset.pattern.permute.xlu0 94
    %2756 = vperm.xlu0 %2755, %v121
    %v2757 = vpop.permute.xlu0 %2756
    %vm2758 = vcmp.eq.s32.totalorder %v110, %v2748
    %vm2759 = vcmp.eq.s32.totalorder %v111, %v2748
    %vm2760 = vcmp.eq.s32.totalorder %v112, %v2751
    %vm2761 = vcmp.eq.s32.totalorder %v113, %v2751
    %vm2762 = vcmp.eq.s32.totalorder %v114, %v2754
    %vm2763 = vcmp.eq.s32.totalorder %v115, %v2754
    %vm2764 = vcmp.eq.s32.totalorder %v116, %v2757
    %vm2765 = vcmp.eq.s32.totalorder %v117, %v2757
    %vm2766 = vmor %vm2738, %vm2758
    %vm2767 = vmor %vm2739, %vm2759
    %vm2768 = vmor %vm2740, %vm2760
    %vm2769 = vmor %vm2741, %vm2761
    %vm2770 = vmor %vm2742, %vm2762
    %vm2771 = vmor %vm2743, %vm2763
    %vm2772 = vmor %vm2744, %vm2764
    %vm2773 = vmor %vm2745, %vm2765
    %2774 = vset.pattern.permute.xlu0 95
    %2775 = vperm.xlu0 %2774, %v118
    %v2776 = vpop.permute.xlu0 %2775
    %2777 = vset.pattern.permute.xlu0 95
    %2778 = vperm.xlu0 %2777, %v119
    %v2779 = vpop.permute.xlu0 %2778
    %2780 = vset.pattern.permute.xlu0 95
    %2781 = vperm.xlu0 %2780, %v120
    %v2782 = vpop.permute.xlu0 %2781
    %2783 = vset.pattern.permute.xlu0 95
    %2784 = vperm.xlu0 %2783, %v121
    %v2785 = vpop.permute.xlu0 %2784
    %vm2786 = vcmp.eq.s32.totalorder %v110, %v2776
    %vm2787 = vcmp.eq.s32.totalorder %v111, %v2776
    %vm2788 = vcmp.eq.s32.totalorder %v112, %v2779
    %vm2789 = vcmp.eq.s32.totalorder %v113, %v2779
    %vm2790 = vcmp.eq.s32.totalorder %v114, %v2782
    %vm2791 = vcmp.eq.s32.totalorder %v115, %v2782
    %vm2792 = vcmp.eq.s32.totalorder %v116, %v2785
    %vm2793 = vcmp.eq.s32.totalorder %v117, %v2785
    %vm2794 = vmor %vm2766, %vm2786
    %vm2795 = vmor %vm2767, %vm2787
    %vm2796 = vmor %vm2768, %vm2788
    %vm2797 = vmor %vm2769, %vm2789
    %vm2798 = vmor %vm2770, %vm2790
    %vm2799 = vmor %vm2771, %vm2791
    %vm2800 = vmor %vm2772, %vm2792
    %vm2801 = vmor %vm2773, %vm2793
    %2802 = vset.pattern.permute.xlu0 96
    %2803 = vperm.xlu0 %2802, %v118
    %v2804 = vpop.permute.xlu0 %2803
    %2805 = vset.pattern.permute.xlu0 96
    %2806 = vperm.xlu0 %2805, %v119
    %v2807 = vpop.permute.xlu0 %2806
    %2808 = vset.pattern.permute.xlu0 96
    %2809 = vperm.xlu0 %2808, %v120
    %v2810 = vpop.permute.xlu0 %2809
    %2811 = vset.pattern.permute.xlu0 96
    %2812 = vperm.xlu0 %2811, %v121
    %v2813 = vpop.permute.xlu0 %2812
    %vm2814 = vcmp.eq.s32.totalorder %v110, %v2804
    %vm2815 = vcmp.eq.s32.totalorder %v111, %v2804
    %vm2816 = vcmp.eq.s32.totalorder %v112, %v2807
    %vm2817 = vcmp.eq.s32.totalorder %v113, %v2807
    %vm2818 = vcmp.eq.s32.totalorder %v114, %v2810
    %vm2819 = vcmp.eq.s32.totalorder %v115, %v2810
    %vm2820 = vcmp.eq.s32.totalorder %v116, %v2813
    %vm2821 = vcmp.eq.s32.totalorder %v117, %v2813
    %vm2822 = vmor %vm2794, %vm2814
    %vm2823 = vmor %vm2795, %vm2815
    %vm2824 = vmor %vm2796, %vm2816
    %vm2825 = vmor %vm2797, %vm2817
    %vm2826 = vmor %vm2798, %vm2818
    %vm2827 = vmor %vm2799, %vm2819
    %vm2828 = vmor %vm2800, %vm2820
    %vm2829 = vmor %vm2801, %vm2821
    %2830 = vset.pattern.permute.xlu0 97
    %2831 = vperm.xlu0 %2830, %v118
    %v2832 = vpop.permute.xlu0 %2831
    %2833 = vset.pattern.permute.xlu0 97
    %2834 = vperm.xlu0 %2833, %v119
    %v2835 = vpop.permute.xlu0 %2834
    %2836 = vset.pattern.permute.xlu0 97
    %2837 = vperm.xlu0 %2836, %v120
    %v2838 = vpop.permute.xlu0 %2837
    %2839 = vset.pattern.permute.xlu0 97
    %2840 = vperm.xlu0 %2839, %v121
    %v2841 = vpop.permute.xlu0 %2840
    %vm2842 = vcmp.eq.s32.totalorder %v110, %v2832
    %vm2843 = vcmp.eq.s32.totalorder %v111, %v2832
    %vm2844 = vcmp.eq.s32.totalorder %v112, %v2835
    %vm2845 = vcmp.eq.s32.totalorder %v113, %v2835
    %vm2846 = vcmp.eq.s32.totalorder %v114, %v2838
    %vm2847 = vcmp.eq.s32.totalorder %v115, %v2838
    %vm2848 = vcmp.eq.s32.totalorder %v116, %v2841
    %vm2849 = vcmp.eq.s32.totalorder %v117, %v2841
    %vm2850 = vmor %vm2822, %vm2842
    %vm2851 = vmor %vm2823, %vm2843
    %vm2852 = vmor %vm2824, %vm2844
    %vm2853 = vmor %vm2825, %vm2845
    %vm2854 = vmor %vm2826, %vm2846
    %vm2855 = vmor %vm2827, %vm2847
    %vm2856 = vmor %vm2828, %vm2848
    %vm2857 = vmor %vm2829, %vm2849
    %2858 = vset.pattern.permute.xlu0 98
    %2859 = vperm.xlu0 %2858, %v118
    %v2860 = vpop.permute.xlu0 %2859
    %2861 = vset.pattern.permute.xlu0 98
    %2862 = vperm.xlu0 %2861, %v119
    %v2863 = vpop.permute.xlu0 %2862
    %2864 = vset.pattern.permute.xlu0 98
    %2865 = vperm.xlu0 %2864, %v120
    %v2866 = vpop.permute.xlu0 %2865
    %2867 = vset.pattern.permute.xlu0 98
    %2868 = vperm.xlu0 %2867, %v121
    %v2869 = vpop.permute.xlu0 %2868
    %vm2870 = vcmp.eq.s32.totalorder %v110, %v2860
    %vm2871 = vcmp.eq.s32.totalorder %v111, %v2860
    %vm2872 = vcmp.eq.s32.totalorder %v112, %v2863
    %vm2873 = vcmp.eq.s32.totalorder %v113, %v2863
    %vm2874 = vcmp.eq.s32.totalorder %v114, %v2866
    %vm2875 = vcmp.eq.s32.totalorder %v115, %v2866
    %vm2876 = vcmp.eq.s32.totalorder %v116, %v2869
    %vm2877 = vcmp.eq.s32.totalorder %v117, %v2869
    %vm2878 = vmor %vm2850, %vm2870
    %vm2879 = vmor %vm2851, %vm2871
    %vm2880 = vmor %vm2852, %vm2872
    %vm2881 = vmor %vm2853, %vm2873
    %vm2882 = vmor %vm2854, %vm2874
    %vm2883 = vmor %vm2855, %vm2875
    %vm2884 = vmor %vm2856, %vm2876
    %vm2885 = vmor %vm2857, %vm2877
    %2886 = vset.pattern.permute.xlu0 99
    %2887 = vperm.xlu0 %2886, %v118
    %v2888 = vpop.permute.xlu0 %2887
    %2889 = vset.pattern.permute.xlu0 99
    %2890 = vperm.xlu0 %2889, %v119
    %v2891 = vpop.permute.xlu0 %2890
    %2892 = vset.pattern.permute.xlu0 99
    %2893 = vperm.xlu0 %2892, %v120
    %v2894 = vpop.permute.xlu0 %2893
    %2895 = vset.pattern.permute.xlu0 99
    %2896 = vperm.xlu0 %2895, %v121
    %v2897 = vpop.permute.xlu0 %2896
    %vm2898 = vcmp.eq.s32.totalorder %v110, %v2888
    %vm2899 = vcmp.eq.s32.totalorder %v111, %v2888
    %vm2900 = vcmp.eq.s32.totalorder %v112, %v2891
    %vm2901 = vcmp.eq.s32.totalorder %v113, %v2891
    %vm2902 = vcmp.eq.s32.totalorder %v114, %v2894
    %vm2903 = vcmp.eq.s32.totalorder %v115, %v2894
    %vm2904 = vcmp.eq.s32.totalorder %v116, %v2897
    %vm2905 = vcmp.eq.s32.totalorder %v117, %v2897
    %vm2906 = vmor %vm2878, %vm2898
    %vm2907 = vmor %vm2879, %vm2899
    %vm2908 = vmor %vm2880, %vm2900
    %vm2909 = vmor %vm2881, %vm2901
    %vm2910 = vmor %vm2882, %vm2902
    %vm2911 = vmor %vm2883, %vm2903
    %vm2912 = vmor %vm2884, %vm2904
    %vm2913 = vmor %vm2885, %vm2905
    %2914 = vset.pattern.permute.xlu0 100
    %2915 = vperm.xlu0 %2914, %v118
    %v2916 = vpop.permute.xlu0 %2915
    %2917 = vset.pattern.permute.xlu0 100
    %2918 = vperm.xlu0 %2917, %v119
    %v2919 = vpop.permute.xlu0 %2918
    %2920 = vset.pattern.permute.xlu0 100
    %2921 = vperm.xlu0 %2920, %v120
    %v2922 = vpop.permute.xlu0 %2921
    %2923 = vset.pattern.permute.xlu0 100
    %2924 = vperm.xlu0 %2923, %v121
    %v2925 = vpop.permute.xlu0 %2924
    %vm2926 = vcmp.eq.s32.totalorder %v110, %v2916
    %vm2927 = vcmp.eq.s32.totalorder %v111, %v2916
    %vm2928 = vcmp.eq.s32.totalorder %v112, %v2919
    %vm2929 = vcmp.eq.s32.totalorder %v113, %v2919
    %vm2930 = vcmp.eq.s32.totalorder %v114, %v2922
    %vm2931 = vcmp.eq.s32.totalorder %v115, %v2922
    %vm2932 = vcmp.eq.s32.totalorder %v116, %v2925
    %vm2933 = vcmp.eq.s32.totalorder %v117, %v2925
    %vm2934 = vmor %vm2906, %vm2926
    %vm2935 = vmor %vm2907, %vm2927
    %vm2936 = vmor %vm2908, %vm2928
    %vm2937 = vmor %vm2909, %vm2929
    %vm2938 = vmor %vm2910, %vm2930
    %vm2939 = vmor %vm2911, %vm2931
    %vm2940 = vmor %vm2912, %vm2932
    %vm2941 = vmor %vm2913, %vm2933
    %2942 = vset.pattern.permute.xlu0 101
    %2943 = vperm.xlu0 %2942, %v118
    %v2944 = vpop.permute.xlu0 %2943
    %2945 = vset.pattern.permute.xlu0 101
    %2946 = vperm.xlu0 %2945, %v119
    %v2947 = vpop.permute.xlu0 %2946
    %2948 = vset.pattern.permute.xlu0 101
    %2949 = vperm.xlu0 %2948, %v120
    %v2950 = vpop.permute.xlu0 %2949
    %2951 = vset.pattern.permute.xlu0 101
    %2952 = vperm.xlu0 %2951, %v121
    %v2953 = vpop.permute.xlu0 %2952
    %vm2954 = vcmp.eq.s32.totalorder %v110, %v2944
    %vm2955 = vcmp.eq.s32.totalorder %v111, %v2944
    %vm2956 = vcmp.eq.s32.totalorder %v112, %v2947
    %vm2957 = vcmp.eq.s32.totalorder %v113, %v2947
    %vm2958 = vcmp.eq.s32.totalorder %v114, %v2950
    %vm2959 = vcmp.eq.s32.totalorder %v115, %v2950
    %vm2960 = vcmp.eq.s32.totalorder %v116, %v2953
    %vm2961 = vcmp.eq.s32.totalorder %v117, %v2953
    %vm2962 = vmor %vm2934, %vm2954
    %vm2963 = vmor %vm2935, %vm2955
    %vm2964 = vmor %vm2936, %vm2956
    %vm2965 = vmor %vm2937, %vm2957
    %vm2966 = vmor %vm2938, %vm2958
    %vm2967 = vmor %vm2939, %vm2959
    %vm2968 = vmor %vm2940, %vm2960
    %vm2969 = vmor %vm2941, %vm2961
    %2970 = vset.pattern.permute.xlu0 102
    %2971 = vperm.xlu0 %2970, %v118
    %v2972 = vpop.permute.xlu0 %2971
    %2973 = vset.pattern.permute.xlu0 102
    %2974 = vperm.xlu0 %2973, %v119
    %v2975 = vpop.permute.xlu0 %2974
    %2976 = vset.pattern.permute.xlu0 102
    %2977 = vperm.xlu0 %2976, %v120
    %v2978 = vpop.permute.xlu0 %2977
    %2979 = vset.pattern.permute.xlu0 102
    %2980 = vperm.xlu0 %2979, %v121
    %v2981 = vpop.permute.xlu0 %2980
    %vm2982 = vcmp.eq.s32.totalorder %v110, %v2972
    %vm2983 = vcmp.eq.s32.totalorder %v111, %v2972
    %vm2984 = vcmp.eq.s32.totalorder %v112, %v2975
    %vm2985 = vcmp.eq.s32.totalorder %v113, %v2975
    %vm2986 = vcmp.eq.s32.totalorder %v114, %v2978
    %vm2987 = vcmp.eq.s32.totalorder %v115, %v2978
    %vm2988 = vcmp.eq.s32.totalorder %v116, %v2981
    %vm2989 = vcmp.eq.s32.totalorder %v117, %v2981
    %vm2990 = vmor %vm2962, %vm2982
    %vm2991 = vmor %vm2963, %vm2983
    %vm2992 = vmor %vm2964, %vm2984
    %vm2993 = vmor %vm2965, %vm2985
    %vm2994 = vmor %vm2966, %vm2986
    %vm2995 = vmor %vm2967, %vm2987
    %vm2996 = vmor %vm2968, %vm2988
    %vm2997 = vmor %vm2969, %vm2989
    %2998 = vset.pattern.permute.xlu0 103
    %2999 = vperm.xlu0 %2998, %v118
    %v3000 = vpop.permute.xlu0 %2999
    %3001 = vset.pattern.permute.xlu0 103
    %3002 = vperm.xlu0 %3001, %v119
    %v3003 = vpop.permute.xlu0 %3002
    %3004 = vset.pattern.permute.xlu0 103
    %3005 = vperm.xlu0 %3004, %v120
    %v3006 = vpop.permute.xlu0 %3005
    %3007 = vset.pattern.permute.xlu0 103
    %3008 = vperm.xlu0 %3007, %v121
    %v3009 = vpop.permute.xlu0 %3008
    %vm3010 = vcmp.eq.s32.totalorder %v110, %v3000
    %vm3011 = vcmp.eq.s32.totalorder %v111, %v3000
    %vm3012 = vcmp.eq.s32.totalorder %v112, %v3003
    %vm3013 = vcmp.eq.s32.totalorder %v113, %v3003
    %vm3014 = vcmp.eq.s32.totalorder %v114, %v3006
    %vm3015 = vcmp.eq.s32.totalorder %v115, %v3006
    %vm3016 = vcmp.eq.s32.totalorder %v116, %v3009
    %vm3017 = vcmp.eq.s32.totalorder %v117, %v3009
    %vm3018 = vmor %vm2990, %vm3010
    %vm3019 = vmor %vm2991, %vm3011
    %vm3020 = vmor %vm2992, %vm3012
    %vm3021 = vmor %vm2993, %vm3013
    %vm3022 = vmor %vm2994, %vm3014
    %vm3023 = vmor %vm2995, %vm3015
    %vm3024 = vmor %vm2996, %vm3016
    %vm3025 = vmor %vm2997, %vm3017
    %3026 = vset.pattern.permute.xlu0 104
    %3027 = vperm.xlu0 %3026, %v118
    %v3028 = vpop.permute.xlu0 %3027
    %3029 = vset.pattern.permute.xlu0 104
    %3030 = vperm.xlu0 %3029, %v119
    %v3031 = vpop.permute.xlu0 %3030
    %3032 = vset.pattern.permute.xlu0 104
    %3033 = vperm.xlu0 %3032, %v120
    %v3034 = vpop.permute.xlu0 %3033
    %3035 = vset.pattern.permute.xlu0 104
    %3036 = vperm.xlu0 %3035, %v121
    %v3037 = vpop.permute.xlu0 %3036
    %vm3038 = vcmp.eq.s32.totalorder %v110, %v3028
    %vm3039 = vcmp.eq.s32.totalorder %v111, %v3028
    %vm3040 = vcmp.eq.s32.totalorder %v112, %v3031
    %vm3041 = vcmp.eq.s32.totalorder %v113, %v3031
    %vm3042 = vcmp.eq.s32.totalorder %v114, %v3034
    %vm3043 = vcmp.eq.s32.totalorder %v115, %v3034
    %vm3044 = vcmp.eq.s32.totalorder %v116, %v3037
    %vm3045 = vcmp.eq.s32.totalorder %v117, %v3037
    %vm3046 = vmor %vm3018, %vm3038
    %vm3047 = vmor %vm3019, %vm3039
    %vm3048 = vmor %vm3020, %vm3040
    %vm3049 = vmor %vm3021, %vm3041
    %vm3050 = vmor %vm3022, %vm3042
    %vm3051 = vmor %vm3023, %vm3043
    %vm3052 = vmor %vm3024, %vm3044
    %vm3053 = vmor %vm3025, %vm3045
    %3054 = vset.pattern.permute.xlu0 105
    %3055 = vperm.xlu0 %3054, %v118
    %v3056 = vpop.permute.xlu0 %3055
    %3057 = vset.pattern.permute.xlu0 105
    %3058 = vperm.xlu0 %3057, %v119
    %v3059 = vpop.permute.xlu0 %3058
    %3060 = vset.pattern.permute.xlu0 105
    %3061 = vperm.xlu0 %3060, %v120
    %v3062 = vpop.permute.xlu0 %3061
    %3063 = vset.pattern.permute.xlu0 105
    %3064 = vperm.xlu0 %3063, %v121
    %v3065 = vpop.permute.xlu0 %3064
    %vm3066 = vcmp.eq.s32.totalorder %v110, %v3056
    %vm3067 = vcmp.eq.s32.totalorder %v111, %v3056
    %vm3068 = vcmp.eq.s32.totalorder %v112, %v3059
    %vm3069 = vcmp.eq.s32.totalorder %v113, %v3059
    %vm3070 = vcmp.eq.s32.totalorder %v114, %v3062
    %vm3071 = vcmp.eq.s32.totalorder %v115, %v3062
    %vm3072 = vcmp.eq.s32.totalorder %v116, %v3065
    %vm3073 = vcmp.eq.s32.totalorder %v117, %v3065
    %vm3074 = vmor %vm3046, %vm3066
    %vm3075 = vmor %vm3047, %vm3067
    %vm3076 = vmor %vm3048, %vm3068
    %vm3077 = vmor %vm3049, %vm3069
    %vm3078 = vmor %vm3050, %vm3070
    %vm3079 = vmor %vm3051, %vm3071
    %vm3080 = vmor %vm3052, %vm3072
    %vm3081 = vmor %vm3053, %vm3073
    %3082 = vset.pattern.permute.xlu0 106
    %3083 = vperm.xlu0 %3082, %v118
    %v3084 = vpop.permute.xlu0 %3083
    %3085 = vset.pattern.permute.xlu0 106
    %3086 = vperm.xlu0 %3085, %v119
    %v3087 = vpop.permute.xlu0 %3086
    %3088 = vset.pattern.permute.xlu0 106
    %3089 = vperm.xlu0 %3088, %v120
    %v3090 = vpop.permute.xlu0 %3089
    %3091 = vset.pattern.permute.xlu0 106
    %3092 = vperm.xlu0 %3091, %v121
    %v3093 = vpop.permute.xlu0 %3092
    %vm3094 = vcmp.eq.s32.totalorder %v110, %v3084
    %vm3095 = vcmp.eq.s32.totalorder %v111, %v3084
    %vm3096 = vcmp.eq.s32.totalorder %v112, %v3087
    %vm3097 = vcmp.eq.s32.totalorder %v113, %v3087
    %vm3098 = vcmp.eq.s32.totalorder %v114, %v3090
    %vm3099 = vcmp.eq.s32.totalorder %v115, %v3090
    %vm3100 = vcmp.eq.s32.totalorder %v116, %v3093
    %vm3101 = vcmp.eq.s32.totalorder %v117, %v3093
    %vm3102 = vmor %vm3074, %vm3094
    %vm3103 = vmor %vm3075, %vm3095
    %vm3104 = vmor %vm3076, %vm3096
    %vm3105 = vmor %vm3077, %vm3097
    %vm3106 = vmor %vm3078, %vm3098
    %vm3107 = vmor %vm3079, %vm3099
    %vm3108 = vmor %vm3080, %vm3100
    %vm3109 = vmor %vm3081, %vm3101
    %3110 = vset.pattern.permute.xlu0 107
    %3111 = vperm.xlu0 %3110, %v118
    %v3112 = vpop.permute.xlu0 %3111
    %3113 = vset.pattern.permute.xlu0 107
    %3114 = vperm.xlu0 %3113, %v119
    %v3115 = vpop.permute.xlu0 %3114
    %3116 = vset.pattern.permute.xlu0 107
    %3117 = vperm.xlu0 %3116, %v120
    %v3118 = vpop.permute.xlu0 %3117
    %3119 = vset.pattern.permute.xlu0 107
    %3120 = vperm.xlu0 %3119, %v121
    %v3121 = vpop.permute.xlu0 %3120
    %vm3122 = vcmp.eq.s32.totalorder %v110, %v3112
    %vm3123 = vcmp.eq.s32.totalorder %v111, %v3112
    %vm3124 = vcmp.eq.s32.totalorder %v112, %v3115
    %vm3125 = vcmp.eq.s32.totalorder %v113, %v3115
    %vm3126 = vcmp.eq.s32.totalorder %v114, %v3118
    %vm3127 = vcmp.eq.s32.totalorder %v115, %v3118
    %vm3128 = vcmp.eq.s32.totalorder %v116, %v3121
    %vm3129 = vcmp.eq.s32.totalorder %v117, %v3121
    %vm3130 = vmor %vm3102, %vm3122
    %vm3131 = vmor %vm3103, %vm3123
    %vm3132 = vmor %vm3104, %vm3124
    %vm3133 = vmor %vm3105, %vm3125
    %vm3134 = vmor %vm3106, %vm3126
    %vm3135 = vmor %vm3107, %vm3127
    %vm3136 = vmor %vm3108, %vm3128
    %vm3137 = vmor %vm3109, %vm3129
    %3138 = vset.pattern.permute.xlu0 108
    %3139 = vperm.xlu0 %3138, %v118
    %v3140 = vpop.permute.xlu0 %3139
    %3141 = vset.pattern.permute.xlu0 108
    %3142 = vperm.xlu0 %3141, %v119
    %v3143 = vpop.permute.xlu0 %3142
    %3144 = vset.pattern.permute.xlu0 108
    %3145 = vperm.xlu0 %3144, %v120
    %v3146 = vpop.permute.xlu0 %3145
    %3147 = vset.pattern.permute.xlu0 108
    %3148 = vperm.xlu0 %3147, %v121
    %v3149 = vpop.permute.xlu0 %3148
    %vm3150 = vcmp.eq.s32.totalorder %v110, %v3140
    %vm3151 = vcmp.eq.s32.totalorder %v111, %v3140
    %vm3152 = vcmp.eq.s32.totalorder %v112, %v3143
    %vm3153 = vcmp.eq.s32.totalorder %v113, %v3143
    %vm3154 = vcmp.eq.s32.totalorder %v114, %v3146
    %vm3155 = vcmp.eq.s32.totalorder %v115, %v3146
    %vm3156 = vcmp.eq.s32.totalorder %v116, %v3149
    %vm3157 = vcmp.eq.s32.totalorder %v117, %v3149
    %vm3158 = vmor %vm3130, %vm3150
    %vm3159 = vmor %vm3131, %vm3151
    %vm3160 = vmor %vm3132, %vm3152
    %vm3161 = vmor %vm3133, %vm3153
    %vm3162 = vmor %vm3134, %vm3154
    %vm3163 = vmor %vm3135, %vm3155
    %vm3164 = vmor %vm3136, %vm3156
    %vm3165 = vmor %vm3137, %vm3157
    %3166 = vset.pattern.permute.xlu0 109
    %3167 = vperm.xlu0 %3166, %v118
    %v3168 = vpop.permute.xlu0 %3167
    %3169 = vset.pattern.permute.xlu0 109
    %3170 = vperm.xlu0 %3169, %v119
    %v3171 = vpop.permute.xlu0 %3170
    %3172 = vset.pattern.permute.xlu0 109
    %3173 = vperm.xlu0 %3172, %v120
    %v3174 = vpop.permute.xlu0 %3173
    %3175 = vset.pattern.permute.xlu0 109
    %3176 = vperm.xlu0 %3175, %v121
    %v3177 = vpop.permute.xlu0 %3176
    %vm3178 = vcmp.eq.s32.totalorder %v110, %v3168
    %vm3179 = vcmp.eq.s32.totalorder %v111, %v3168
    %vm3180 = vcmp.eq.s32.totalorder %v112, %v3171
    %vm3181 = vcmp.eq.s32.totalorder %v113, %v3171
    %vm3182 = vcmp.eq.s32.totalorder %v114, %v3174
    %vm3183 = vcmp.eq.s32.totalorder %v115, %v3174
    %vm3184 = vcmp.eq.s32.totalorder %v116, %v3177
    %vm3185 = vcmp.eq.s32.totalorder %v117, %v3177
    %vm3186 = vmor %vm3158, %vm3178
    %vm3187 = vmor %vm3159, %vm3179
    %vm3188 = vmor %vm3160, %vm3180
    %vm3189 = vmor %vm3161, %vm3181
    %vm3190 = vmor %vm3162, %vm3182
    %vm3191 = vmor %vm3163, %vm3183
    %vm3192 = vmor %vm3164, %vm3184
    %vm3193 = vmor %vm3165, %vm3185
    %3194 = vset.pattern.permute.xlu0 110
    %3195 = vperm.xlu0 %3194, %v118
    %v3196 = vpop.permute.xlu0 %3195
    %3197 = vset.pattern.permute.xlu0 110
    %3198 = vperm.xlu0 %3197, %v119
    %v3199 = vpop.permute.xlu0 %3198
    %3200 = vset.pattern.permute.xlu0 110
    %3201 = vperm.xlu0 %3200, %v120
    %v3202 = vpop.permute.xlu0 %3201
    %3203 = vset.pattern.permute.xlu0 110
    %3204 = vperm.xlu0 %3203, %v121
    %v3205 = vpop.permute.xlu0 %3204
    %vm3206 = vcmp.eq.s32.totalorder %v110, %v3196
    %vm3207 = vcmp.eq.s32.totalorder %v111, %v3196
    %vm3208 = vcmp.eq.s32.totalorder %v112, %v3199
    %vm3209 = vcmp.eq.s32.totalorder %v113, %v3199
    %vm3210 = vcmp.eq.s32.totalorder %v114, %v3202
    %vm3211 = vcmp.eq.s32.totalorder %v115, %v3202
    %vm3212 = vcmp.eq.s32.totalorder %v116, %v3205
    %vm3213 = vcmp.eq.s32.totalorder %v117, %v3205
    %vm3214 = vmor %vm3186, %vm3206
    %vm3215 = vmor %vm3187, %vm3207
    %vm3216 = vmor %vm3188, %vm3208
    %vm3217 = vmor %vm3189, %vm3209
    %vm3218 = vmor %vm3190, %vm3210
    %vm3219 = vmor %vm3191, %vm3211
    %vm3220 = vmor %vm3192, %vm3212
    %vm3221 = vmor %vm3193, %vm3213
    %3222 = vset.pattern.permute.xlu0 111
    %3223 = vperm.xlu0 %3222, %v118
    %v3224 = vpop.permute.xlu0 %3223
    %3225 = vset.pattern.permute.xlu0 111
    %3226 = vperm.xlu0 %3225, %v119
    %v3227 = vpop.permute.xlu0 %3226
    %3228 = vset.pattern.permute.xlu0 111
    %3229 = vperm.xlu0 %3228, %v120
    %v3230 = vpop.permute.xlu0 %3229
    %3231 = vset.pattern.permute.xlu0 111
    %3232 = vperm.xlu0 %3231, %v121
    %v3233 = vpop.permute.xlu0 %3232
    %vm3234 = vcmp.eq.s32.totalorder %v110, %v3224
    %vm3235 = vcmp.eq.s32.totalorder %v111, %v3224
    %vm3236 = vcmp.eq.s32.totalorder %v112, %v3227
    %vm3237 = vcmp.eq.s32.totalorder %v113, %v3227
    %vm3238 = vcmp.eq.s32.totalorder %v114, %v3230
    %vm3239 = vcmp.eq.s32.totalorder %v115, %v3230
    %vm3240 = vcmp.eq.s32.totalorder %v116, %v3233
    %vm3241 = vcmp.eq.s32.totalorder %v117, %v3233
    %vm3242 = vmor %vm3214, %vm3234
    %vm3243 = vmor %vm3215, %vm3235
    %vm3244 = vmor %vm3216, %vm3236
    %vm3245 = vmor %vm3217, %vm3237
    %vm3246 = vmor %vm3218, %vm3238
    %vm3247 = vmor %vm3219, %vm3239
    %vm3248 = vmor %vm3220, %vm3240
    %vm3249 = vmor %vm3221, %vm3241
    %3250 = vset.pattern.permute.xlu0 112
    %3251 = vperm.xlu0 %3250, %v118
    %v3252 = vpop.permute.xlu0 %3251
    %3253 = vset.pattern.permute.xlu0 112
    %3254 = vperm.xlu0 %3253, %v119
    %v3255 = vpop.permute.xlu0 %3254
    %3256 = vset.pattern.permute.xlu0 112
    %3257 = vperm.xlu0 %3256, %v120
    %v3258 = vpop.permute.xlu0 %3257
    %3259 = vset.pattern.permute.xlu0 112
    %3260 = vperm.xlu0 %3259, %v121
    %v3261 = vpop.permute.xlu0 %3260
    %vm3262 = vcmp.eq.s32.totalorder %v110, %v3252
    %vm3263 = vcmp.eq.s32.totalorder %v111, %v3252
    %vm3264 = vcmp.eq.s32.totalorder %v112, %v3255
    %vm3265 = vcmp.eq.s32.totalorder %v113, %v3255
    %vm3266 = vcmp.eq.s32.totalorder %v114, %v3258
    %vm3267 = vcmp.eq.s32.totalorder %v115, %v3258
    %vm3268 = vcmp.eq.s32.totalorder %v116, %v3261
    %vm3269 = vcmp.eq.s32.totalorder %v117, %v3261
    %vm3270 = vmor %vm3242, %vm3262
    %vm3271 = vmor %vm3243, %vm3263
    %vm3272 = vmor %vm3244, %vm3264
    %vm3273 = vmor %vm3245, %vm3265
    %vm3274 = vmor %vm3246, %vm3266
    %vm3275 = vmor %vm3247, %vm3267
    %vm3276 = vmor %vm3248, %vm3268
    %vm3277 = vmor %vm3249, %vm3269
    %3278 = vset.pattern.permute.xlu0 113
    %3279 = vperm.xlu0 %3278, %v118
    %v3280 = vpop.permute.xlu0 %3279
    %3281 = vset.pattern.permute.xlu0 113
    %3282 = vperm.xlu0 %3281, %v119
    %v3283 = vpop.permute.xlu0 %3282
    %3284 = vset.pattern.permute.xlu0 113
    %3285 = vperm.xlu0 %3284, %v120
    %v3286 = vpop.permute.xlu0 %3285
    %3287 = vset.pattern.permute.xlu0 113
    %3288 = vperm.xlu0 %3287, %v121
    %v3289 = vpop.permute.xlu0 %3288
    %vm3290 = vcmp.eq.s32.totalorder %v110, %v3280
    %vm3291 = vcmp.eq.s32.totalorder %v111, %v3280
    %vm3292 = vcmp.eq.s32.totalorder %v112, %v3283
    %vm3293 = vcmp.eq.s32.totalorder %v113, %v3283
    %vm3294 = vcmp.eq.s32.totalorder %v114, %v3286
    %vm3295 = vcmp.eq.s32.totalorder %v115, %v3286
    %vm3296 = vcmp.eq.s32.totalorder %v116, %v3289
    %vm3297 = vcmp.eq.s32.totalorder %v117, %v3289
    %vm3298 = vmor %vm3270, %vm3290
    %vm3299 = vmor %vm3271, %vm3291
    %vm3300 = vmor %vm3272, %vm3292
    %vm3301 = vmor %vm3273, %vm3293
    %vm3302 = vmor %vm3274, %vm3294
    %vm3303 = vmor %vm3275, %vm3295
    %vm3304 = vmor %vm3276, %vm3296
    %vm3305 = vmor %vm3277, %vm3297
    %3306 = vset.pattern.permute.xlu0 114
    %3307 = vperm.xlu0 %3306, %v118
    %v3308 = vpop.permute.xlu0 %3307
    %3309 = vset.pattern.permute.xlu0 114
    %3310 = vperm.xlu0 %3309, %v119
    %v3311 = vpop.permute.xlu0 %3310
    %3312 = vset.pattern.permute.xlu0 114
    %3313 = vperm.xlu0 %3312, %v120
    %v3314 = vpop.permute.xlu0 %3313
    %3315 = vset.pattern.permute.xlu0 114
    %3316 = vperm.xlu0 %3315, %v121
    %v3317 = vpop.permute.xlu0 %3316
    %vm3318 = vcmp.eq.s32.totalorder %v110, %v3308
    %vm3319 = vcmp.eq.s32.totalorder %v111, %v3308
    %vm3320 = vcmp.eq.s32.totalorder %v112, %v3311
    %vm3321 = vcmp.eq.s32.totalorder %v113, %v3311
    %vm3322 = vcmp.eq.s32.totalorder %v114, %v3314
    %vm3323 = vcmp.eq.s32.totalorder %v115, %v3314
    %vm3324 = vcmp.eq.s32.totalorder %v116, %v3317
    %vm3325 = vcmp.eq.s32.totalorder %v117, %v3317
    %vm3326 = vmor %vm3298, %vm3318
    %vm3327 = vmor %vm3299, %vm3319
    %vm3328 = vmor %vm3300, %vm3320
    %vm3329 = vmor %vm3301, %vm3321
    %vm3330 = vmor %vm3302, %vm3322
    %vm3331 = vmor %vm3303, %vm3323
    %vm3332 = vmor %vm3304, %vm3324
    %vm3333 = vmor %vm3305, %vm3325
    %3334 = vset.pattern.permute.xlu0 115
    %3335 = vperm.xlu0 %3334, %v118
    %v3336 = vpop.permute.xlu0 %3335
    %3337 = vset.pattern.permute.xlu0 115
    %3338 = vperm.xlu0 %3337, %v119
    %v3339 = vpop.permute.xlu0 %3338
    %3340 = vset.pattern.permute.xlu0 115
    %3341 = vperm.xlu0 %3340, %v120
    %v3342 = vpop.permute.xlu0 %3341
    %3343 = vset.pattern.permute.xlu0 115
    %3344 = vperm.xlu0 %3343, %v121
    %v3345 = vpop.permute.xlu0 %3344
    %vm3346 = vcmp.eq.s32.totalorder %v110, %v3336
    %vm3347 = vcmp.eq.s32.totalorder %v111, %v3336
    %vm3348 = vcmp.eq.s32.totalorder %v112, %v3339
    %vm3349 = vcmp.eq.s32.totalorder %v113, %v3339
    %vm3350 = vcmp.eq.s32.totalorder %v114, %v3342
    %vm3351 = vcmp.eq.s32.totalorder %v115, %v3342
    %vm3352 = vcmp.eq.s32.totalorder %v116, %v3345
    %vm3353 = vcmp.eq.s32.totalorder %v117, %v3345
    %vm3354 = vmor %vm3326, %vm3346
    %vm3355 = vmor %vm3327, %vm3347
    %vm3356 = vmor %vm3328, %vm3348
    %vm3357 = vmor %vm3329, %vm3349
    %vm3358 = vmor %vm3330, %vm3350
    %vm3359 = vmor %vm3331, %vm3351
    %vm3360 = vmor %vm3332, %vm3352
    %vm3361 = vmor %vm3333, %vm3353
    %3362 = vset.pattern.permute.xlu0 116
    %3363 = vperm.xlu0 %3362, %v118
    %v3364 = vpop.permute.xlu0 %3363
    %3365 = vset.pattern.permute.xlu0 116
    %3366 = vperm.xlu0 %3365, %v119
    %v3367 = vpop.permute.xlu0 %3366
    %3368 = vset.pattern.permute.xlu0 116
    %3369 = vperm.xlu0 %3368, %v120
    %v3370 = vpop.permute.xlu0 %3369
    %3371 = vset.pattern.permute.xlu0 116
    %3372 = vperm.xlu0 %3371, %v121
    %v3373 = vpop.permute.xlu0 %3372
    %vm3374 = vcmp.eq.s32.totalorder %v110, %v3364
    %vm3375 = vcmp.eq.s32.totalorder %v111, %v3364
    %vm3376 = vcmp.eq.s32.totalorder %v112, %v3367
    %vm3377 = vcmp.eq.s32.totalorder %v113, %v3367
    %vm3378 = vcmp.eq.s32.totalorder %v114, %v3370
    %vm3379 = vcmp.eq.s32.totalorder %v115, %v3370
    %vm3380 = vcmp.eq.s32.totalorder %v116, %v3373
    %vm3381 = vcmp.eq.s32.totalorder %v117, %v3373
    %vm3382 = vmor %vm3354, %vm3374
    %vm3383 = vmor %vm3355, %vm3375
    %vm3384 = vmor %vm3356, %vm3376
    %vm3385 = vmor %vm3357, %vm3377
    %vm3386 = vmor %vm3358, %vm3378
    %vm3387 = vmor %vm3359, %vm3379
    %vm3388 = vmor %vm3360, %vm3380
    %vm3389 = vmor %vm3361, %vm3381
    %3390 = vset.pattern.permute.xlu0 117
    %3391 = vperm.xlu0 %3390, %v118
    %v3392 = vpop.permute.xlu0 %3391
    %3393 = vset.pattern.permute.xlu0 117
    %3394 = vperm.xlu0 %3393, %v119
    %v3395 = vpop.permute.xlu0 %3394
    %3396 = vset.pattern.permute.xlu0 117
    %3397 = vperm.xlu0 %3396, %v120
    %v3398 = vpop.permute.xlu0 %3397
    %3399 = vset.pattern.permute.xlu0 117
    %3400 = vperm.xlu0 %3399, %v121
    %v3401 = vpop.permute.xlu0 %3400
    %vm3402 = vcmp.eq.s32.totalorder %v110, %v3392
    %vm3403 = vcmp.eq.s32.totalorder %v111, %v3392
    %vm3404 = vcmp.eq.s32.totalorder %v112, %v3395
    %vm3405 = vcmp.eq.s32.totalorder %v113, %v3395
    %vm3406 = vcmp.eq.s32.totalorder %v114, %v3398
    %vm3407 = vcmp.eq.s32.totalorder %v115, %v3398
    %vm3408 = vcmp.eq.s32.totalorder %v116, %v3401
    %vm3409 = vcmp.eq.s32.totalorder %v117, %v3401
    %vm3410 = vmor %vm3382, %vm3402
    %vm3411 = vmor %vm3383, %vm3403
    %vm3412 = vmor %vm3384, %vm3404
    %vm3413 = vmor %vm3385, %vm3405
    %vm3414 = vmor %vm3386, %vm3406
    %vm3415 = vmor %vm3387, %vm3407
    %vm3416 = vmor %vm3388, %vm3408
    %vm3417 = vmor %vm3389, %vm3409
    %3418 = vset.pattern.permute.xlu0 118
    %3419 = vperm.xlu0 %3418, %v118
    %v3420 = vpop.permute.xlu0 %3419
    %3421 = vset.pattern.permute.xlu0 118
    %3422 = vperm.xlu0 %3421, %v119
    %v3423 = vpop.permute.xlu0 %3422
    %3424 = vset.pattern.permute.xlu0 118
    %3425 = vperm.xlu0 %3424, %v120
    %v3426 = vpop.permute.xlu0 %3425
    %3427 = vset.pattern.permute.xlu0 118
    %3428 = vperm.xlu0 %3427, %v121
    %v3429 = vpop.permute.xlu0 %3428
    %vm3430 = vcmp.eq.s32.totalorder %v110, %v3420
    %vm3431 = vcmp.eq.s32.totalorder %v111, %v3420
    %vm3432 = vcmp.eq.s32.totalorder %v112, %v3423
    %vm3433 = vcmp.eq.s32.totalorder %v113, %v3423
    %vm3434 = vcmp.eq.s32.totalorder %v114, %v3426
    %vm3435 = vcmp.eq.s32.totalorder %v115, %v3426
    %vm3436 = vcmp.eq.s32.totalorder %v116, %v3429
    %vm3437 = vcmp.eq.s32.totalorder %v117, %v3429
    %vm3438 = vmor %vm3410, %vm3430
    %vm3439 = vmor %vm3411, %vm3431
    %vm3440 = vmor %vm3412, %vm3432
    %vm3441 = vmor %vm3413, %vm3433
    %vm3442 = vmor %vm3414, %vm3434
    %vm3443 = vmor %vm3415, %vm3435
    %vm3444 = vmor %vm3416, %vm3436
    %vm3445 = vmor %vm3417, %vm3437
    %3446 = vset.pattern.permute.xlu0 119
    %3447 = vperm.xlu0 %3446, %v118
    %v3448 = vpop.permute.xlu0 %3447
    %3449 = vset.pattern.permute.xlu0 119
    %3450 = vperm.xlu0 %3449, %v119
    %v3451 = vpop.permute.xlu0 %3450
    %3452 = vset.pattern.permute.xlu0 119
    %3453 = vperm.xlu0 %3452, %v120
    %v3454 = vpop.permute.xlu0 %3453
    %3455 = vset.pattern.permute.xlu0 119
    %3456 = vperm.xlu0 %3455, %v121
    %v3457 = vpop.permute.xlu0 %3456
    %vm3458 = vcmp.eq.s32.totalorder %v110, %v3448
    %vm3459 = vcmp.eq.s32.totalorder %v111, %v3448
    %vm3460 = vcmp.eq.s32.totalorder %v112, %v3451
    %vm3461 = vcmp.eq.s32.totalorder %v113, %v3451
    %vm3462 = vcmp.eq.s32.totalorder %v114, %v3454
    %vm3463 = vcmp.eq.s32.totalorder %v115, %v3454
    %vm3464 = vcmp.eq.s32.totalorder %v116, %v3457
    %vm3465 = vcmp.eq.s32.totalorder %v117, %v3457
    %vm3466 = vmor %vm3438, %vm3458
    %vm3467 = vmor %vm3439, %vm3459
    %vm3468 = vmor %vm3440, %vm3460
    %vm3469 = vmor %vm3441, %vm3461
    %vm3470 = vmor %vm3442, %vm3462
    %vm3471 = vmor %vm3443, %vm3463
    %vm3472 = vmor %vm3444, %vm3464
    %vm3473 = vmor %vm3445, %vm3465
    %3474 = vset.pattern.permute.xlu0 120
    %3475 = vperm.xlu0 %3474, %v118
    %v3476 = vpop.permute.xlu0 %3475
    %3477 = vset.pattern.permute.xlu0 120
    %3478 = vperm.xlu0 %3477, %v119
    %v3479 = vpop.permute.xlu0 %3478
    %3480 = vset.pattern.permute.xlu0 120
    %3481 = vperm.xlu0 %3480, %v120
    %v3482 = vpop.permute.xlu0 %3481
    %3483 = vset.pattern.permute.xlu0 120
    %3484 = vperm.xlu0 %3483, %v121
    %v3485 = vpop.permute.xlu0 %3484
    %vm3486 = vcmp.eq.s32.totalorder %v110, %v3476
    %vm3487 = vcmp.eq.s32.totalorder %v111, %v3476
    %vm3488 = vcmp.eq.s32.totalorder %v112, %v3479
    %vm3489 = vcmp.eq.s32.totalorder %v113, %v3479
    %vm3490 = vcmp.eq.s32.totalorder %v114, %v3482
    %vm3491 = vcmp.eq.s32.totalorder %v115, %v3482
    %vm3492 = vcmp.eq.s32.totalorder %v116, %v3485
    %vm3493 = vcmp.eq.s32.totalorder %v117, %v3485
    %vm3494 = vmor %vm3466, %vm3486
    %vm3495 = vmor %vm3467, %vm3487
    %vm3496 = vmor %vm3468, %vm3488
    %vm3497 = vmor %vm3469, %vm3489
    %vm3498 = vmor %vm3470, %vm3490
    %vm3499 = vmor %vm3471, %vm3491
    %vm3500 = vmor %vm3472, %vm3492
    %vm3501 = vmor %vm3473, %vm3493
    %3502 = vset.pattern.permute.xlu0 121
    %3503 = vperm.xlu0 %3502, %v118
    %v3504 = vpop.permute.xlu0 %3503
    %3505 = vset.pattern.permute.xlu0 121
    %3506 = vperm.xlu0 %3505, %v119
    %v3507 = vpop.permute.xlu0 %3506
    %3508 = vset.pattern.permute.xlu0 121
    %3509 = vperm.xlu0 %3508, %v120
    %v3510 = vpop.permute.xlu0 %3509
    %3511 = vset.pattern.permute.xlu0 121
    %3512 = vperm.xlu0 %3511, %v121
    %v3513 = vpop.permute.xlu0 %3512
    %vm3514 = vcmp.eq.s32.totalorder %v110, %v3504
    %vm3515 = vcmp.eq.s32.totalorder %v111, %v3504
    %vm3516 = vcmp.eq.s32.totalorder %v112, %v3507
    %vm3517 = vcmp.eq.s32.totalorder %v113, %v3507
    %vm3518 = vcmp.eq.s32.totalorder %v114, %v3510
    %vm3519 = vcmp.eq.s32.totalorder %v115, %v3510
    %vm3520 = vcmp.eq.s32.totalorder %v116, %v3513
    %vm3521 = vcmp.eq.s32.totalorder %v117, %v3513
    %vm3522 = vmor %vm3494, %vm3514
    %vm3523 = vmor %vm3495, %vm3515
    %vm3524 = vmor %vm3496, %vm3516
    %vm3525 = vmor %vm3497, %vm3517
    %vm3526 = vmor %vm3498, %vm3518
    %vm3527 = vmor %vm3499, %vm3519
    %vm3528 = vmor %vm3500, %vm3520
    %vm3529 = vmor %vm3501, %vm3521
    %3530 = vset.pattern.permute.xlu0 122
    %3531 = vperm.xlu0 %3530, %v118
    %v3532 = vpop.permute.xlu0 %3531
    %3533 = vset.pattern.permute.xlu0 122
    %3534 = vperm.xlu0 %3533, %v119
    %v3535 = vpop.permute.xlu0 %3534
    %3536 = vset.pattern.permute.xlu0 122
    %3537 = vperm.xlu0 %3536, %v120
    %v3538 = vpop.permute.xlu0 %3537
    %3539 = vset.pattern.permute.xlu0 122
    %3540 = vperm.xlu0 %3539, %v121
    %v3541 = vpop.permute.xlu0 %3540
    %vm3542 = vcmp.eq.s32.totalorder %v110, %v3532
    %vm3543 = vcmp.eq.s32.totalorder %v111, %v3532
    %vm3544 = vcmp.eq.s32.totalorder %v112, %v3535
    %vm3545 = vcmp.eq.s32.totalorder %v113, %v3535
    %vm3546 = vcmp.eq.s32.totalorder %v114, %v3538
    %vm3547 = vcmp.eq.s32.totalorder %v115, %v3538
    %vm3548 = vcmp.eq.s32.totalorder %v116, %v3541
    %vm3549 = vcmp.eq.s32.totalorder %v117, %v3541
    %vm3550 = vmor %vm3522, %vm3542
    %vm3551 = vmor %vm3523, %vm3543
    %vm3552 = vmor %vm3524, %vm3544
    %vm3553 = vmor %vm3525, %vm3545
    %vm3554 = vmor %vm3526, %vm3546
    %vm3555 = vmor %vm3527, %vm3547
    %vm3556 = vmor %vm3528, %vm3548
    %vm3557 = vmor %vm3529, %vm3549
    %3558 = vset.pattern.permute.xlu0 123
    %3559 = vperm.xlu0 %3558, %v118
    %v3560 = vpop.permute.xlu0 %3559
    %3561 = vset.pattern.permute.xlu0 123
    %3562 = vperm.xlu0 %3561, %v119
    %v3563 = vpop.permute.xlu0 %3562
    %3564 = vset.pattern.permute.xlu0 123
    %3565 = vperm.xlu0 %3564, %v120
    %v3566 = vpop.permute.xlu0 %3565
    %3567 = vset.pattern.permute.xlu0 123
    %3568 = vperm.xlu0 %3567, %v121
    %v3569 = vpop.permute.xlu0 %3568
    %vm3570 = vcmp.eq.s32.totalorder %v110, %v3560
    %vm3571 = vcmp.eq.s32.totalorder %v111, %v3560
    %vm3572 = vcmp.eq.s32.totalorder %v112, %v3563
    %vm3573 = vcmp.eq.s32.totalorder %v113, %v3563
    %vm3574 = vcmp.eq.s32.totalorder %v114, %v3566
    %vm3575 = vcmp.eq.s32.totalorder %v115, %v3566
    %vm3576 = vcmp.eq.s32.totalorder %v116, %v3569
    %vm3577 = vcmp.eq.s32.totalorder %v117, %v3569
    %vm3578 = vmor %vm3550, %vm3570
    %vm3579 = vmor %vm3551, %vm3571
    %vm3580 = vmor %vm3552, %vm3572
    %vm3581 = vmor %vm3553, %vm3573
    %vm3582 = vmor %vm3554, %vm3574
    %vm3583 = vmor %vm3555, %vm3575
    %vm3584 = vmor %vm3556, %vm3576
    %vm3585 = vmor %vm3557, %vm3577
    %3586 = vset.pattern.permute.xlu0 124
    %3587 = vperm.xlu0 %3586, %v118
    %v3588 = vpop.permute.xlu0 %3587
    %3589 = vset.pattern.permute.xlu0 124
    %3590 = vperm.xlu0 %3589, %v119
    %v3591 = vpop.permute.xlu0 %3590
    %3592 = vset.pattern.permute.xlu0 124
    %3593 = vperm.xlu0 %3592, %v120
    %v3594 = vpop.permute.xlu0 %3593
    %3595 = vset.pattern.permute.xlu0 124
    %3596 = vperm.xlu0 %3595, %v121
    %v3597 = vpop.permute.xlu0 %3596
    %vm3598 = vcmp.eq.s32.totalorder %v110, %v3588
    %vm3599 = vcmp.eq.s32.totalorder %v111, %v3588
    %vm3600 = vcmp.eq.s32.totalorder %v112, %v3591
    %vm3601 = vcmp.eq.s32.totalorder %v113, %v3591
    %vm3602 = vcmp.eq.s32.totalorder %v114, %v3594
    %vm3603 = vcmp.eq.s32.totalorder %v115, %v3594
    %vm3604 = vcmp.eq.s32.totalorder %v116, %v3597
    %vm3605 = vcmp.eq.s32.totalorder %v117, %v3597
    %vm3606 = vmor %vm3578, %vm3598
    %vm3607 = vmor %vm3579, %vm3599
    %vm3608 = vmor %vm3580, %vm3600
    %vm3609 = vmor %vm3581, %vm3601
    %vm3610 = vmor %vm3582, %vm3602
    %vm3611 = vmor %vm3583, %vm3603
    %vm3612 = vmor %vm3584, %vm3604
    %vm3613 = vmor %vm3585, %vm3605
    %3614 = vset.pattern.permute.xlu0 125
    %3615 = vperm.xlu0 %3614, %v118
    %v3616 = vpop.permute.xlu0 %3615
    %3617 = vset.pattern.permute.xlu0 125
    %3618 = vperm.xlu0 %3617, %v119
    %v3619 = vpop.permute.xlu0 %3618
    %3620 = vset.pattern.permute.xlu0 125
    %3621 = vperm.xlu0 %3620, %v120
    %v3622 = vpop.permute.xlu0 %3621
    %3623 = vset.pattern.permute.xlu0 125
    %3624 = vperm.xlu0 %3623, %v121
    %v3625 = vpop.permute.xlu0 %3624
    %vm3626 = vcmp.eq.s32.totalorder %v110, %v3616
    %vm3627 = vcmp.eq.s32.totalorder %v111, %v3616
    %vm3628 = vcmp.eq.s32.totalorder %v112, %v3619
    %vm3629 = vcmp.eq.s32.totalorder %v113, %v3619
    %vm3630 = vcmp.eq.s32.totalorder %v114, %v3622
    %vm3631 = vcmp.eq.s32.totalorder %v115, %v3622
    %vm3632 = vcmp.eq.s32.totalorder %v116, %v3625
    %vm3633 = vcmp.eq.s32.totalorder %v117, %v3625
    %vm3634 = vmor %vm3606, %vm3626
    %vm3635 = vmor %vm3607, %vm3627
    %vm3636 = vmor %vm3608, %vm3628
    %vm3637 = vmor %vm3609, %vm3629
    %vm3638 = vmor %vm3610, %vm3630
    %vm3639 = vmor %vm3611, %vm3631
    %vm3640 = vmor %vm3612, %vm3632
    %vm3641 = vmor %vm3613, %vm3633
    %3642 = vset.pattern.permute.xlu0 126
    %3643 = vperm.xlu0 %3642, %v118
    %v3644 = vpop.permute.xlu0 %3643
    %3645 = vset.pattern.permute.xlu0 126
    %3646 = vperm.xlu0 %3645, %v119
    %v3647 = vpop.permute.xlu0 %3646
    %3648 = vset.pattern.permute.xlu0 126
    %3649 = vperm.xlu0 %3648, %v120
    %v3650 = vpop.permute.xlu0 %3649
    %3651 = vset.pattern.permute.xlu0 126
    %3652 = vperm.xlu0 %3651, %v121
    %v3653 = vpop.permute.xlu0 %3652
    %vm3654 = vcmp.eq.s32.totalorder %v110, %v3644
    %vm3655 = vcmp.eq.s32.totalorder %v111, %v3644
    %vm3656 = vcmp.eq.s32.totalorder %v112, %v3647
    %vm3657 = vcmp.eq.s32.totalorder %v113, %v3647
    %vm3658 = vcmp.eq.s32.totalorder %v114, %v3650
    %vm3659 = vcmp.eq.s32.totalorder %v115, %v3650
    %vm3660 = vcmp.eq.s32.totalorder %v116, %v3653
    %vm3661 = vcmp.eq.s32.totalorder %v117, %v3653
    %vm3662 = vmor %vm3634, %vm3654
    %vm3663 = vmor %vm3635, %vm3655
    %vm3664 = vmor %vm3636, %vm3656
    %vm3665 = vmor %vm3637, %vm3657
    %vm3666 = vmor %vm3638, %vm3658
    %vm3667 = vmor %vm3639, %vm3659
    %vm3668 = vmor %vm3640, %vm3660
    %vm3669 = vmor %vm3641, %vm3661
    %3670 = vset.pattern.permute.xlu0 127
    %3671 = vperm.xlu0 %3670, %v118
    %v3672 = vpop.permute.xlu0 %3671
    %3673 = vset.pattern.permute.xlu0 127
    %3674 = vperm.xlu0 %3673, %v119
    %v3675 = vpop.permute.xlu0 %3674
    %3676 = vset.pattern.permute.xlu0 127
    %3677 = vperm.xlu0 %3676, %v120
    %v3678 = vpop.permute.xlu0 %3677
    %3679 = vset.pattern.permute.xlu0 127
    %3680 = vperm.xlu0 %3679, %v121
    %v3681 = vpop.permute.xlu0 %3680
    %vm3682 = vcmp.eq.s32.totalorder %v110, %v3672
    %vm3683 = vcmp.eq.s32.totalorder %v111, %v3672
    %vm3684 = vcmp.eq.s32.totalorder %v112, %v3675
    %vm3685 = vcmp.eq.s32.totalorder %v113, %v3675
    %vm3686 = vcmp.eq.s32.totalorder %v114, %v3678
    %vm3687 = vcmp.eq.s32.totalorder %v115, %v3678
    %vm3688 = vcmp.eq.s32.totalorder %v116, %v3681
    %vm3689 = vcmp.eq.s32.totalorder %v117, %v3681
    %vm3690 = vmor %vm3662, %vm3682
    %vm3691 = vmor %vm3663, %vm3683
    %vm3692 = vmor %vm3664, %vm3684
    %vm3693 = vmor %vm3665, %vm3685
    %vm3694 = vmor %vm3666, %vm3686
    %vm3695 = vmor %vm3667, %vm3687
    %vm3696 = vmor %vm3668, %vm3688
    %vm3697 = vmor %vm3669, %vm3689
    %v3698 = vld [vmem:[#allocation5] sm:$0xff]
    %v3699 = vld [vmem:[#allocation5 + $0x8] sm:$0xff]
    %v3700 = vld [vmem:[#allocation5 + $0x10] sm:$0xff]
    %v3701 = vld [vmem:[#allocation5 + $0x18] sm:$0xff]
    %v3702 = vld [vmem:[#allocation5 + $0x20] sm:$0xff]
    %v3703 = vld [vmem:[#allocation5 + $0x28] sm:$0xff]
    %v3704 = vld [vmem:[#allocation5 + $0x30] sm:$0xff]
    %v3705 = vld [vmem:[#allocation5 + $0x38] sm:$0xff]
    %v3706 = vsel %vm3690, -inf, %v3698
    %v3707 = vsel %vm3691, -inf, %v3699
    %v3708 = vsel %vm3692, -inf, %v3700
    %v3709 = vsel %vm3693, -inf, %v3701
    %v3710 = vsel %vm3694, -inf, %v3702
    %v3711 = vsel %vm3695, -inf, %v3703
    %v3712 = vsel %vm3696, -inf, %v3704
    %v3713 = vsel %vm3697, -inf, %v3705
    %3714 = vst [vmem:[#allocation5] sm:$0xff] %v3706
    %3715 = vst [vmem:[#allocation5 + $0x8] sm:$0xff] %v3707
    %3716 = vst [vmem:[#allocation5 + $0x10] sm:$0xff] %v3708
    %3717 = vst [vmem:[#allocation5 + $0x18] sm:$0xff] %v3709
    %3718 = vst [vmem:[#allocation5 + $0x20] sm:$0xff] %v3710
    %3719 = vst [vmem:[#allocation5 + $0x28] sm:$0xff] %v3711
    %3720 = vst [vmem:[#allocation5 + $0x30] sm:$0xff] %v3712
    %3721 = vst [vmem:[#allocation5 + $0x38] sm:$0xff] %v3713
    // Predicated region
    $region18: #{tpu_custom_call.1} parent=1 // pred_check
      _
    $region19: #{tpu_custom_call.1} parent=1 // pred_check_branch
      %3723 = sbr.rel (0) target = $region21
    $region20: #{tpu_custom_call.1} parent=1 // pred_region
      %s3725 = ssub.s32 1024, 1024
      %3726 = vsyncadd [#allocation4], %s3725
      %s3727 = sshll.u32 [#allocation5], 4
      %s3728 = int_to_ptr.vmem [resolvable:$true] %s3727
      %3733 = dma.vmem_to_hbm [thread:$0]  %s3728, 1024, %s2, [#allocation4], 256, 256, 16
    $region21: #{tpu_custom_call.1} parent=1 // pred_fallthru
      _
    // Predicated region
    $region22: #{tpu_custom_call.1} parent=1 // pred_check
      _
    $region23: #{tpu_custom_call.1} parent=1 // pred_check_branch
      %3735 = sbr.rel (0) target = $region25
    $region24: #{tpu_custom_call.1} parent=1 // pred_region
      %3736 = dma.done [#allocation4], 1024
    $region25: #{tpu_custom_call.1} parent=1 // pred_fallthru
      _
    %3737 = vsyncpa [#allocation3], 1
    %3738 = vsyncpa [#allocation4], 1

</llo_original>
